<compile_context>
chip_gen: v7x
topology: tpu7x:2x2x1
jax: 0.10.0
libtpu: 0.0.40
codegen_flags: <defaults>
</compile_context>

<pallas_src>
import jax
import jax.numpy as jnp
from jax.experimental import pallas as pl
from jax.experimental.pallas import tpu as pltpu

EPS = 1e-5
NUM_GROUPS = 32


def _group_maps(C, G):
    """One-hot channel->group map (C, G) and its transpose (G, C) — built in the wrapper."""
    g_of_c = jnp.arange(C, dtype=jnp.int32) // (C // G)
    M = (g_of_c[:, None] == jnp.arange(G, dtype=jnp.int32)[None, :]).astype(jnp.float32)
    return M, M.T


def _groupnorm_silu(x, gamma, beta, M, MT, inv_n):
    """x: (H, W, C) f32; gamma/beta: (1, C); M: (C, G); MT: (G, C).  GroupNorm(G) + SiLU."""
    H, W, C = x.shape
    # Per-channel sum / sum-of-squares -> per-group stats via tiny matmuls with the
    # precomputed one-hot maps (MXU; no per-step iota/compare on the VPU).
    s = jnp.sum(jnp.sum(x, axis=0), axis=0, keepdims=True)           # (1, C)
    ss = jnp.sum(jnp.sum(x * x, axis=0), axis=0, keepdims=True)      # (1, C)
    gmean = jnp.dot(s, M, preferred_element_type=jnp.float32) * inv_n     # (1, G)
    gmsq = jnp.dot(ss, M, preferred_element_type=jnp.float32) * inv_n     # (1, G)
    gvar = jnp.maximum(gmsq - gmean * gmean, 0.0)     # biased var (matches torch), clamped
    ginv = jax.lax.rsqrt(gvar + EPS)
    mean_c = jnp.dot(gmean, MT, preferred_element_type=jnp.float32)  # (1, C)
    inv_c = jnp.dot(ginv, MT, preferred_element_type=jnp.float32)    # (1, C)
    scale = inv_c * gamma                                            # (1, C)
    shift = beta - mean_c * scale                                    # (1, C)
    y = x * scale.reshape(1, 1, C) + shift.reshape(1, 1, C)          # single FMA pass
    return y * jax.nn.sigmoid(y)                                     # SiLU


def _conv3x3(t, w_ref, bias, pad_ref):
    """t: (H, W, Cin) f32; w_ref: (3, 3*Cin, Cout) bf16 VMEM ref; bias: (1, Cout) f32;
    pad_ref: (H+2, W+2, Cin) f32 persistent scratch."""
    H, W, Cin = t.shape
    Cout = bias.shape[-1]
    # Zero only the 1-pixel border; the interior is fully overwritten every call.
    pad_ref[0:1, :, :] = jnp.zeros((1, W + 2, Cin), jnp.float32)
    pad_ref[H + 1:H + 2, :, :] = jnp.zeros((1, W + 2, Cin), jnp.float32)
    pad_ref[:, 0:1, :] = jnp.zeros((H + 2, 1, Cin), jnp.float32)
    pad_ref[:, W + 1:W + 2, :] = jnp.zeros((H + 2, 1, Cin), jnp.float32)
    pad_ref[1:H + 1, 1:W + 1, :] = t
    # dx-im2col: slab[h, w, dx*Cin + c] = padded[h, w + dx, c]  -> (H+2, W, 3*Cin).
    slab = jnp.concatenate([pad_ref[:, dx:dx + W, :] for dx in range(3)], axis=-1)
    # 3 deep matmuls (K = 3*Cin), bf16 operands, f32 accumulation.
    acc = jnp.zeros((H * W, Cout), jnp.float32)
    for dy in range(3):
        win = slab[dy:dy + H].reshape(H * W, 3 * Cin).astype(jnp.bfloat16)
        acc = acc + jnp.dot(win, w_ref[dy], preferred_element_type=jnp.float32)
    return (acc + bias).reshape(H, W, Cout)


def _make_kernel(use_proj, num_groups):
    def kernel(*refs):
        if use_proj:
            (x_ref, g1, b1, m1, mt1, w1, wb1,
             g2, b2, m2, mt2, w2, wb2, wr, br,
             o_ref, pad1_ref, pad2_ref) = refs
        else:
            (x_ref, g1, b1, m1, mt1, w1, wb1,
             g2, b2, m2, mt2, w2, wb2,
             o_ref, pad1_ref, pad2_ref) = refs

        x = x_ref[0]                                   # (H, W, Cin)
        H, W, Cin = x.shape
        Cout = o_ref.shape[-1]

        t = _groupnorm_silu(x, g1[...], b1[...], m1[...], mt1[...],
                            1.0 / (H * W * (Cin // num_groups)))
        h = _conv3x3(t, w1, wb1[...], pad1_ref)
        t2 = _groupnorm_silu(h, g2[...], b2[...], m2[...], mt2[...],
                             1.0 / (H * W * (Cout // num_groups)))
        h2 = _conv3x3(t2, w2, wb2[...], pad2_ref)

        if use_proj:                                   # 1x1 conv residual projection
            res = jnp.dot(x.reshape(H * W, Cin).astype(jnp.bfloat16), wr[...],
                          preferred_element_type=jnp.float32) + br[...]
            res = res.reshape(H, W, Cout)
        else:                                          # nn.Identity
            res = x
        o_ref[0] = (h2 + res).astype(o_ref.dtype)
    return kernel


def _full_spec(shape):
    nd = len(shape)
    return pl.BlockSpec(tuple(shape), lambda n, _nd=nd: (0,) * _nd)


def vae_residual_block(x_nchw, params, num_groups=NUM_GROUPS):
    """x_nchw: (N, Cin, H, W) f32 -> (N, Cout, H, W) f32.  Conv weights in params are HWIO."""
    N, Cin, H, W = x_nchw.shape
    Cout = params["w1"].shape[-1]
    use_proj = (Cin != Cout)
    x = jnp.transpose(x_nchw, (0, 2, 3, 1)).astype(jnp.float32)      # NHWC (C -> lanes)

    m1, mt1 = _group_maps(Cin, num_groups)
    m2, mt2 = _group_maps(Cout, num_groups)
    # (3,3,Ci,Co) -> (3, 3*Ci, Co): per-dy weight slabs matching the dx-im2col layout.
    w1 = params["w1"].reshape(3, 3 * Cin, Cout).astype(jnp.bfloat16)
    w2 = params["w2"].reshape(3, 3 * Cout, Cout).astype(jnp.bfloat16)

    inputs = [x,
              params["g1"], params["b1"], m1, mt1, w1, params["wb1"],
              params["g2"], params["b2"], m2, mt2, w2, params["wb2"]]
    in_specs = [pl.BlockSpec((1, H, W, Cin), lambda n: (n, 0, 0, 0))]
    in_specs += [_full_spec(a.shape) for a in inputs[1:]]
    if use_proj:
        wr = params["wr"].astype(jnp.bfloat16)
        br = params["br"].astype(jnp.float32)
        inputs += [wr, br]
        in_specs += [_full_spec(wr.shape), _full_spec(br.shape)]

    out_spec = pl.BlockSpec((1, H, W, Cout), lambda n: (n, 0, 0, 0))
    scratch_shapes = [pltpu.VMEM((H + 2, W + 2, Cin), jnp.float32),
                      pltpu.VMEM((H + 2, W + 2, Cout), jnp.float32)]

    # Explicit scoped-VMEM budget: 2x-buffered operands + output block + scratch, w/ headroom.
    x_block_bytes = H * W * Cin * 4
    param_bytes = sum(int(a.size) * a.dtype.itemsize for a in inputs[1:])
    out_bytes = H * W * Cout * 4
    scratch_bytes = (H + 2) * (W + 2) * (Cin + Cout) * 4
    est = 2 * (x_block_bytes + param_bytes + out_bytes) + scratch_bytes
    vmem_limit = int(min(max(4 * est, 16 * 1024 * 1024), 48 * 1024 * 1024))

    out_nhwc = pl.pallas_call(
        _make_kernel(use_proj, num_groups),
        out_shape=jax.ShapeDtypeStruct((N, H, W, Cout), jnp.float32),
        grid_spec=pltpu.PrefetchScalarGridSpec(
            num_scalar_prefetch=0,
            grid=(N,),
            in_specs=in_specs,
            out_specs=out_spec,
            scratch_shapes=scratch_shapes,
        ),
        compiler_params=pltpu.CompilerParams(
            dimension_semantics=("parallel",),
            vmem_limit_bytes=vmem_limit,
        ),
    )(*inputs)
    return jnp.transpose(out_nhwc, (0, 3, 1, 2))                     # back to NCHW


def _ref_forward(x, p, num_groups=NUM_GROUPS):
    """Pure-JAX reference of the PyTorch forward (NCHW, f32)."""
    def gn(x, gamma, beta):
        N, C, H, W = x.shape
        G = num_groups
        xg = x.reshape(N, G, C // G, H, W)
        m = xg.mean(axis=(2, 3, 4), keepdims=True)
        v = xg.var(axis=(2, 3, 4), keepdims=True)
        xn = ((xg - m) / jnp.sqrt(v + EPS)).reshape(N, C, H, W)
        return xn * gamma.reshape(1, C, 1, 1) + beta.reshape(1, C, 1, 1)

    def conv3(x, w_hwio, b):
        y = jax.lax.conv_general_dilated(
            x, w_hwio, (1, 1), ((1, 1), (1, 1)),
            dimension_numbers=("NCHW", "HWIO", "NCHW"))
        return y + b.reshape(1, -1, 1, 1)

    Cin, Cout = x.shape[1], p["w1"].shape[-1]
    t = gn(x, p["g1"], p["b1"]); t = t * jax.nn.sigmoid(t)
    t = conv3(t, p["w1"], p["wb1"])
    t = gn(t, p["g2"], p["b2"]); t = t * jax.nn.sigmoid(t)
    t = conv3(t, p["w2"], p["wb2"])
    if Cin == Cout:
        res = x
    else:
        res = jnp.einsum("nchw,cd->ndhw", x, p["wr"]) + p["br"].reshape(1, -1, 1, 1)
    return t + res


if __name__ == "__main__":
    key = jax.random.PRNGKey(0)

    def make_params(k, Cin, Cout):
        ks = jax.random.split(k, 10)
        p = {
            "g1": (1.0 + 0.1 * jax.random.normal(ks[0], (1, Cin))).astype(jnp.float32),
            "b1": (0.1 * jax.random.normal(ks[1], (1, Cin))).astype(jnp.float32),
            "w1": (0.05 * jax.random.normal(ks[2], (3, 3, Cin, Cout))).astype(jnp.float32),
            "wb1": (0.05 * jax.random.normal(ks[3], (1, Cout))).astype(jnp.float32),
            "g2": (1.0 + 0.1 * jax.random.normal(ks[4], (1, Cout))).astype(jnp.float32),
            "b2": (0.1 * jax.random.normal(ks[5], (1, Cout))).astype(jnp.float32),
            "w2": (0.05 * jax.random.normal(ks[6], (3, 3, Cout, Cout))).astype(jnp.float32),
            "wb2": (0.05 * jax.random.normal(ks[7], (1, Cout))).astype(jnp.float32),
        }
        if Cin != Cout:                                  # 1x1 residual projection params
            p["wr"] = (0.05 * jax.random.normal(ks[8], (Cin, Cout))).astype(jnp.float32)
            p["br"] = (0.05 * jax.random.normal(ks[9], (1, Cout))).astype(jnp.float32)
        return p

    # GroupNorm(32, C) requires C % 32 == 0, so the smallest sensible channel counts are 32/64.
    k1, k2, k3, k4 = jax.random.split(key, 4)

    # Case 1: channel expansion (1x1-conv residual projection).
    p1 = make_params(k1, 32, 64)
    x1 = jax.random.normal(k2, (2, 32, 8, 8), dtype=jnp.float32)
    out1 = vae_residual_block(x1, p1)
    jax.block_until_ready(out1)
    ref1 = _ref_forward(x1, p1)
    assert out1.shape == (2, 64, 8, 8), out1.shape
    err1 = float(jnp.max(jnp.abs(out1 - ref1)))
    assert jnp.allclose(out1, ref1, rtol=3e-2, atol=3e-2), err1      # bf16-matmul tolerance

    # Case 2: in_channels == out_channels (nn.Identity residual, no wr/br params).
    p2 = make_params(k3, 64, 64)
    x2 = jax.random.normal(k4, (1, 64, 8, 8), dtype=jnp.float32)
    out2 = vae_residual_block(x2, p2)
    jax.block_until_ready(out2)
    ref2 = _ref_forward(x2, p2)
    assert out2.shape == (1, 64, 8, 8), out2.shape
    err2 = float(jnp.max(jnp.abs(out2 - ref2)))
    assert jnp.allclose(out2, ref2, rtol=3e-2, atol=3e-2), err2

    print("KERNEL_OK")
</pallas_src>

<mosaic_0001>
module attributes {stable_mosaic.version = 11 : i64} {
  func.func @kernel(%arg0: i32, %arg1: memref<1x8x8x32xf32, #tpu.memory_space<vmem>>, %arg2: memref<1x32xf32, #tpu.memory_space<vmem>>, %arg3: memref<1x32xf32, #tpu.memory_space<vmem>>, %arg4: memref<32x32xf32, #tpu.memory_space<vmem>>, %arg5: memref<32x32xf32, #tpu.memory_space<vmem>>, %arg6: memref<3x96x64xbf16, #tpu.memory_space<vmem>>, %arg7: memref<1x64xf32, #tpu.memory_space<vmem>>, %arg8: memref<1x64xf32, #tpu.memory_space<vmem>>, %arg9: memref<1x64xf32, #tpu.memory_space<vmem>>, %arg10: memref<64x32xf32, #tpu.memory_space<vmem>>, %arg11: memref<32x64xf32, #tpu.memory_space<vmem>>, %arg12: memref<3x192x64xbf16, #tpu.memory_space<vmem>>, %arg13: memref<1x64xf32, #tpu.memory_space<vmem>>, %arg14: memref<32x64xbf16, #tpu.memory_space<vmem>>, %arg15: memref<1x64xf32, #tpu.memory_space<vmem>>, %arg16: memref<1x8x8x64xf32, #tpu.memory_space<vmem>>, %arg17: memref<10x10x32xf32, #tpu.memory_space<vmem>>, %arg18: memref<10x10x64xf32, #tpu.memory_space<vmem>>) attributes {dimension_semantics = [#tpu.dimension_semantics<parallel>], iteration_bounds = array<i64: 2>, scalar_prefetch = 0 : i64, scratch_operands = 2 : i64, tpu.core_type = #tpu.core_type<tc>, window_params = [{transform_indices = @transform_0, window_bounds = array<i64: 1, 8, 8, 32>}, {pipeline_mode = #tpu.pipeline_mode<synchronous>, transform_indices = @transform_1, window_bounds = array<i64: 1, 32>}, {pipeline_mode = #tpu.pipeline_mode<synchronous>, transform_indices = @transform_2, window_bounds = array<i64: 1, 32>}, {pipeline_mode = #tpu.pipeline_mode<synchronous>, transform_indices = @transform_3, window_bounds = array<i64: 32, 32>}, {pipeline_mode = #tpu.pipeline_mode<synchronous>, transform_indices = @transform_4, window_bounds = array<i64: 32, 32>}, {pipeline_mode = #tpu.pipeline_mode<synchronous>, transform_indices = @transform_5, window_bounds = array<i64: 3, 96, 64>}, {pipeline_mode = #tpu.pipeline_mode<synchronous>, transform_indices = @transform_6, window_bounds = array<i64: 1, 64>}, {pipeline_mode = #tpu.pipeline_mode<synchronous>, transform_indices = @transform_7, window_bounds = array<i64: 1, 64>}, {pipeline_mode = #tpu.pipeline_mode<synchronous>, transform_indices = @transform_8, window_bounds = array<i64: 1, 64>}, {pipeline_mode = #tpu.pipeline_mode<synchronous>, transform_indices = @transform_9, window_bounds = array<i64: 64, 32>}, {pipeline_mode = #tpu.pipeline_mode<synchronous>, transform_indices = @transform_10, window_bounds = array<i64: 32, 64>}, {pipeline_mode = #tpu.pipeline_mode<synchronous>, transform_indices = @transform_11, window_bounds = array<i64: 3, 192, 64>}, {pipeline_mode = #tpu.pipeline_mode<synchronous>, transform_indices = @transform_12, window_bounds = array<i64: 1, 64>}, {pipeline_mode = #tpu.pipeline_mode<synchronous>, transform_indices = @transform_13, window_bounds = array<i64: 32, 64>}, {pipeline_mode = #tpu.pipeline_mode<synchronous>, transform_indices = @transform_14, window_bounds = array<i64: 1, 64>}, {transform_indices = @transform_15, window_bounds = array<i64: 1, 8, 8, 64>}]} {
    %c0 = arith.constant 0 : index
    %c0_0 = arith.constant 0 : index
    %c0_1 = arith.constant 0 : index
    %c0_2 = arith.constant 0 : index
    %0 = vector.load %arg1[%c0, %c0_0, %c0_1, %c0_2] : memref<1x8x8x32xf32, #tpu.memory_space<vmem>>, vector<1x8x8x32xf32>
    %1 = vector.shape_cast %0 : vector<1x8x8x32xf32> to vector<8x8x32xf32>
    %c0_3 = arith.constant 0 : index
    %c0_4 = arith.constant 0 : index
    %2 = vector.load %arg2[%c0_3, %c0_4] : memref<1x32xf32, #tpu.memory_space<vmem>>, vector<1x32xf32>
    %c0_5 = arith.constant 0 : index
    %c0_6 = arith.constant 0 : index
    %3 = vector.load %arg3[%c0_5, %c0_6] : memref<1x32xf32, #tpu.memory_space<vmem>>, vector<1x32xf32>
    %c0_7 = arith.constant 0 : index
    %c0_8 = arith.constant 0 : index
    %4 = vector.load %arg4[%c0_7, %c0_8] : memref<32x32xf32, #tpu.memory_space<vmem>>, vector<32x32xf32>
    %c0_9 = arith.constant 0 : index
    %c0_10 = arith.constant 0 : index
    %5 = vector.load %arg5[%c0_9, %c0_10] : memref<32x32xf32, #tpu.memory_space<vmem>>, vector<32x32xf32>
    %cst = arith.constant dense<0.000000e+00> : vector<8x32xf32>
    %6 = vector.multi_reduction <add>, %1, %cst [0] : vector<8x8x32xf32> to vector<8x32xf32>
    %cst_11 = arith.constant dense<0.000000e+00> : vector<32xf32>
    %7 = vector.multi_reduction <add>, %6, %cst_11 [0] : vector<8x32xf32> to vector<32xf32>
    %8 = vector.shape_cast %7 : vector<32xf32> to vector<1x32xf32>
    %9 = arith.mulf %1, %1 : vector<8x8x32xf32>
    %cst_12 = arith.constant dense<0.000000e+00> : vector<8x32xf32>
    %10 = vector.multi_reduction <add>, %9, %cst_12 [0] : vector<8x8x32xf32> to vector<8x32xf32>
    %cst_13 = arith.constant dense<0.000000e+00> : vector<32xf32>
    %11 = vector.multi_reduction <add>, %10, %cst_13 [0] : vector<8x32xf32> to vector<32xf32>
    %12 = vector.shape_cast %11 : vector<32xf32> to vector<1x32xf32>
    %cst_14 = arith.constant dense<0.000000e+00> : vector<1x32xf32>
    %13 = tpu.matmul %8, %4, %cst_14 {dimension_numbers = #tpu.dot_dimension_numbers<[1], [0], [0], [1], [0, 0, 1, 1], [], []>} : vector<1x32xf32>, vector<32x32xf32>, vector<1x32xf32> -> vector<1x32xf32>
    %cst_15 = arith.constant 1.562500e-02 : f32
    %14 = vector.broadcast %cst_15 : f32 to vector<1x32xf32>
    %15 = arith.mulf %13, %14 : vector<1x32xf32>
    %cst_16 = arith.constant dense<0.000000e+00> : vector<1x32xf32>
    %16 = tpu.matmul %12, %4, %cst_16 {dimension_numbers = #tpu.dot_dimension_numbers<[1], [0], [0], [1], [0, 0, 1, 1], [], []>} : vector<1x32xf32>, vector<32x32xf32>, vector<1x32xf32> -> vector<1x32xf32>
    %cst_17 = arith.constant 1.562500e-02 : f32
    %17 = vector.broadcast %cst_17 : f32 to vector<1x32xf32>
    %18 = arith.mulf %16, %17 : vector<1x32xf32>
    %19 = arith.mulf %15, %15 : vector<1x32xf32>
    %20 = arith.subf %18, %19 : vector<1x32xf32>
    %cst_18 = arith.constant 0.000000e+00 : f32
    %21 = vector.broadcast %cst_18 : f32 to vector<1x32xf32>
    %22 = arith.maximumf %20, %21 : vector<1x32xf32>
    %cst_19 = arith.constant 9.99999974E-6 : f32
    %23 = vector.broadcast %cst_19 : f32 to vector<1x32xf32>
    %24 = arith.addf %22, %23 : vector<1x32xf32>
    %25 = math.rsqrt %24 : vector<1x32xf32>
    %cst_20 = arith.constant dense<0.000000e+00> : vector<1x32xf32>
    %26 = tpu.matmul %15, %5, %cst_20 {dimension_numbers = #tpu.dot_dimension_numbers<[1], [0], [0], [1], [0, 0, 1, 1], [], []>} : vector<1x32xf32>, vector<32x32xf32>, vector<1x32xf32> -> vector<1x32xf32>
    %cst_21 = arith.constant dense<0.000000e+00> : vector<1x32xf32>
    %27 = tpu.matmul %25, %5, %cst_21 {dimension_numbers = #tpu.dot_dimension_numbers<[1], [0], [0], [1], [0, 0, 1, 1], [], []>} : vector<1x32xf32>, vector<32x32xf32>, vector<1x32xf32> -> vector<1x32xf32>
    %28 = arith.mulf %27, %2 : vector<1x32xf32>
    %29 = arith.mulf %26, %28 : vector<1x32xf32>
    %30 = arith.subf %3, %29 : vector<1x32xf32>
    %31 = vector.shape_cast %28 : vector<1x32xf32> to vector<1x1x32xf32>
    %32 = vector.broadcast %31 : vector<1x1x32xf32> to vector<8x8x32xf32>
    %33 = arith.mulf %1, %32 : vector<8x8x32xf32>
    %34 = vector.shape_cast %30 : vector<1x32xf32> to vector<1x1x32xf32>
    %35 = vector.broadcast %34 : vector<1x1x32xf32> to vector<8x8x32xf32>
    %36 = arith.addf %33, %35 : vector<8x8x32xf32>
    %37 = arith.negf %36 : vector<8x8x32xf32>
    %38 = math.exp %37 : vector<8x8x32xf32>
    %cst_22 = arith.constant 1.000000e+00 : f32
    %39 = vector.broadcast %cst_22 : f32 to vector<8x8x32xf32>
    %40 = arith.addf %39, %38 : vector<8x8x32xf32>
    %41 = arith.divf %39, %40 : vector<8x8x32xf32>
    %42 = arith.mulf %36, %41 : vector<8x8x32xf32>
    %c0_23 = arith.constant 0 : index
    %c0_24 = arith.constant 0 : index
    %43 = vector.load %arg7[%c0_23, %c0_24] : memref<1x64xf32, #tpu.memory_space<vmem>>, vector<1x64xf32>
    %cst_25 = arith.constant 0.000000e+00 : f32
    %44 = vector.broadcast %cst_25 : f32 to vector<1x10x32xf32>
    %c0_26 = arith.constant 0 : index
    %c0_27 = arith.constant 0 : index
    %c0_28 = arith.constant 0 : index
    %45 = vector.load %arg17[%c0_26, %c0_27, %c0_28] : memref<10x10x32xf32, #tpu.memory_space<vmem>>, vector<1x10x32xf32>
    tpu.vector_store %arg17[%c0_26, %c0_27, %c0_28], %44 {strides = array<i32>} : memref<10x10x32xf32, #tpu.memory_space<vmem>>, vector<1x10x32xf32>,
    %cst_29 = arith.constant 0.000000e+00 : f32
    %46 = vector.broadcast %cst_29 : f32 to vector<1x10x32xf32>
    %c9 = arith.constant 9 : index
    %c0_30 = arith.constant 0 : index
    %c0_31 = arith.constant 0 : index
    %47 = vector.load %arg17[%c9, %c0_30, %c0_31] : memref<10x10x32xf32, #tpu.memory_space<vmem>>, vector<1x10x32xf32>
    tpu.vector_store %arg17[%c9, %c0_30, %c0_31], %46 {strides = array<i32>} : memref<10x10x32xf32, #tpu.memory_space<vmem>>, vector<1x10x32xf32>,
    %cst_32 = arith.constant 0.000000e+00 : f32
    %48 = vector.broadcast %cst_32 : f32 to vector<10x1x32xf32>
    %c0_33 = arith.constant 0 : index
    %c0_34 = arith.constant 0 : index
    %c0_35 = arith.constant 0 : index
    %49 = vector.load %arg17[%c0_33, %c0_34, %c0_35] : memref<10x10x32xf32, #tpu.memory_space<vmem>>, vector<10x1x32xf32>
    tpu.vector_store %arg17[%c0_33, %c0_34, %c0_35], %48 {strides = array<i32>} : memref<10x10x32xf32, #tpu.memory_space<vmem>>, vector<10x1x32xf32>,
    %cst_36 = arith.constant 0.000000e+00 : f32
    %50 = vector.broadcast %cst_36 : f32 to vector<10x1x32xf32>
    %c0_37 = arith.constant 0 : index
    %c9_38 = arith.constant 9 : index
    %c0_39 = arith.constant 0 : index
    %51 = vector.load %arg17[%c0_37, %c9_38, %c0_39] : memref<10x10x32xf32, #tpu.memory_space<vmem>>, vector<10x1x32xf32>
    tpu.vector_store %arg17[%c0_37, %c9_38, %c0_39], %50 {strides = array<i32>} : memref<10x10x32xf32, #tpu.memory_space<vmem>>, vector<10x1x32xf32>,
    %c1 = arith.constant 1 : index
    %c1_40 = arith.constant 1 : index
    %c0_41 = arith.constant 0 : index
    %52 = vector.load %arg17[%c1, %c1_40, %c0_41] : memref<10x10x32xf32, #tpu.memory_space<vmem>>, vector<8x8x32xf32>
    tpu.vector_store %arg17[%c1, %c1_40, %c0_41], %42 {strides = array<i32>} : memref<10x10x32xf32, #tpu.memory_space<vmem>>, vector<8x8x32xf32>,
    %c0_42 = arith.constant 0 : index
    %c0_43 = arith.constant 0 : index
    %c0_44 = arith.constant 0 : index
    %53 = vector.load %arg17[%c0_42, %c0_43, %c0_44] : memref<10x10x32xf32, #tpu.memory_space<vmem>>, vector<10x8x32xf32>
    %c0_45 = arith.constant 0 : index
    %c1_46 = arith.constant 1 : index
    %c0_47 = arith.constant 0 : index
    %54 = vector.load %arg17[%c0_45, %c1_46, %c0_47] : memref<10x10x32xf32, #tpu.memory_space<vmem>>, vector<10x8x32xf32>
    %c0_48 = arith.constant 0 : index
    %c2 = arith.constant 2 : index
    %c0_49 = arith.constant 0 : index
    %55 = vector.load %arg17[%c0_48, %c2, %c0_49] : memref<10x10x32xf32, #tpu.memory_space<vmem>>, vector<10x8x32xf32>
    %56 = tpu.concatenate %53, %54, %55 in 2 : vector<10x8x32xf32>, vector<10x8x32xf32>, vector<10x8x32xf32> -> vector<10x8x96xf32>
    %cst_50 = arith.constant 0.000000e+00 : f32
    %57 = vector.broadcast %cst_50 : f32 to vector<64x64xf32>
    %58 = vector.extract_strided_slice %56 {offsets = [0, 0, 0], sizes = [8, 8, 96], strides = [1, 1, 1]} : vector<10x8x96xf32> to vector<8x8x96xf32>
    %59 = vector.shape_cast %58 : vector<8x8x96xf32> to vector<64x96xf32>
    %60 = arith.truncf %59 : vector<64x96xf32> to vector<64x96xbf16>
    %c0_51 = arith.constant 0 : index
    %c0_52 = arith.constant 0 : index
    %c0_53 = arith.constant 0 : index
    %61 = vector.load %arg6[%c0_51, %c0_52, %c0_53] : memref<3x96x64xbf16, #tpu.memory_space<vmem>>, vector<1x96x64xbf16>
    %62 = vector.shape_cast %61 : vector<1x96x64xbf16> to vector<96x64xbf16>
    %cst_54 = arith.constant dense<0.000000e+00> : vector<64x64xf32>
    %63 = tpu.matmul %60, %62, %cst_54 {dimension_numbers = #tpu.dot_dimension_numbers<[1], [0], [0], [1], [0, 0, 1, 1], [], []>} : vector<64x96xbf16>, vector<96x64xbf16>, vector<64x64xf32> -> vector<64x64xf32>
    %64 = arith.addf %57, %63 : vector<64x64xf32>
    %65 = vector.extract_strided_slice %56 {offsets = [1, 0, 0], sizes = [8, 8, 96], strides = [1, 1, 1]} : vector<10x8x96xf32> to vector<8x8x96xf32>
    %66 = vector.shape_cast %65 : vector<8x8x96xf32> to vector<64x96xf32>
    %67 = arith.truncf %66 : vector<64x96xf32> to vector<64x96xbf16>
    %c1_55 = arith.constant 1 : index
    %c0_56 = arith.constant 0 : index
    %c0_57 = arith.constant 0 : index
    %68 = vector.load %arg6[%c1_55, %c0_56, %c0_57] : memref<3x96x64xbf16, #tpu.memory_space<vmem>>, vector<1x96x64xbf16>
    %69 = vector.shape_cast %68 : vector<1x96x64xbf16> to vector<96x64xbf16>
    %cst_58 = arith.constant dense<0.000000e+00> : vector<64x64xf32>
    %70 = tpu.matmul %67, %69, %cst_58 {dimension_numbers = #tpu.dot_dimension_numbers<[1], [0], [0], [1], [0, 0, 1, 1], [], []>} : vector<64x96xbf16>, vector<96x64xbf16>, vector<64x64xf32> -> vector<64x64xf32>
    %71 = arith.addf %64, %70 : vector<64x64xf32>
    %72 = vector.extract_strided_slice %56 {offsets = [2, 0, 0], sizes = [8, 8, 96], strides = [1, 1, 1]} : vector<10x8x96xf32> to vector<8x8x96xf32>
    %73 = vector.shape_cast %72 : vector<8x8x96xf32> to vector<64x96xf32>
    %74 = arith.truncf %73 : vector<64x96xf32> to vector<64x96xbf16>
    %c2_59 = arith.constant 2 : index
    %c0_60 = arith.constant 0 : index
    %c0_61 = arith.constant 0 : index
    %75 = vector.load %arg6[%c2_59, %c0_60, %c0_61] : memref<3x96x64xbf16, #tpu.memory_space<vmem>>, vector<1x96x64xbf16>
    %76 = vector.shape_cast %75 : vector<1x96x64xbf16> to vector<96x64xbf16>
    %cst_62 = arith.constant dense<0.000000e+00> : vector<64x64xf32>
    %77 = tpu.matmul %74, %76, %cst_62 {dimension_numbers = #tpu.dot_dimension_numbers<[1], [0], [0], [1], [0, 0, 1, 1], [], []>} : vector<64x96xbf16>, vector<96x64xbf16>, vector<64x64xf32> -> vector<64x64xf32>
    %78 = arith.addf %71, %77 : vector<64x64xf32>
    %79 = vector.broadcast %43 : vector<1x64xf32> to vector<64x64xf32>
    %80 = arith.addf %78, %79 : vector<64x64xf32>
    %81 = vector.shape_cast %80 : vector<64x64xf32> to vector<8x8x64xf32>
    %c0_63 = arith.constant 0 : index
    %c0_64 = arith.constant 0 : index
    %82 = vector.load %arg8[%c0_63, %c0_64] : memref<1x64xf32, #tpu.memory_space<vmem>>, vector<1x64xf32>
    %c0_65 = arith.constant 0 : index
    %c0_66 = arith.constant 0 : index
    %83 = vector.load %arg9[%c0_65, %c0_66] : memref<1x64xf32, #tpu.memory_space<vmem>>, vector<1x64xf32>
    %c0_67 = arith.constant 0 : index
    %c0_68 = arith.constant 0 : index
    %84 = vector.load %arg10[%c0_67, %c0_68] : memref<64x32xf32, #tpu.memory_space<vmem>>, vector<64x32xf32>
    %c0_69 = arith.constant 0 : index
    %c0_70 = arith.constant 0 : index
    %85 = vector.load %arg11[%c0_69, %c0_70] : memref<32x64xf32, #tpu.memory_space<vmem>>, vector<32x64xf32>
    %cst_71 = arith.constant dense<0.000000e+00> : vector<8x64xf32>
    %86 = vector.multi_reduction <add>, %81, %cst_71 [0] : vector<8x8x64xf32> to vector<8x64xf32>
    %cst_72 = arith.constant dense<0.000000e+00> : vector<64xf32>
    %87 = vector.multi_reduction <add>, %86, %cst_72 [0] : vector<8x64xf32> to vector<64xf32>
    %88 = vector.shape_cast %87 : vector<64xf32> to vector<1x64xf32>
    %89 = arith.mulf %81, %81 : vector<8x8x64xf32>
    %cst_73 = arith.constant dense<0.000000e+00> : vector<8x64xf32>
    %90 = vector.multi_reduction <add>, %89, %cst_73 [0] : vector<8x8x64xf32> to vector<8x64xf32>
    %cst_74 = arith.constant dense<0.000000e+00> : vector<64xf32>
    %91 = vector.multi_reduction <add>, %90, %cst_74 [0] : vector<8x64xf32> to vector<64xf32>
    %92 = vector.shape_cast %91 : vector<64xf32> to vector<1x64xf32>
    %cst_75 = arith.constant dense<0.000000e+00> : vector<1x32xf32>
    %93 = tpu.matmul %88, %84, %cst_75 {dimension_numbers = #tpu.dot_dimension_numbers<[1], [0], [0], [1], [0, 0, 1, 1], [], []>} : vector<1x64xf32>, vector<64x32xf32>, vector<1x32xf32> -> vector<1x32xf32>
    %cst_76 = arith.constant 7.812500e-03 : f32
    %94 = vector.broadcast %cst_76 : f32 to vector<1x32xf32>
    %95 = arith.mulf %93, %94 : vector<1x32xf32>
    %cst_77 = arith.constant dense<0.000000e+00> : vector<1x32xf32>
    %96 = tpu.matmul %92, %84, %cst_77 {dimension_numbers = #tpu.dot_dimension_numbers<[1], [0], [0], [1], [0, 0, 1, 1], [], []>} : vector<1x64xf32>, vector<64x32xf32>, vector<1x32xf32> -> vector<1x32xf32>
    %cst_78 = arith.constant 7.812500e-03 : f32
    %97 = vector.broadcast %cst_78 : f32 to vector<1x32xf32>
    %98 = arith.mulf %96, %97 : vector<1x32xf32>
    %99 = arith.mulf %95, %95 : vector<1x32xf32>
    %100 = arith.subf %98, %99 : vector<1x32xf32>
    %cst_79 = arith.constant 0.000000e+00 : f32
    %101 = vector.broadcast %cst_79 : f32 to vector<1x32xf32>
    %102 = arith.maximumf %100, %101 : vector<1x32xf32>
    %cst_80 = arith.constant 9.99999974E-6 : f32
    %103 = vector.broadcast %cst_80 : f32 to vector<1x32xf32>
    %104 = arith.addf %102, %103 : vector<1x32xf32>
    %105 = math.rsqrt %104 : vector<1x32xf32>
    %cst_81 = arith.constant dense<0.000000e+00> : vector<1x64xf32>
    %106 = tpu.matmul %95, %85, %cst_81 {dimension_numbers = #tpu.dot_dimension_numbers<[1], [0], [0], [1], [0, 0, 1, 1], [], []>} : vector<1x32xf32>, vector<32x64xf32>, vector<1x64xf32> -> vector<1x64xf32>
    %cst_82 = arith.constant dense<0.000000e+00> : vector<1x64xf32>
    %107 = tpu.matmul %105, %85, %cst_82 {dimension_numbers = #tpu.dot_dimension_numbers<[1], [0], [0], [1], [0, 0, 1, 1], [], []>} : vector<1x32xf32>, vector<32x64xf32>, vector<1x64xf32> -> vector<1x64xf32>
    %108 = arith.mulf %107, %82 : vector<1x64xf32>
    %109 = arith.mulf %106, %108 : vector<1x64xf32>
    %110 = arith.subf %83, %109 : vector<1x64xf32>
    %111 = vector.shape_cast %108 : vector<1x64xf32> to vector<1x1x64xf32>
    %112 = vector.broadcast %111 : vector<1x1x64xf32> to vector<8x8x64xf32>
    %113 = arith.mulf %81, %112 : vector<8x8x64xf32>
    %114 = vector.shape_cast %110 : vector<1x64xf32> to vector<1x1x64xf32>
    %115 = vector.broadcast %114 : vector<1x1x64xf32> to vector<8x8x64xf32>
    %116 = arith.addf %113, %115 : vector<8x8x64xf32>
    %117 = arith.negf %116 : vector<8x8x64xf32>
    %118 = math.exp %117 : vector<8x8x64xf32>
    %cst_83 = arith.constant 1.000000e+00 : f32
    %119 = vector.broadcast %cst_83 : f32 to vector<8x8x64xf32>
    %120 = arith.addf %119, %118 : vector<8x8x64xf32>
    %121 = arith.divf %119, %120 : vector<8x8x64xf32>
    %122 = arith.mulf %116, %121 : vector<8x8x64xf32>
    %c0_84 = arith.constant 0 : index
    %c0_85 = arith.constant 0 : index
    %123 = vector.load %arg13[%c0_84, %c0_85] : memref<1x64xf32, #tpu.memory_space<vmem>>, vector<1x64xf32>
    %cst_86 = arith.constant 0.000000e+00 : f32
    %124 = vector.broadcast %cst_86 : f32 to vector<1x10x64xf32>
    %c0_87 = arith.constant 0 : index
    %c0_88 = arith.constant 0 : index
    %c0_89 = arith.constant 0 : index
    %125 = vector.load %arg18[%c0_87, %c0_88, %c0_89] : memref<10x10x64xf32, #tpu.memory_space<vmem>>, vector<1x10x64xf32>
    tpu.vector_store %arg18[%c0_87, %c0_88, %c0_89], %124 {strides = array<i32>} : memref<10x10x64xf32, #tpu.memory_space<vmem>>, vector<1x10x64xf32>,
    %cst_90 = arith.constant 0.000000e+00 : f32
    %126 = vector.broadcast %cst_90 : f32 to vector<1x10x64xf32>
    %c9_91 = arith.constant 9 : index
    %c0_92 = arith.constant 0 : index
    %c0_93 = arith.constant 0 : index
    %127 = vector.load %arg18[%c9_91, %c0_92, %c0_93] : memref<10x10x64xf32, #tpu.memory_space<vmem>>, vector<1x10x64xf32>
    tpu.vector_store %arg18[%c9_91, %c0_92, %c0_93], %126 {strides = array<i32>} : memref<10x10x64xf32, #tpu.memory_space<vmem>>, vector<1x10x64xf32>,
    %cst_94 = arith.constant 0.000000e+00 : f32
    %128 = vector.broadcast %cst_94 : f32 to vector<10x1x64xf32>
    %c0_95 = arith.constant 0 : index
    %c0_96 = arith.constant 0 : index
    %c0_97 = arith.constant 0 : index
    %129 = vector.load %arg18[%c0_95, %c0_96, %c0_97] : memref<10x10x64xf32, #tpu.memory_space<vmem>>, vector<10x1x64xf32>
    tpu.vector_store %arg18[%c0_95, %c0_96, %c0_97], %128 {strides = array<i32>} : memref<10x10x64xf32, #tpu.memory_space<vmem>>, vector<10x1x64xf32>,
    %cst_98 = arith.constant 0.000000e+00 : f32
    %130 = vector.broadcast %cst_98 : f32 to vector<10x1x64xf32>
    %c0_99 = arith.constant 0 : index
    %c9_100 = arith.constant 9 : index
    %c0_101 = arith.constant 0 : index
    %131 = vector.load %arg18[%c0_99, %c9_100, %c0_101] : memref<10x10x64xf32, #tpu.memory_space<vmem>>, vector<10x1x64xf32>
    tpu.vector_store %arg18[%c0_99, %c9_100, %c0_101], %130 {strides = array<i32>} : memref<10x10x64xf32, #tpu.memory_space<vmem>>, vector<10x1x64xf32>,
    %c1_102 = arith.constant 1 : index
    %c1_103 = arith.constant 1 : index
    %c0_104 = arith.constant 0 : index
    %132 = vector.load %arg18[%c1_102, %c1_103, %c0_104] : memref<10x10x64xf32, #tpu.memory_space<vmem>>, vector<8x8x64xf32>
    tpu.vector_store %arg18[%c1_102, %c1_103, %c0_104], %122 {strides = array<i32>} : memref<10x10x64xf32, #tpu.memory_space<vmem>>, vector<8x8x64xf32>,
    %c0_105 = arith.constant 0 : index
    %c0_106 = arith.constant 0 : index
    %c0_107 = arith.constant 0 : index
    %133 = vector.load %arg18[%c0_105, %c0_106, %c0_107] : memref<10x10x64xf32, #tpu.memory_space<vmem>>, vector<10x8x64xf32>
    %c0_108 = arith.constant 0 : index
    %c1_109 = arith.constant 1 : index
    %c0_110 = arith.constant 0 : index
    %134 = vector.load %arg18[%c0_108, %c1_109, %c0_110] : memref<10x10x64xf32, #tpu.memory_space<vmem>>, vector<10x8x64xf32>
    %c0_111 = arith.constant 0 : index
    %c2_112 = arith.constant 2 : index
    %c0_113 = arith.constant 0 : index
    %135 = vector.load %arg18[%c0_111, %c2_112, %c0_113] : memref<10x10x64xf32, #tpu.memory_space<vmem>>, vector<10x8x64xf32>
    %136 = tpu.concatenate %133, %134, %135 in 2 : vector<10x8x64xf32>, vector<10x8x64xf32>, vector<10x8x64xf32> -> vector<10x8x192xf32>
    %cst_114 = arith.constant 0.000000e+00 : f32
    %137 = vector.broadcast %cst_114 : f32 to vector<64x64xf32>
    %138 = vector.extract_strided_slice %136 {offsets = [0, 0, 0], sizes = [8, 8, 192], strides = [1, 1, 1]} : vector<10x8x192xf32> to vector<8x8x192xf32>
    %139 = vector.shape_cast %138 : vector<8x8x192xf32> to vector<64x192xf32>
    %140 = arith.truncf %139 : vector<64x192xf32> to vector<64x192xbf16>
    %c0_115 = arith.constant 0 : index
    %c0_116 = arith.constant 0 : index
    %c0_117 = arith.constant 0 : index
    %141 = vector.load %arg12[%c0_115, %c0_116, %c0_117] : memref<3x192x64xbf16, #tpu.memory_space<vmem>>, vector<1x192x64xbf16>
    %142 = vector.shape_cast %141 : vector<1x192x64xbf16> to vector<192x64xbf16>
    %cst_118 = arith.constant dense<0.000000e+00> : vector<64x64xf32>
    %143 = tpu.matmul %140, %142, %cst_118 {dimension_numbers = #tpu.dot_dimension_numbers<[1], [0], [0], [1], [0, 0, 1, 1], [], []>} : vector<64x192xbf16>, vector<192x64xbf16>, vector<64x64xf32> -> vector<64x64xf32>
    %144 = arith.addf %137, %143 : vector<64x64xf32>
    %145 = vector.extract_strided_slice %136 {offsets = [1, 0, 0], sizes = [8, 8, 192], strides = [1, 1, 1]} : vector<10x8x192xf32> to vector<8x8x192xf32>
    %146 = vector.shape_cast %145 : vector<8x8x192xf32> to vector<64x192xf32>
    %147 = arith.truncf %146 : vector<64x192xf32> to vector<64x192xbf16>
    %c1_119 = arith.constant 1 : index
    %c0_120 = arith.constant 0 : index
    %c0_121 = arith.constant 0 : index
    %148 = vector.load %arg12[%c1_119, %c0_120, %c0_121] : memref<3x192x64xbf16, #tpu.memory_space<vmem>>, vector<1x192x64xbf16>
    %149 = vector.shape_cast %148 : vector<1x192x64xbf16> to vector<192x64xbf16>
    %cst_122 = arith.constant dense<0.000000e+00> : vector<64x64xf32>
    %150 = tpu.matmul %147, %149, %cst_122 {dimension_numbers = #tpu.dot_dimension_numbers<[1], [0], [0], [1], [0, 0, 1, 1], [], []>} : vector<64x192xbf16>, vector<192x64xbf16>, vector<64x64xf32> -> vector<64x64xf32>
    %151 = arith.addf %144, %150 : vector<64x64xf32>
    %152 = vector.extract_strided_slice %136 {offsets = [2, 0, 0], sizes = [8, 8, 192], strides = [1, 1, 1]} : vector<10x8x192xf32> to vector<8x8x192xf32>
    %153 = vector.shape_cast %152 : vector<8x8x192xf32> to vector<64x192xf32>
    %154 = arith.truncf %153 : vector<64x192xf32> to vector<64x192xbf16>
    %c2_123 = arith.constant 2 : index
    %c0_124 = arith.constant 0 : index
    %c0_125 = arith.constant 0 : index
    %155 = vector.load %arg12[%c2_123, %c0_124, %c0_125] : memref<3x192x64xbf16, #tpu.memory_space<vmem>>, vector<1x192x64xbf16>
    %156 = vector.shape_cast %155 : vector<1x192x64xbf16> to vector<192x64xbf16>
    %cst_126 = arith.constant dense<0.000000e+00> : vector<64x64xf32>
    %157 = tpu.matmul %154, %156, %cst_126 {dimension_numbers = #tpu.dot_dimension_numbers<[1], [0], [0], [1], [0, 0, 1, 1], [], []>} : vector<64x192xbf16>, vector<192x64xbf16>, vector<64x64xf32> -> vector<64x64xf32>
    %158 = arith.addf %151, %157 : vector<64x64xf32>
    %159 = vector.broadcast %123 : vector<1x64xf32> to vector<64x64xf32>
    %160 = arith.addf %158, %159 : vector<64x64xf32>
    %161 = vector.shape_cast %160 : vector<64x64xf32> to vector<8x8x64xf32>
    %162 = vector.shape_cast %1 : vector<8x8x32xf32> to vector<64x32xf32>
    %163 = arith.truncf %162 : vector<64x32xf32> to vector<64x32xbf16>
    %c0_127 = arith.constant 0 : index
    %c0_128 = arith.constant 0 : index
    %164 = vector.load %arg14[%c0_127, %c0_128] : memref<32x64xbf16, #tpu.memory_space<vmem>>, vector<32x64xbf16>
    %cst_129 = arith.constant dense<0.000000e+00> : vector<64x64xf32>
    %165 = tpu.matmul %163, %164, %cst_129 {dimension_numbers = #tpu.dot_dimension_numbers<[1], [0], [0], [1], [0, 0, 1, 1], [], []>} : vector<64x32xbf16>, vector<32x64xbf16>, vector<64x64xf32> -> vector<64x64xf32>
    %c0_130 = arith.constant 0 : index
    %c0_131 = arith.constant 0 : index
    %166 = vector.load %arg15[%c0_130, %c0_131] : memref<1x64xf32, #tpu.memory_space<vmem>>, vector<1x64xf32>
    %167 = vector.broadcast %166 : vector<1x64xf32> to vector<64x64xf32>
    %168 = arith.addf %165, %167 : vector<64x64xf32>
    %169 = vector.shape_cast %168 : vector<64x64xf32> to vector<8x8x64xf32>
    %170 = arith.addf %161, %169 : vector<8x8x64xf32>
    %c0_132 = arith.constant 0 : index
    %c0_133 = arith.constant 0 : index
    %c0_134 = arith.constant 0 : index
    %c0_135 = arith.constant 0 : index
    %171 = vector.load %arg16[%c0_132, %c0_133, %c0_134, %c0_135] : memref<1x8x8x64xf32, #tpu.memory_space<vmem>>, vector<1x8x8x64xf32>
    %172 = vector.shape_cast %171 : vector<1x8x8x64xf32> to vector<8x8x64xf32>
    %173 = vector.shape_cast %170 : vector<8x8x64xf32> to vector<1x8x8x64xf32>
    tpu.vector_store %arg16[%c0_132, %c0_133, %c0_134, %c0_135], %173 {strides = array<i32>} : memref<1x8x8x64xf32, #tpu.memory_space<vmem>>, vector<1x8x8x64xf32>,
    return
  }
  func.func @transform_0(%arg0: i32) -> (i32, i32, i32, i32) {
    %c0_i32 = arith.constant 0 : i32
    %c0_i32_0 = arith.constant 0 : i32
    %c0_i32_1 = arith.constant 0 : i32
    %c0_i32_2 = arith.constant 0 : i32
    return %arg0, %c0_i32, %c0_i32_0, %c0_i32_1 : i32, i32, i32, i32
  }
  func.func @transform_1(%arg0: i32) -> (i32, i32) {
    %c0_i32 = arith.constant 0 : i32
    %c0_i32_0 = arith.constant 0 : i32
    %c0_i32_1 = arith.constant 0 : i32
    return %c0_i32, %c0_i32_0 : i32, i32
  }
  func.func @transform_2(%arg0: i32) -> (i32, i32) {
    %c0_i32 = arith.constant 0 : i32
    %c0_i32_0 = arith.constant 0 : i32
    %c0_i32_1 = arith.constant 0 : i32
    return %c0_i32, %c0_i32_0 : i32, i32
  }
  func.func @transform_3(%arg0: i32) -> (i32, i32) {
    %c0_i32 = arith.constant 0 : i32
    %c0_i32_0 = arith.constant 0 : i32
    %c0_i32_1 = arith.constant 0 : i32
    return %c0_i32, %c0_i32_0 : i32, i32
  }
  func.func @transform_4(%arg0: i32) -> (i32, i32) {
    %c0_i32 = arith.constant 0 : i32
    %c0_i32_0 = arith.constant 0 : i32
    %c0_i32_1 = arith.constant 0 : i32
    return %c0_i32, %c0_i32_0 : i32, i32
  }
  func.func @transform_5(%arg0: i32) -> (i32, i32, i32) {
    %c0_i32 = arith.constant 0 : i32
    %c0_i32_0 = arith.constant 0 : i32
    %c0_i32_1 = arith.constant 0 : i32
    %c0_i32_2 = arith.constant 0 : i32
    return %c0_i32, %c0_i32_0, %c0_i32_1 : i32, i32, i32
  }
  func.func @transform_6(%arg0: i32) -> (i32, i32) {
    %c0_i32 = arith.constant 0 : i32
    %c0_i32_0 = arith.constant 0 : i32
    %c0_i32_1 = arith.constant 0 : i32
    return %c0_i32, %c0_i32_0 : i32, i32
  }
  func.func @transform_7(%arg0: i32) -> (i32, i32) {
    %c0_i32 = arith.constant 0 : i32
    %c0_i32_0 = arith.constant 0 : i32
    %c0_i32_1 = arith.constant 0 : i32
    return %c0_i32, %c0_i32_0 : i32, i32
  }
  func.func @transform_8(%arg0: i32) -> (i32, i32) {
    %c0_i32 = arith.constant 0 : i32
    %c0_i32_0 = arith.constant 0 : i32
    %c0_i32_1 = arith.constant 0 : i32
    return %c0_i32, %c0_i32_0 : i32, i32
  }
  func.func @transform_9(%arg0: i32) -> (i32, i32) {
    %c0_i32 = arith.constant 0 : i32
    %c0_i32_0 = arith.constant 0 : i32
    %c0_i32_1 = arith.constant 0 : i32
    return %c0_i32, %c0_i32_0 : i32, i32
  }
  func.func @transform_10(%arg0: i32) -> (i32, i32) {
    %c0_i32 = arith.constant 0 : i32
    %c0_i32_0 = arith.constant 0 : i32
    %c0_i32_1 = arith.constant 0 : i32
    return %c0_i32, %c0_i32_0 : i32, i32
  }
  func.func @transform_11(%arg0: i32) -> (i32, i32, i32) {
    %c0_i32 = arith.constant 0 : i32
    %c0_i32_0 = arith.constant 0 : i32
    %c0_i32_1 = arith.constant 0 : i32
    %c0_i32_2 = arith.constant 0 : i32
    return %c0_i32, %c0_i32_0, %c0_i32_1 : i32, i32, i32
  }
  func.func @transform_12(%arg0: i32) -> (i32, i32) {
    %c0_i32 = arith.constant 0 : i32
    %c0_i32_0 = arith.constant 0 : i32
    %c0_i32_1 = arith.constant 0 : i32
    return %c0_i32, %c0_i32_0 : i32, i32
  }
  func.func @transform_13(%arg0: i32) -> (i32, i32) {
    %c0_i32 = arith.constant 0 : i32
    %c0_i32_0 = arith.constant 0 : i32
    %c0_i32_1 = arith.constant 0 : i32
    return %c0_i32, %c0_i32_0 : i32, i32
  }
  func.func @transform_14(%arg0: i32) -> (i32, i32) {
    %c0_i32 = arith.constant 0 : i32
    %c0_i32_0 = arith.constant 0 : i32
    %c0_i32_1 = arith.constant 0 : i32
    return %c0_i32, %c0_i32_0 : i32, i32
  }
  func.func @transform_15(%arg0: i32) -> (i32, i32, i32, i32) {
    %c0_i32 = arith.constant 0 : i32
    %c0_i32_0 = arith.constant 0 : i32
    %c0_i32_1 = arith.constant 0 : i32
    %c0_i32_2 = arith.constant 0 : i32
    return %arg0, %c0_i32, %c0_i32_0, %c0_i32_1 : i32, i32, i32, i32
  }
}

</mosaic_0001>

<llo_original>
// kernel: tpu_custom_call.1
$region0: #{tpu_custom_call.1}
  #allocation0 [shape = 'u32[]', space=smem, size = 0x4, offset = 0x4, fixed_abs, tag = 'smem constant byte address 0x4 - core index']
  #allocation1 [shape = 'u32[144,128]{1,0:T(1,128)}', space=vmem, size = 0x12000, scoped, tag = 'internal scratch']
  #allocation2 [shape = 'f32[10,10,32]{2,1,0:T(8,128)}', space=vmem, size = 0x14000, scoped, tag = 'scratch operand']
  #allocation3 [shape = 'f32[10,10,64]{2,1,0:T(8,128)}', space=vmem, size = 0x14000, scoped, tag = 'scratch operand']
  %s0 = inlined_call_operand.vmem [shape: f32[2,8,8,32], index: 0, kind: input, shape index: {}]
  %s1 = inlined_call_operand.vmem [shape: f32[1,32], index: 1, kind: input, shape index: {}]
  %s2 = inlined_call_operand.vmem [shape: f32[1,32], index: 2, kind: input, shape index: {}]
  %s3 = inlined_call_operand.vmem [shape: f32[32,32], index: 3, kind: input, shape index: {}]
  %s4 = inlined_call_operand.vmem [shape: f32[32,32], index: 4, kind: input, shape index: {}]
  %s5 = inlined_call_operand.vmem [shape: bf16[3,96,64], index: 5, kind: input, shape index: {}]
  %s6 = inlined_call_operand.vmem [shape: f32[1,64], index: 6, kind: input, shape index: {}]
  %s7 = inlined_call_operand.vmem [shape: f32[1,64], index: 7, kind: input, shape index: {}]
  %s8 = inlined_call_operand.vmem [shape: f32[1,64], index: 8, kind: input, shape index: {}]
  %s9 = inlined_call_operand.vmem [shape: f32[64,32], index: 9, kind: input, shape index: {}]
  %s10 = inlined_call_operand.vmem [shape: f32[32,64], index: 10, kind: input, shape index: {}]
  %s11 = inlined_call_operand.vmem [shape: bf16[3,192,64], index: 11, kind: input, shape index: {}]
  %s12 = inlined_call_operand.vmem [shape: f32[1,64], index: 12, kind: input, shape index: {}]
  %s13 = inlined_call_operand.vmem [shape: bf16[32,64], index: 13, kind: input, shape index: {}]
  %s14 = inlined_call_operand.vmem [shape: f32[1,64], index: 14, kind: input, shape index: {}]
  %s15 = inlined_call_operand.hbm [shape: f32[2,8,8,64], index: 15, kind: output, shape index: {}]
  %s16 = sld [smem:[#allocation0]]
  $region93: #{tpu_custom_call.1} parent=0
    _
  %s18 = ssub.s32 1, %s16
  %s19 = scalar_select 0, %s18, %s16
  $region1: #{tpu_custom_call.1} parent=0
    #allocation4 [shape = 'u8[65536]{0}', space=vmem, size = 0x10000, scoped, tag = 'output window, operand 0']
    #allocation5 [shape = 's32[2]{0}', space=sflag, size = 0x8, scoped, tag = 'scoped memory for tpu_custom_call.1']
    %20 = vsyncpa [#allocation5], 0
    %s21 = scalar_lea.sflag [#allocation5], 1
    %22 = vsyncpa %s21, 0
    loop: start=0, step=1, limit=4
    $region2: #{tpu_custom_call.1} parent=1 // loop_pre_header
      _
    $region3: #{tpu_custom_call.1} parent=1 // loop_header
      %s24 = sphi 0, %s28
      %p25 = scmp.ge.s32.totalorder %s24, 4
      %s34 = sphi 0, %s36
      %s37 = sphi 0, %s34
      %s38 = sphi 0, %s37
      %s54 = sphi 0, %s38
      %s58 = sphi 0, %s58
      %s60 = sphi 0, %s58
      %s61 = sphi 0, %s60
      %s75 = sphi 0, %s61
      %s79 = sphi 0, %s79
      %s81 = sphi 0, %s79
      %s82 = sphi 0, %s81
      %s96 = sphi 0, %s82
      %s100 = sphi 0, %s100
      %s102 = sphi 0, %s100
      %s103 = sphi 0, %s102
      %s117 = sphi 0, %s103
      %s121 = sphi 0, %s121
      %s123 = sphi 0, %s121
      %s124 = sphi 0, %s123
      %s138 = sphi 0, %s124
      %s142 = sphi 0, %s142
      %s144 = sphi 0, %s142
      %s145 = sphi 0, %s144
      %s159 = sphi 0, %s145
      %s163 = sphi 0, %s163
      %s165 = sphi 0, %s163
      %s166 = sphi 0, %s165
      %s180 = sphi 0, %s166
      %s184 = sphi 0, %s184
      %s186 = sphi 0, %s184
      %s187 = sphi 0, %s186
      %s201 = sphi 0, %s187
      %s205 = sphi 0, %s205
      %s207 = sphi 0, %s205
      %s208 = sphi 0, %s207
      %s222 = sphi 0, %s208
      %s226 = sphi 0, %s226
      %s228 = sphi 0, %s226
      %s229 = sphi 0, %s228
      %s243 = sphi 0, %s229
      %s247 = sphi 0, %s247
      %s249 = sphi 0, %s247
      %s250 = sphi 0, %s249
      %s264 = sphi 0, %s250
      %s268 = sphi 0, %s268
      %s270 = sphi 0, %s268
      %s271 = sphi 0, %s270
      %s285 = sphi 0, %s271
      %s289 = sphi 0, %s289
      %s291 = sphi 0, %s289
      %s292 = sphi 0, %s291
      %s306 = sphi 0, %s292
      %s310 = sphi 0, %s310
      %s312 = sphi 0, %s310
      %s313 = sphi 0, %s312
      %s327 = sphi 0, %s313
      %s331 = sphi 0, %s331
      %s333 = sphi 0, %s331
      %s334 = sphi 0, %s333
      %s348 = sphi 0, %s334
      %s354 = sphi 0, %s356
      %s357 = sphi 0, %s354
      %s358 = sphi 0, %s357
      %s374 = sphi 0, %s358
    $region4: #{tpu_custom_call.1} parent=1 // loop_header_branch
      %27 = sbr.rel (%p25) target = $region8
    $region5: #{tpu_custom_call.1} parent=1 // loop_body
      %s29 = ssub.s32 %s24, 1
      %s30 = ssub.s32 %s24, 2
      %s31 = sadd.s32 %s24, 1
      %s32 = ssub.s32 %s24, %s31
      %p33 = scmp.eq.s32.totalorder %s32, 0
      %s35 = sadd.s32 %s34, 1
      %s36 = scalar_select %p33, %s34, %s35
      %p39 = pneg %p33
      %p40 = scmp.eq.s32.totalorder %s24, 1
      %p41 = por %p39, %p40
      %p42 = scmp.ne.s32.totalorder %s34, %s37
      %p43 = scmp.eq.s32.totalorder %s24, 0
      %p44 = por %p42, %p43
      %p45 = scmp.ne.s32.totalorder %s34, %s37
      %p46 = scmp.eq.s32.totalorder %s29, 1
      %p47 = por %p45, %p46
      %p48 = scmp.ne.s32.totalorder %s37, %s38
      %p49 = scmp.eq.s32.totalorder %s29, 0
      %p50 = por %p48, %p49
      %p51 = scmp.ne.s32.totalorder %s37, %s38
      %p52 = scmp.eq.s32.totalorder %s30, 1
      %p53 = por %p51, %p52
      %p55 = scmp.ne.s32.totalorder %s38, %s54
      %p56 = scmp.eq.s32.totalorder %s30, 0
      %p57 = por %p55, %p56
      %s59 = sadd.s32 %s58, 1
      %p62 = scmp.eq.s32.totalorder %s24, 1
      %p63 = scmp.ne.s32.totalorder %s58, %s60
      %p64 = scmp.eq.s32.totalorder %s24, 0
      %p65 = por %p63, %p64
      %p66 = scmp.ne.s32.totalorder %s58, %s60
      %p67 = scmp.eq.s32.totalorder %s29, 1
      %p68 = por %p66, %p67
      %p69 = scmp.ne.s32.totalorder %s60, %s61
      %p70 = scmp.eq.s32.totalorder %s29, 0
      %p71 = por %p69, %p70
      %p72 = scmp.ne.s32.totalorder %s60, %s61
      %p73 = scmp.eq.s32.totalorder %s30, 1
      %p74 = por %p72, %p73
      %p76 = scmp.ne.s32.totalorder %s61, %s75
      %p77 = scmp.eq.s32.totalorder %s30, 0
      %p78 = por %p76, %p77
      %s80 = sadd.s32 %s79, 1
      %p83 = scmp.eq.s32.totalorder %s24, 1
      %p84 = scmp.ne.s32.totalorder %s79, %s81
      %p85 = scmp.eq.s32.totalorder %s24, 0
      %p86 = por %p84, %p85
      %p87 = scmp.ne.s32.totalorder %s79, %s81
      %p88 = scmp.eq.s32.totalorder %s29, 1
      %p89 = por %p87, %p88
      %p90 = scmp.ne.s32.totalorder %s81, %s82
      %p91 = scmp.eq.s32.totalorder %s29, 0
      %p92 = por %p90, %p91
      %p93 = scmp.ne.s32.totalorder %s81, %s82
      %p94 = scmp.eq.s32.totalorder %s30, 1
      %p95 = por %p93, %p94
      %p97 = scmp.ne.s32.totalorder %s82, %s96
      %p98 = scmp.eq.s32.totalorder %s30, 0
      %p99 = por %p97, %p98
      %s101 = sadd.s32 %s100, 1
      %p104 = scmp.eq.s32.totalorder %s24, 1
      %p105 = scmp.ne.s32.totalorder %s100, %s102
      %p106 = scmp.eq.s32.totalorder %s24, 0
      %p107 = por %p105, %p106
      %p108 = scmp.ne.s32.totalorder %s100, %s102
      %p109 = scmp.eq.s32.totalorder %s29, 1
      %p110 = por %p108, %p109
      %p111 = scmp.ne.s32.totalorder %s102, %s103
      %p112 = scmp.eq.s32.totalorder %s29, 0
      %p113 = por %p111, %p112
      %p114 = scmp.ne.s32.totalorder %s102, %s103
      %p115 = scmp.eq.s32.totalorder %s30, 1
      %p116 = por %p114, %p115
      %p118 = scmp.ne.s32.totalorder %s103, %s117
      %p119 = scmp.eq.s32.totalorder %s30, 0
      %p120 = por %p118, %p119
      %s122 = sadd.s32 %s121, 1
      %p125 = scmp.eq.s32.totalorder %s24, 1
      %p126 = scmp.ne.s32.totalorder %s121, %s123
      %p127 = scmp.eq.s32.totalorder %s24, 0
      %p128 = por %p126, %p127
      %p129 = scmp.ne.s32.totalorder %s121, %s123
      %p130 = scmp.eq.s32.totalorder %s29, 1
      %p131 = por %p129, %p130
      %p132 = scmp.ne.s32.totalorder %s123, %s124
      %p133 = scmp.eq.s32.totalorder %s29, 0
      %p134 = por %p132, %p133
      %p135 = scmp.ne.s32.totalorder %s123, %s124
      %p136 = scmp.eq.s32.totalorder %s30, 1
      %p137 = por %p135, %p136
      %p139 = scmp.ne.s32.totalorder %s124, %s138
      %p140 = scmp.eq.s32.totalorder %s30, 0
      %p141 = por %p139, %p140
      %s143 = sadd.s32 %s142, 1
      %p146 = scmp.eq.s32.totalorder %s24, 1
      %p147 = scmp.ne.s32.totalorder %s142, %s144
      %p148 = scmp.eq.s32.totalorder %s24, 0
      %p149 = por %p147, %p148
      %p150 = scmp.ne.s32.totalorder %s142, %s144
      %p151 = scmp.eq.s32.totalorder %s29, 1
      %p152 = por %p150, %p151
      %p153 = scmp.ne.s32.totalorder %s144, %s145
      %p154 = scmp.eq.s32.totalorder %s29, 0
      %p155 = por %p153, %p154
      %p156 = scmp.ne.s32.totalorder %s144, %s145
      %p157 = scmp.eq.s32.totalorder %s30, 1
      %p158 = por %p156, %p157
      %p160 = scmp.ne.s32.totalorder %s145, %s159
      %p161 = scmp.eq.s32.totalorder %s30, 0
      %p162 = por %p160, %p161
      %s164 = sadd.s32 %s163, 1
      %p167 = scmp.eq.s32.totalorder %s24, 1
      %p168 = scmp.ne.s32.totalorder %s163, %s165
      %p169 = scmp.eq.s32.totalorder %s24, 0
      %p170 = por %p168, %p169
      %p171 = scmp.ne.s32.totalorder %s163, %s165
      %p172 = scmp.eq.s32.totalorder %s29, 1
      %p173 = por %p171, %p172
      %p174 = scmp.ne.s32.totalorder %s165, %s166
      %p175 = scmp.eq.s32.totalorder %s29, 0
      %p176 = por %p174, %p175
      %p177 = scmp.ne.s32.totalorder %s165, %s166
      %p178 = scmp.eq.s32.totalorder %s30, 1
      %p179 = por %p177, %p178
      %p181 = scmp.ne.s32.totalorder %s166, %s180
      %p182 = scmp.eq.s32.totalorder %s30, 0
      %p183 = por %p181, %p182
      %s185 = sadd.s32 %s184, 1
      %p188 = scmp.eq.s32.totalorder %s24, 1
      %p189 = scmp.ne.s32.totalorder %s184, %s186
      %p190 = scmp.eq.s32.totalorder %s24, 0
      %p191 = por %p189, %p190
      %p192 = scmp.ne.s32.totalorder %s184, %s186
      %p193 = scmp.eq.s32.totalorder %s29, 1
      %p194 = por %p192, %p193
      %p195 = scmp.ne.s32.totalorder %s186, %s187
      %p196 = scmp.eq.s32.totalorder %s29, 0
      %p197 = por %p195, %p196
      %p198 = scmp.ne.s32.totalorder %s186, %s187
      %p199 = scmp.eq.s32.totalorder %s30, 1
      %p200 = por %p198, %p199
      %p202 = scmp.ne.s32.totalorder %s187, %s201
      %p203 = scmp.eq.s32.totalorder %s30, 0
      %p204 = por %p202, %p203
      %s206 = sadd.s32 %s205, 1
      %p209 = scmp.eq.s32.totalorder %s24, 1
      %p210 = scmp.ne.s32.totalorder %s205, %s207
      %p211 = scmp.eq.s32.totalorder %s24, 0
      %p212 = por %p210, %p211
      %p213 = scmp.ne.s32.totalorder %s205, %s207
      %p214 = scmp.eq.s32.totalorder %s29, 1
      %p215 = por %p213, %p214
      %p216 = scmp.ne.s32.totalorder %s207, %s208
      %p217 = scmp.eq.s32.totalorder %s29, 0
      %p218 = por %p216, %p217
      %p219 = scmp.ne.s32.totalorder %s207, %s208
      %p220 = scmp.eq.s32.totalorder %s30, 1
      %p221 = por %p219, %p220
      %p223 = scmp.ne.s32.totalorder %s208, %s222
      %p224 = scmp.eq.s32.totalorder %s30, 0
      %p225 = por %p223, %p224
      %s227 = sadd.s32 %s226, 1
      %p230 = scmp.eq.s32.totalorder %s24, 1
      %p231 = scmp.ne.s32.totalorder %s226, %s228
      %p232 = scmp.eq.s32.totalorder %s24, 0
      %p233 = por %p231, %p232
      %p234 = scmp.ne.s32.totalorder %s226, %s228
      %p235 = scmp.eq.s32.totalorder %s29, 1
      %p236 = por %p234, %p235
      %p237 = scmp.ne.s32.totalorder %s228, %s229
      %p238 = scmp.eq.s32.totalorder %s29, 0
      %p239 = por %p237, %p238
      %p240 = scmp.ne.s32.totalorder %s228, %s229
      %p241 = scmp.eq.s32.totalorder %s30, 1
      %p242 = por %p240, %p241
      %p244 = scmp.ne.s32.totalorder %s229, %s243
      %p245 = scmp.eq.s32.totalorder %s30, 0
      %p246 = por %p244, %p245
      %s248 = sadd.s32 %s247, 1
      %p251 = scmp.eq.s32.totalorder %s24, 1
      %p252 = scmp.ne.s32.totalorder %s247, %s249
      %p253 = scmp.eq.s32.totalorder %s24, 0
      %p254 = por %p252, %p253
      %p255 = scmp.ne.s32.totalorder %s247, %s249
      %p256 = scmp.eq.s32.totalorder %s29, 1
      %p257 = por %p255, %p256
      %p258 = scmp.ne.s32.totalorder %s249, %s250
      %p259 = scmp.eq.s32.totalorder %s29, 0
      %p260 = por %p258, %p259
      %p261 = scmp.ne.s32.totalorder %s249, %s250
      %p262 = scmp.eq.s32.totalorder %s30, 1
      %p263 = por %p261, %p262
      %p265 = scmp.ne.s32.totalorder %s250, %s264
      %p266 = scmp.eq.s32.totalorder %s30, 0
      %p267 = por %p265, %p266
      %s269 = sadd.s32 %s268, 1
      %p272 = scmp.eq.s32.totalorder %s24, 1
      %p273 = scmp.ne.s32.totalorder %s268, %s270
      %p274 = scmp.eq.s32.totalorder %s24, 0
      %p275 = por %p273, %p274
      %p276 = scmp.ne.s32.totalorder %s268, %s270
      %p277 = scmp.eq.s32.totalorder %s29, 1
      %p278 = por %p276, %p277
      %p279 = scmp.ne.s32.totalorder %s270, %s271
      %p280 = scmp.eq.s32.totalorder %s29, 0
      %p281 = por %p279, %p280
      %p282 = scmp.ne.s32.totalorder %s270, %s271
      %p283 = scmp.eq.s32.totalorder %s30, 1
      %p284 = por %p282, %p283
      %p286 = scmp.ne.s32.totalorder %s271, %s285
      %p287 = scmp.eq.s32.totalorder %s30, 0
      %p288 = por %p286, %p287
      %s290 = sadd.s32 %s289, 1
      %p293 = scmp.eq.s32.totalorder %s24, 1
      %p294 = scmp.ne.s32.totalorder %s289, %s291
      %p295 = scmp.eq.s32.totalorder %s24, 0
      %p296 = por %p294, %p295
      %p297 = scmp.ne.s32.totalorder %s289, %s291
      %p298 = scmp.eq.s32.totalorder %s29, 1
      %p299 = por %p297, %p298
      %p300 = scmp.ne.s32.totalorder %s291, %s292
      %p301 = scmp.eq.s32.totalorder %s29, 0
      %p302 = por %p300, %p301
      %p303 = scmp.ne.s32.totalorder %s291, %s292
      %p304 = scmp.eq.s32.totalorder %s30, 1
      %p305 = por %p303, %p304
      %p307 = scmp.ne.s32.totalorder %s292, %s306
      %p308 = scmp.eq.s32.totalorder %s30, 0
      %p309 = por %p307, %p308
      %s311 = sadd.s32 %s310, 1
      %p314 = scmp.eq.s32.totalorder %s24, 1
      %p315 = scmp.ne.s32.totalorder %s310, %s312
      %p316 = scmp.eq.s32.totalorder %s24, 0
      %p317 = por %p315, %p316
      %p318 = scmp.ne.s32.totalorder %s310, %s312
      %p319 = scmp.eq.s32.totalorder %s29, 1
      %p320 = por %p318, %p319
      %p321 = scmp.ne.s32.totalorder %s312, %s313
      %p322 = scmp.eq.s32.totalorder %s29, 0
      %p323 = por %p321, %p322
      %p324 = scmp.ne.s32.totalorder %s312, %s313
      %p325 = scmp.eq.s32.totalorder %s30, 1
      %p326 = por %p324, %p325
      %p328 = scmp.ne.s32.totalorder %s313, %s327
      %p329 = scmp.eq.s32.totalorder %s30, 0
      %p330 = por %p328, %p329
      %s332 = sadd.s32 %s331, 1
      %p335 = scmp.eq.s32.totalorder %s24, 1
      %p336 = scmp.ne.s32.totalorder %s331, %s333
      %p337 = scmp.eq.s32.totalorder %s24, 0
      %p338 = por %p336, %p337
      %p339 = scmp.ne.s32.totalorder %s331, %s333
      %p340 = scmp.eq.s32.totalorder %s29, 1
      %p341 = por %p339, %p340
      %p342 = scmp.ne.s32.totalorder %s333, %s334
      %p343 = scmp.eq.s32.totalorder %s29, 0
      %p344 = por %p342, %p343
      %p345 = scmp.ne.s32.totalorder %s333, %s334
      %p346 = scmp.eq.s32.totalorder %s30, 1
      %p347 = por %p345, %p346
      %p349 = scmp.ne.s32.totalorder %s334, %s348
      %p350 = scmp.eq.s32.totalorder %s30, 0
      %p351 = por %p349, %p350
      %s352 = ssub.s32 %s24, %s31
      %p353 = scmp.eq.s32.totalorder %s352, 0
      %s355 = sadd.s32 %s354, 1
      %s356 = scalar_select %p353, %s354, %s355
      %p359 = pneg %p353
      %p360 = scmp.eq.s32.totalorder %s24, 1
      %p361 = por %p359, %p360
      %p362 = scmp.ne.s32.totalorder %s354, %s357
      %p363 = scmp.eq.s32.totalorder %s24, 0
      %p364 = por %p362, %p363
      %p365 = scmp.ne.s32.totalorder %s354, %s357
      %p366 = scmp.eq.s32.totalorder %s29, 1
      %p367 = por %p365, %p366
      %p368 = scmp.ne.s32.totalorder %s357, %s358
      %p369 = scmp.eq.s32.totalorder %s29, 0
      %p370 = por %p368, %p369
      %p371 = scmp.ne.s32.totalorder %s357, %s358
      %p372 = scmp.eq.s32.totalorder %s30, 1
      %p373 = por %p371, %p372
      %p375 = scmp.ne.s32.totalorder %s358, %s374
      %p376 = scmp.eq.s32.totalorder %s30, 0
      %p377 = por %p375, %p376
      %p378 = scmp.le.s32.totalorder 1, %s24
      %p379 = scmp.lt.s32.totalorder %s24, 3
      %p380 = pnand %p378, %p379
      %p381 = pneg %p380
      // Predicated region
      $region9: #{tpu_custom_call.1} parent=5 // pred_check
        _
      $region10: #{tpu_custom_call.1} parent=5 // pred_check_branch
        %383 = sbr.rel (%p380) target = $region12
      $region11: #{tpu_custom_call.1} parent=5 // pred_region
        %s384 = ssub.s32 %s24, 1
        // Predicated region
        $region13: #{tpu_custom_call.1} parent=11 // pred_check
          %p385 = pneg %p71
        $region14: #{tpu_custom_call.1} parent=11 // pred_check_branch
          %387 = sbr.rel (%p385) target = $region16
        $region15: #{tpu_custom_call.1} parent=11 // pred_region
          _
        $region16: #{tpu_custom_call.1} parent=11 // pred_fallthru
          _
        // Predicated region
        $region17: #{tpu_custom_call.1} parent=11 // pred_check
          %p388 = pneg %p92
        $region18: #{tpu_custom_call.1} parent=11 // pred_check_branch
          %390 = sbr.rel (%p388) target = $region20
        $region19: #{tpu_custom_call.1} parent=11 // pred_region
          _
        $region20: #{tpu_custom_call.1} parent=11 // pred_fallthru
          _
        // Predicated region
        $region21: #{tpu_custom_call.1} parent=11 // pred_check
          %p391 = pneg %p113
        $region22: #{tpu_custom_call.1} parent=11 // pred_check_branch
          %393 = sbr.rel (%p391) target = $region24
        $region23: #{tpu_custom_call.1} parent=11 // pred_region
          _
        $region24: #{tpu_custom_call.1} parent=11 // pred_fallthru
          _
        // Predicated region
        $region25: #{tpu_custom_call.1} parent=11 // pred_check
          %p394 = pneg %p134
        $region26: #{tpu_custom_call.1} parent=11 // pred_check_branch
          %396 = sbr.rel (%p394) target = $region28
        $region27: #{tpu_custom_call.1} parent=11 // pred_region
          _
        $region28: #{tpu_custom_call.1} parent=11 // pred_fallthru
          _
        // Predicated region
        $region29: #{tpu_custom_call.1} parent=11 // pred_check
          %p397 = pneg %p155
        $region30: #{tpu_custom_call.1} parent=11 // pred_check_branch
          %399 = sbr.rel (%p397) target = $region32
        $region31: #{tpu_custom_call.1} parent=11 // pred_region
          _
        $region32: #{tpu_custom_call.1} parent=11 // pred_fallthru
          _
        // Predicated region
        $region33: #{tpu_custom_call.1} parent=11 // pred_check
          %p400 = pneg %p176
        $region34: #{tpu_custom_call.1} parent=11 // pred_check_branch
          %402 = sbr.rel (%p400) target = $region36
        $region35: #{tpu_custom_call.1} parent=11 // pred_region
          _
        $region36: #{tpu_custom_call.1} parent=11 // pred_fallthru
          _
        // Predicated region
        $region37: #{tpu_custom_call.1} parent=11 // pred_check
          %p403 = pneg %p197
        $region38: #{tpu_custom_call.1} parent=11 // pred_check_branch
          %405 = sbr.rel (%p403) target = $region40
        $region39: #{tpu_custom_call.1} parent=11 // pred_region
          _
        $region40: #{tpu_custom_call.1} parent=11 // pred_fallthru
          _
        // Predicated region
        $region41: #{tpu_custom_call.1} parent=11 // pred_check
          %p406 = pneg %p218
        $region42: #{tpu_custom_call.1} parent=11 // pred_check_branch
          %408 = sbr.rel (%p406) target = $region44
        $region43: #{tpu_custom_call.1} parent=11 // pred_region
          _
        $region44: #{tpu_custom_call.1} parent=11 // pred_fallthru
          _
        // Predicated region
        $region45: #{tpu_custom_call.1} parent=11 // pred_check
          %p409 = pneg %p239
        $region46: #{tpu_custom_call.1} parent=11 // pred_check_branch
          %411 = sbr.rel (%p409) target = $region48
        $region47: #{tpu_custom_call.1} parent=11 // pred_region
          _
        $region48: #{tpu_custom_call.1} parent=11 // pred_fallthru
          _
        // Predicated region
        $region49: #{tpu_custom_call.1} parent=11 // pred_check
          %p412 = pneg %p260
        $region50: #{tpu_custom_call.1} parent=11 // pred_check_branch
          %414 = sbr.rel (%p412) target = $region52
        $region51: #{tpu_custom_call.1} parent=11 // pred_region
          _
        $region52: #{tpu_custom_call.1} parent=11 // pred_fallthru
          _
        // Predicated region
        $region53: #{tpu_custom_call.1} parent=11 // pred_check
          %p415 = pneg %p281
        $region54: #{tpu_custom_call.1} parent=11 // pred_check_branch
          %417 = sbr.rel (%p415) target = $region56
        $region55: #{tpu_custom_call.1} parent=11 // pred_region
          _
        $region56: #{tpu_custom_call.1} parent=11 // pred_fallthru
          _
        // Predicated region
        $region57: #{tpu_custom_call.1} parent=11 // pred_check
          %p418 = pneg %p302
        $region58: #{tpu_custom_call.1} parent=11 // pred_check_branch
          %420 = sbr.rel (%p418) target = $region60
        $region59: #{tpu_custom_call.1} parent=11 // pred_region
          _
        $region60: #{tpu_custom_call.1} parent=11 // pred_fallthru
          _
        // Predicated region
        $region61: #{tpu_custom_call.1} parent=11 // pred_check
          %p421 = pneg %p323
        $region62: #{tpu_custom_call.1} parent=11 // pred_check_branch
          %423 = sbr.rel (%p421) target = $region64
        $region63: #{tpu_custom_call.1} parent=11 // pred_region
          _
        $region64: #{tpu_custom_call.1} parent=11 // pred_fallthru
          _
        // Predicated region
        $region65: #{tpu_custom_call.1} parent=11 // pred_check
          %p424 = pneg %p344
        $region66: #{tpu_custom_call.1} parent=11 // pred_check_branch
          %426 = sbr.rel (%p424) target = $region68
        $region67: #{tpu_custom_call.1} parent=11 // pred_region
          _
        $region68: #{tpu_custom_call.1} parent=11 // pred_fallthru
          _
      $region12: #{tpu_custom_call.1} parent=5 // pred_fallthru
        _
      %p427 = scmp.lt.s32.totalorder %s24, 2
      // Predicated region
      $region69: #{tpu_custom_call.1} parent=5 // pred_check
        %p428 = pneg %p427
      $region70: #{tpu_custom_call.1} parent=5 // pred_check_branch
        %430 = sbr.rel (%p428) target = $region72
      $region71: #{tpu_custom_call.1} parent=5 // pred_region
        // Predicated region
        $region73: #{tpu_custom_call.1} parent=71 // pred_check
          %p431 = pneg %p44
        $region74: #{tpu_custom_call.1} parent=71 // pred_check_branch
          %433 = sbr.rel (%p431) target = $region76
        $region75: #{tpu_custom_call.1} parent=71 // pred_region
          %p434 = scmp.lt.s32.totalorder %s24, 1
          %s435 = scalar_select %p434, %s24, 1
          %s436 = smul.addr %s435, 8
          %s437 = smul.addr %s436, 8
          %s438 = scalar_lea.vmem %s0, %s437
        $region76: #{tpu_custom_call.1} parent=71 // pred_fallthru
          _
      $region72: #{tpu_custom_call.1} parent=5 // pred_fallthru
        _
      %p439 = scmp.le.s32.totalorder 1, %s24
      %p440 = scmp.lt.s32.totalorder %s24, 3
      %p441 = pnand %p439, %p440
      %p442 = pneg %p441
      // Predicated region
      $region77: #{tpu_custom_call.1} parent=5 // pred_check
        _
      $region78: #{tpu_custom_call.1} parent=5 // pred_check_branch
        %444 = sbr.rel (%p441) target = $region80
      $region79: #{tpu_custom_call.1} parent=5 // pred_region
        %s445 = ssub.s32 %s24, 1
        %p446 = scmp.lt.s32.totalorder %s29, 1
        %s447 = scalar_select %p446, %s29, 1
        %s448 = smul.addr %s447, 8
        %s449 = smul.addr %s448, 8
        %s450 = scalar_lea.vmem %s0, %s449
        %p451 = pneg %p50
        %p452 = pneg %p47
        %p453 = pneg %p71
        %p454 = pneg %p68
        %p455 = pneg %p92
        %p456 = pneg %p89
        %p457 = pneg %p113
        %p458 = pneg %p110
        %p459 = pneg %p134
        %p460 = pneg %p131
        %p461 = pneg %p155
        %p462 = pneg %p152
        %p463 = pneg %p176
        %p464 = pneg %p173
        %p465 = pneg %p197
        %p466 = pneg %p194
        %p467 = pneg %p218
        %p468 = pneg %p215
        %p469 = pneg %p239
        %p470 = pneg %p236
        %p471 = pneg %p260
        %p472 = pneg %p257
        %p473 = pneg %p281
        %p474 = pneg %p278
        %p475 = pneg %p302
        %p476 = pneg %p299
        %p477 = pneg %p323
        %p478 = pneg %p320
        %p479 = pneg %p344
        %p480 = pneg %p341
        %p481 = pneg %p370
        %p482 = pneg %p367
        %s483 = sand.u32 %s357, 1
        %s484 = scalar_lea.sflag [#allocation5], %s483
        %s485 = sand.u32 %s357, 1
        %s486 = smul.addr %s485, 64
        %s487 = scalar_lea.vmem [#allocation4], %s486
        %p488 = scmp.lt.s32.totalorder %s29, 1
        %s489 = scalar_select %p488, %s29, 1
        %s490 = smul.addr %s489, 8
        %s491 = smul.addr %s490, 8
        %s492 = scalar_lea.vmem %s0, %s491
        %v494 = vld [vmem:[%s492] sm:$0xff]
        %v495 = vld [vmem:[%s492 + $0x8] sm:$0xff]
        %v496 = vld [vmem:[%s492 + $0x10] sm:$0xff]
        %v497 = vld [vmem:[%s492 + $0x18] sm:$0xff]
        %v498 = vld [vmem:[%s492 + $0x20] sm:$0xff]
        %v499 = vld [vmem:[%s492 + $0x28] sm:$0xff]
        %v500 = vld [vmem:[%s492 + $0x30] sm:$0xff]
        %v501 = vld [vmem:[%s492 + $0x38] sm:$0xff]
        %v502 = vld [vmem:[%s1] sm:$0x1]
        %v503 = vld [vmem:[%s2] sm:$0x1]
        %v504 = vld [vmem:[%s3] sm:$0xff]
        %v505 = vld [vmem:[%s3 + $0x8] sm:$0xff]
        %v506 = vld [vmem:[%s3 + $0x10] sm:$0xff]
        %v507 = vld [vmem:[%s3 + $0x18] sm:$0xff]
        %v508 = vld [vmem:[%s4] sm:$0xff]
        %v509 = vld [vmem:[%s4 + $0x8] sm:$0xff]
        %v510 = vld [vmem:[%s4 + $0x10] sm:$0xff]
        %v511 = vld [vmem:[%s4 + $0x18] sm:$0xff]
        %vm512 = vcmask 261120
        %v513 = vsel %vm512, %v494, 0.0
        %v514 = vsel %vm512, %v495, 0.0
        %v515 = vadd.f32 %v513, %v514
        %v516 = vsel %vm512, %v496, 0.0
        %v517 = vadd.f32 %v515, %v516
        %v518 = vsel %vm512, %v497, 0.0
        %v519 = vadd.f32 %v517, %v518
        %v520 = vsel %vm512, %v498, 0.0
        %v521 = vadd.f32 %v519, %v520
        %v522 = vsel %vm512, %v499, 0.0
        %v523 = vadd.f32 %v521, %v522
        %v524 = vsel %vm512, %v500, 0.0
        %v525 = vadd.f32 %v523, %v524
        %v526 = vsel %vm512, %v501, 0.0
        %v527 = vadd.f32 %v525, %v526
        %v528 = vsel %vm512, %v527, 0.0
        %v529 = vrot.slane %v528, 4
        %v530 = vadd.f32 %v528, %v529
        %v531 = vrot.slane %v530, 2
        %v532 = vadd.f32 %v530, %v531
        %v533 = vrot.slane %v532, 1
        %v534 = vadd.f32 %v532, %v533
        %v535 = vmul.f32 %v494, %v494
        %v536 = vmul.f32 %v495, %v495
        %v537 = vmul.f32 %v496, %v496
        %v538 = vmul.f32 %v497, %v497
        %v539 = vmul.f32 %v498, %v498
        %v540 = vmul.f32 %v499, %v499
        %v541 = vmul.f32 %v500, %v500
        %v542 = vmul.f32 %v501, %v501
        %v543 = vsel %vm512, %v535, 0.0
        %v544 = vsel %vm512, %v536, 0.0
        %v545 = vadd.f32 %v543, %v544
        %v546 = vsel %vm512, %v537, 0.0
        %v547 = vadd.f32 %v545, %v546
        %v548 = vsel %vm512, %v538, 0.0
        %v549 = vadd.f32 %v547, %v548
        %v550 = vsel %vm512, %v539, 0.0
        %v551 = vadd.f32 %v549, %v550
        %v552 = vsel %vm512, %v540, 0.0
        %v553 = vadd.f32 %v551, %v552
        %v554 = vsel %vm512, %v541, 0.0
        %v555 = vadd.f32 %v553, %v554
        %v556 = vsel %vm512, %v542, 0.0
        %v557 = vadd.f32 %v555, %v556
        %v558 = vsel %vm512, %v557, 0.0
        %v559 = vrot.slane %v558, 4
        %v560 = vadd.f32 %v558, %v559
        %v561 = vrot.slane %v560, 2
        %v562 = vadd.f32 %v560, %v561
        %v563 = vrot.slane %v562, 1
        %v564 = vadd.f32 %v562, %v563
        %v566 = vsel %vm512, %v534, 0
        %568 = vmatprep.subr.mxu0 0.0
        %569 = vmatpush1.msra.mxu0 %v504
        %570 = vmatprep.subr.mxu0 0.0
        %571 = vmatpush1.msra.mxu0 %v505
        %572 = vmatprep.subr.mxu0 0.0
        %573 = vmatpush1.msra.mxu0 %v506
        %574 = vmatprep.subr.mxu0 0.0
        %575 = vmatpush1.msra.mxu0 %v507
        %576 = vmatprep.subr.mxu0 0.0
        %577 = vmatpush1.msra.mxu0 0.0
        %578 = vmatprep.subr.mxu0 0.0
        %579 = vmatpush1.msra.mxu0 0.0
        %580 = vmatprep.subr.mxu0 0.0
        %581 = vmatpush1.msra.mxu0 0.0
        %582 = vmatprep.subr.mxu0 0.0
        %583 = vmatpush1.msra.mxu0 0.0
        %584 = vmatprep.subr.mxu0 0.0
        %585 = vmatpush1.msra.mxu0 0.0
        %586 = vmatprep.subr.mxu0 0.0
        %587 = vmatpush1.msra.mxu0 0.0
        %588 = vmatprep.subr.mxu0 0.0
        %589 = vmatpush1.msra.mxu0 0.0
        %590 = vmatprep.subr.mxu0 0.0
        %591 = vmatpush1.msra.mxu0 0.0
        %592 = vmatprep.subr.mxu0 0.0
        %593 = vmatpush1.msra.mxu0 0.0
        %594 = vmatprep.subr.mxu0 0.0
        %595 = vmatpush1.msra.mxu0 0.0
        %596 = vmatprep.subr.mxu0 0.0
        %597 = vmatpush1.msra.mxu0 0.0
        %598 = vmatprep.subr.mxu0 0.0
        %599 = vmatpush1.msra.mxu0 0.0
        %600 = vmatprep.subr.mxu0 0.0
        %601 = vmatpush1.msra.mxu0 0.0
        %602 = vmatprep.subr.mxu0 0.0
        %603 = vmatpush1.msra.mxu0 0.0
        %604 = vmatprep.subr.mxu0 0.0
        %605 = vmatpush1.msra.mxu0 0.0
        %606 = vmatprep.subr.mxu0 0.0
        %607 = vmatpush1.msra.mxu0 0.0
        %608 = vmatprep.subr.mxu0 0.0
        %609 = vmatpush1.msra.mxu0 0.0
        %610 = vmatprep.subr.mxu0 0.0
        %611 = vmatpush1.msra.mxu0 0.0
        %612 = vmatprep.subr.mxu0 0.0
        %613 = vmatpush1.msra.mxu0 0.0
        %614 = vmatprep.subr.mxu0 0.0
        %615 = vmatpush1.msra.mxu0 0.0
        %616 = vmatprep.subr.mxu0 0.0
        %617 = vmatpush1.msra.mxu0 0.0
        %618 = vmatprep.subr.mxu0 0.0
        %619 = vmatpush1.msra.mxu0 0.0
        %620 = vmatprep.subr.mxu0 0.0
        %621 = vmatpush1.msra.mxu0 0.0
        %622 = vmatprep.subr.mxu0 0.0
        %623 = vmatpush1.msra.mxu0 0.0
        %624 = vmatprep.subr.mxu0 0.0
        %625 = vmatpush1.msra.mxu0 0.0
        %626 = vmatprep.subr.mxu0 0.0
        %627 = vmatpush1.msra.mxu0 0.0
        %628 = vmatprep.subr.mxu0 0.0
        %629 = vmatpush1.msra.mxu0 0.0
        %630 = vmatprep.subr.mxu0 0.0
        %631 = vmatpush1.msra.mxu0 0.0
        %632 = vmatprep.mubr.f32.mxu0 0.0
        %633 = vmatmul.mubr.f32.gmra.mrb[0].mxu0 %v566
        %v634 = vpop.f32.mrb[0].mxu0
        %v635 = vadd.f32 0.0, %v634
        %v636 = vpop.f32.mrb[0].mxu0
        %637 = vdwg.mxu0
        %v638 = vmul.f32 %v635, 0.015625
        %v640 = vsel %vm512, %v564, 0
        %642 = vmatprep.subr.mxu0 0.0
        %643 = vmatpush1.msra.mxu0 %v504
        %644 = vmatprep.subr.mxu0 0.0
        %645 = vmatpush1.msra.mxu0 %v505
        %646 = vmatprep.subr.mxu0 0.0
        %647 = vmatpush1.msra.mxu0 %v506
        %648 = vmatprep.subr.mxu0 0.0
        %649 = vmatpush1.msra.mxu0 %v507
        %650 = vmatprep.subr.mxu0 0.0
        %651 = vmatpush1.msra.mxu0 0.0
        %652 = vmatprep.subr.mxu0 0.0
        %653 = vmatpush1.msra.mxu0 0.0
        %654 = vmatprep.subr.mxu0 0.0
        %655 = vmatpush1.msra.mxu0 0.0
        %656 = vmatprep.subr.mxu0 0.0
        %657 = vmatpush1.msra.mxu0 0.0
        %658 = vmatprep.subr.mxu0 0.0
        %659 = vmatpush1.msra.mxu0 0.0
        %660 = vmatprep.subr.mxu0 0.0
        %661 = vmatpush1.msra.mxu0 0.0
        %662 = vmatprep.subr.mxu0 0.0
        %663 = vmatpush1.msra.mxu0 0.0
        %664 = vmatprep.subr.mxu0 0.0
        %665 = vmatpush1.msra.mxu0 0.0
        %666 = vmatprep.subr.mxu0 0.0
        %667 = vmatpush1.msra.mxu0 0.0
        %668 = vmatprep.subr.mxu0 0.0
        %669 = vmatpush1.msra.mxu0 0.0
        %670 = vmatprep.subr.mxu0 0.0
        %671 = vmatpush1.msra.mxu0 0.0
        %672 = vmatprep.subr.mxu0 0.0
        %673 = vmatpush1.msra.mxu0 0.0
        %674 = vmatprep.subr.mxu0 0.0
        %675 = vmatpush1.msra.mxu0 0.0
        %676 = vmatprep.subr.mxu0 0.0
        %677 = vmatpush1.msra.mxu0 0.0
        %678 = vmatprep.subr.mxu0 0.0
        %679 = vmatpush1.msra.mxu0 0.0
        %680 = vmatprep.subr.mxu0 0.0
        %681 = vmatpush1.msra.mxu0 0.0
        %682 = vmatprep.subr.mxu0 0.0
        %683 = vmatpush1.msra.mxu0 0.0
        %684 = vmatprep.subr.mxu0 0.0
        %685 = vmatpush1.msra.mxu0 0.0
        %686 = vmatprep.subr.mxu0 0.0
        %687 = vmatpush1.msra.mxu0 0.0
        %688 = vmatprep.subr.mxu0 0.0
        %689 = vmatpush1.msra.mxu0 0.0
        %690 = vmatprep.subr.mxu0 0.0
        %691 = vmatpush1.msra.mxu0 0.0
        %692 = vmatprep.subr.mxu0 0.0
        %693 = vmatpush1.msra.mxu0 0.0
        %694 = vmatprep.subr.mxu0 0.0
        %695 = vmatpush1.msra.mxu0 0.0
        %696 = vmatprep.subr.mxu0 0.0
        %697 = vmatpush1.msra.mxu0 0.0
        %698 = vmatprep.subr.mxu0 0.0
        %699 = vmatpush1.msra.mxu0 0.0
        %700 = vmatprep.subr.mxu0 0.0
        %701 = vmatpush1.msra.mxu0 0.0
        %702 = vmatprep.subr.mxu0 0.0
        %703 = vmatpush1.msra.mxu0 0.0
        %704 = vmatprep.subr.mxu0 0.0
        %705 = vmatpush1.msra.mxu0 0.0
        %706 = vmatprep.mubr.f32.mxu0 0.0
        %707 = vmatmul.mubr.f32.gmra.mrb[0].mxu0 %v640
        %v708 = vpop.f32.mrb[0].mxu0
        %v709 = vadd.f32 0.0, %v708
        %v710 = vpop.f32.mrb[0].mxu0
        %711 = vdwg.mxu0
        %v712 = vmul.f32 %v709, 0.015625
        %v713 = vmul.f32 %v638, %v638
        %v714 = vsub.f32 %v712, %v713
        %v715 = vmax.f32 %v714, 0.0
        %v716 = vadd.f32 %v715, 1e-05
        %v717 = vrsqrt.pop %v716
        %v719 = vsel %vm512, %v638, 0
        %721 = vmatprep.subr.mxu0 0.0
        %722 = vmatpush1.msra.mxu0 %v508
        %723 = vmatprep.subr.mxu0 0.0
        %724 = vmatpush1.msra.mxu0 %v509
        %725 = vmatprep.subr.mxu0 0.0
        %726 = vmatpush1.msra.mxu0 %v510
        %727 = vmatprep.subr.mxu0 0.0
        %728 = vmatpush1.msra.mxu0 %v511
        %729 = vmatprep.subr.mxu0 0.0
        %730 = vmatpush1.msra.mxu0 0.0
        %731 = vmatprep.subr.mxu0 0.0
        %732 = vmatpush1.msra.mxu0 0.0
        %733 = vmatprep.subr.mxu0 0.0
        %734 = vmatpush1.msra.mxu0 0.0
        %735 = vmatprep.subr.mxu0 0.0
        %736 = vmatpush1.msra.mxu0 0.0
        %737 = vmatprep.subr.mxu0 0.0
        %738 = vmatpush1.msra.mxu0 0.0
        %739 = vmatprep.subr.mxu0 0.0
        %740 = vmatpush1.msra.mxu0 0.0
        %741 = vmatprep.subr.mxu0 0.0
        %742 = vmatpush1.msra.mxu0 0.0
        %743 = vmatprep.subr.mxu0 0.0
        %744 = vmatpush1.msra.mxu0 0.0
        %745 = vmatprep.subr.mxu0 0.0
        %746 = vmatpush1.msra.mxu0 0.0
        %747 = vmatprep.subr.mxu0 0.0
        %748 = vmatpush1.msra.mxu0 0.0
        %749 = vmatprep.subr.mxu0 0.0
        %750 = vmatpush1.msra.mxu0 0.0
        %751 = vmatprep.subr.mxu0 0.0
        %752 = vmatpush1.msra.mxu0 0.0
        %753 = vmatprep.subr.mxu0 0.0
        %754 = vmatpush1.msra.mxu0 0.0
        %755 = vmatprep.subr.mxu0 0.0
        %756 = vmatpush1.msra.mxu0 0.0
        %757 = vmatprep.subr.mxu0 0.0
        %758 = vmatpush1.msra.mxu0 0.0
        %759 = vmatprep.subr.mxu0 0.0
        %760 = vmatpush1.msra.mxu0 0.0
        %761 = vmatprep.subr.mxu0 0.0
        %762 = vmatpush1.msra.mxu0 0.0
        %763 = vmatprep.subr.mxu0 0.0
        %764 = vmatpush1.msra.mxu0 0.0
        %765 = vmatprep.subr.mxu0 0.0
        %766 = vmatpush1.msra.mxu0 0.0
        %767 = vmatprep.subr.mxu0 0.0
        %768 = vmatpush1.msra.mxu0 0.0
        %769 = vmatprep.subr.mxu0 0.0
        %770 = vmatpush1.msra.mxu0 0.0
        %771 = vmatprep.subr.mxu0 0.0
        %772 = vmatpush1.msra.mxu0 0.0
        %773 = vmatprep.subr.mxu0 0.0
        %774 = vmatpush1.msra.mxu0 0.0
        %775 = vmatprep.subr.mxu0 0.0
        %776 = vmatpush1.msra.mxu0 0.0
        %777 = vmatprep.subr.mxu0 0.0
        %778 = vmatpush1.msra.mxu0 0.0
        %779 = vmatprep.subr.mxu0 0.0
        %780 = vmatpush1.msra.mxu0 0.0
        %781 = vmatprep.subr.mxu0 0.0
        %782 = vmatpush1.msra.mxu0 0.0
        %783 = vmatprep.subr.mxu0 0.0
        %784 = vmatpush1.msra.mxu0 0.0
        %785 = vmatprep.mubr.f32.mxu0 0.0
        %786 = vmatmul.mubr.f32.gmra.mrb[0].mxu0 %v719
        %v787 = vpop.f32.mrb[0].mxu0
        %v788 = vadd.f32 0.0, %v787
        %v789 = vpop.f32.mrb[0].mxu0
        %790 = vdwg.mxu0
        %v792 = vsel %vm512, %v717, 0
        %794 = vmatprep.subr.mxu0 0.0
        %795 = vmatpush1.msra.mxu0 %v508
        %796 = vmatprep.subr.mxu0 0.0
        %797 = vmatpush1.msra.mxu0 %v509
        %798 = vmatprep.subr.mxu0 0.0
        %799 = vmatpush1.msra.mxu0 %v510
        %800 = vmatprep.subr.mxu0 0.0
        %801 = vmatpush1.msra.mxu0 %v511
        %802 = vmatprep.subr.mxu0 0.0
        %803 = vmatpush1.msra.mxu0 0.0
        %804 = vmatprep.subr.mxu0 0.0
        %805 = vmatpush1.msra.mxu0 0.0
        %806 = vmatprep.subr.mxu0 0.0
        %807 = vmatpush1.msra.mxu0 0.0
        %808 = vmatprep.subr.mxu0 0.0
        %809 = vmatpush1.msra.mxu0 0.0
        %810 = vmatprep.subr.mxu0 0.0
        %811 = vmatpush1.msra.mxu0 0.0
        %812 = vmatprep.subr.mxu0 0.0
        %813 = vmatpush1.msra.mxu0 0.0
        %814 = vmatprep.subr.mxu0 0.0
        %815 = vmatpush1.msra.mxu0 0.0
        %816 = vmatprep.subr.mxu0 0.0
        %817 = vmatpush1.msra.mxu0 0.0
        %818 = vmatprep.subr.mxu0 0.0
        %819 = vmatpush1.msra.mxu0 0.0
        %820 = vmatprep.subr.mxu0 0.0
        %821 = vmatpush1.msra.mxu0 0.0
        %822 = vmatprep.subr.mxu0 0.0
        %823 = vmatpush1.msra.mxu0 0.0
        %824 = vmatprep.subr.mxu0 0.0
        %825 = vmatpush1.msra.mxu0 0.0
        %826 = vmatprep.subr.mxu0 0.0
        %827 = vmatpush1.msra.mxu0 0.0
        %828 = vmatprep.subr.mxu0 0.0
        %829 = vmatpush1.msra.mxu0 0.0
        %830 = vmatprep.subr.mxu0 0.0
        %831 = vmatpush1.msra.mxu0 0.0
        %832 = vmatprep.subr.mxu0 0.0
        %833 = vmatpush1.msra.mxu0 0.0
        %834 = vmatprep.subr.mxu0 0.0
        %835 = vmatpush1.msra.mxu0 0.0
        %836 = vmatprep.subr.mxu0 0.0
        %837 = vmatpush1.msra.mxu0 0.0
        %838 = vmatprep.subr.mxu0 0.0
        %839 = vmatpush1.msra.mxu0 0.0
        %840 = vmatprep.subr.mxu0 0.0
        %841 = vmatpush1.msra.mxu0 0.0
        %842 = vmatprep.subr.mxu0 0.0
        %843 = vmatpush1.msra.mxu0 0.0
        %844 = vmatprep.subr.mxu0 0.0
        %845 = vmatpush1.msra.mxu0 0.0
        %846 = vmatprep.subr.mxu0 0.0
        %847 = vmatpush1.msra.mxu0 0.0
        %848 = vmatprep.subr.mxu0 0.0
        %849 = vmatpush1.msra.mxu0 0.0
        %850 = vmatprep.subr.mxu0 0.0
        %851 = vmatpush1.msra.mxu0 0.0
        %852 = vmatprep.subr.mxu0 0.0
        %853 = vmatpush1.msra.mxu0 0.0
        %854 = vmatprep.subr.mxu0 0.0
        %855 = vmatpush1.msra.mxu0 0.0
        %856 = vmatprep.subr.mxu0 0.0
        %857 = vmatpush1.msra.mxu0 0.0
        %858 = vmatprep.mubr.f32.mxu0 0.0
        %859 = vmatmul.mubr.f32.gmra.mrb[0].mxu0 %v792
        %v860 = vpop.f32.mrb[0].mxu0
        %v861 = vadd.f32 0.0, %v860
        %v862 = vpop.f32.mrb[0].mxu0
        %863 = vdwg.mxu0
        %v864 = vmul.f32 %v861, %v502
        %v865 = vmul.f32 %v788, %v864
        %v866 = vsub.f32 %v503, %v865
        %v867 = vlaneseq
        %v868 = vshrl.u32 %v867, 7
        %v869 = vsub.s32 0, %v868
        %v870 = vrot.slane %v864, %v869
        %v871 = vmul.f32 %v494, %v870
        %v872 = vmul.f32 %v495, %v870
        %v873 = vmul.f32 %v496, %v870
        %v874 = vmul.f32 %v497, %v870
        %v875 = vmul.f32 %v498, %v870
        %v876 = vmul.f32 %v499, %v870
        %v877 = vmul.f32 %v500, %v870
        %v878 = vmul.f32 %v501, %v870
        %v880 = vlaneseq
        %v881 = vshrl.u32 %v880, 7
        %v882 = vsub.s32 0, %v881
        %v883 = vrot.slane %v866, %v882
        %v885 = vadd.f32 %v871, %v883
        %v886 = vadd.f32 %v872, %v883
        %v887 = vadd.f32 %v873, %v883
        %v888 = vadd.f32 %v874, %v883
        %v889 = vadd.f32 %v875, %v883
        %v890 = vadd.f32 %v876, %v883
        %v891 = vadd.f32 %v877, %v883
        %v892 = vadd.f32 %v878, %v883
        %v893 = vxor.u32 %v885, 2147483648
        %v894 = vxor.u32 %v886, 2147483648
        %v895 = vxor.u32 %v887, 2147483648
        %v896 = vxor.u32 %v888, 2147483648
        %v897 = vxor.u32 %v889, 2147483648
        %v898 = vxor.u32 %v890, 2147483648
        %v899 = vxor.u32 %v891, 2147483648
        %v900 = vxor.u32 %v892, 2147483648
        %v901 = vmul.f32 %v893, 1.442695
        %v902 = vpow.pop %v901
        %v903 = vmul.f32 %v894, 1.442695
        %v904 = vpow.pop %v903
        %v905 = vmul.f32 %v895, 1.442695
        %v906 = vpow.pop %v905
        %v907 = vmul.f32 %v896, 1.442695
        %v908 = vpow.pop %v907
        %v909 = vmul.f32 %v897, 1.442695
        %v910 = vpow.pop %v909
        %v911 = vmul.f32 %v898, 1.442695
        %v912 = vpow.pop %v911
        %v913 = vmul.f32 %v899, 1.442695
        %v914 = vpow.pop %v913
        %v915 = vmul.f32 %v900, 1.442695
        %v916 = vpow.pop %v915
        %v917 = vadd.f32 %v902, 1.0
        %v918 = vadd.f32 %v904, 1.0
        %v919 = vadd.f32 %v906, 1.0
        %v920 = vadd.f32 %v908, 1.0
        %v921 = vadd.f32 %v910, 1.0
        %v922 = vadd.f32 %v912, 1.0
        %v923 = vadd.f32 %v914, 1.0
        %v924 = vadd.f32 %v916, 1.0
        %v925 = vrcp.pop %v917
        %v926 = vmul.f32 1.0, %v925
        %v927 = vrcp.pop %v918
        %v928 = vmul.f32 1.0, %v927
        %v929 = vrcp.pop %v919
        %v930 = vmul.f32 1.0, %v929
        %v931 = vrcp.pop %v920
        %v932 = vmul.f32 1.0, %v931
        %v933 = vrcp.pop %v921
        %v934 = vmul.f32 1.0, %v933
        %v935 = vrcp.pop %v922
        %v936 = vmul.f32 1.0, %v935
        %v937 = vrcp.pop %v923
        %v938 = vmul.f32 1.0, %v937
        %v939 = vrcp.pop %v924
        %v940 = vmul.f32 1.0, %v939
        %v941 = vmul.f32 %v885, %v926
        %v942 = vmul.f32 %v886, %v928
        %v943 = vmul.f32 %v887, %v930
        %v944 = vmul.f32 %v888, %v932
        %v945 = vmul.f32 %v889, %v934
        %v946 = vmul.f32 %v890, %v936
        %v947 = vmul.f32 %v891, %v938
        %v948 = vmul.f32 %v892, %v940
        %v949 = vld [vmem:[%s6] sm:$0x1]
        %950 = vst.msk [vmem:[#allocation2] sm:$0xff] %vm512, 0.0
        %vm951 = vcmask 254976
        %952 = vst.msk [vmem:[#allocation2 + $0x8] sm:$0x3] %vm951, 0.0
        %s953 = scalar_lea.vmem [#allocation2], 144
        %954 = vst.msk [vmem:[%s953] sm:$0xff] %vm512, 0.0
        %955 = vst.msk [vmem:[%s953 + $0x8] sm:$0x3] %vm951, 0.0
        %vm956 = vcmask 253952
        %957 = vst.msk [vmem:[#allocation2] sm:$0x1] %vm956, 0.0
        %958 = vst.msk [vmem:[#allocation2 + $0x10] sm:$0x1] %vm956, 0.0
        %959 = vst.msk [vmem:[#allocation2 + $0x20] sm:$0x1] %vm956, 0.0
        %960 = vst.msk [vmem:[#allocation2 + $0x30] sm:$0x1] %vm956, 0.0
        %961 = vst.msk [vmem:[#allocation2 + $0x40] sm:$0x1] %vm956, 0.0
        %962 = vst.msk [vmem:[#allocation2 + $0x50] sm:$0x1] %vm956, 0.0
        %963 = vst.msk [vmem:[#allocation2 + $0x60] sm:$0x1] %vm956, 0.0
        %964 = vst.msk [vmem:[#allocation2 + $0x70] sm:$0x1] %vm956, 0.0
        %965 = vst.msk [vmem:[#allocation2 + $0x80] sm:$0x1] %vm956, 0.0
        %966 = vst.msk [vmem:[#allocation2 + $0x90] sm:$0x1] %vm956, 0.0
        %967 = vst.msk [vmem:[#allocation2 + $0x9] sm:$0x1] %vm956, 0.0
        %968 = vst.msk [vmem:[#allocation2 + $0x19] sm:$0x1] %vm956, 0.0
        %969 = vst.msk [vmem:[#allocation2 + $0x29] sm:$0x1] %vm956, 0.0
        %970 = vst.msk [vmem:[#allocation2 + $0x39] sm:$0x1] %vm956, 0.0
        %971 = vst.msk [vmem:[#allocation2 + $0x49] sm:$0x1] %vm956, 0.0
        %972 = vst.msk [vmem:[#allocation2 + $0x59] sm:$0x1] %vm956, 0.0
        %973 = vst.msk [vmem:[#allocation2 + $0x69] sm:$0x1] %vm956, 0.0
        %974 = vst.msk [vmem:[#allocation2 + $0x79] sm:$0x1] %vm956, 0.0
        %975 = vst.msk [vmem:[#allocation2 + $0x89] sm:$0x1] %vm956, 0.0
        %976 = vst.msk [vmem:[#allocation2 + $0x99] sm:$0x1] %vm956, 0.0
        %s977 = scalar_lea.vmem [#allocation2], 16
        %978 = vst.msk [vmem:[%s977 + $0x1] sm:$0xff] %vm512, %v941
        %979 = vst.msk [vmem:[%s977 + $0x11] sm:$0xff] %vm512, %v942
        %980 = vst.msk [vmem:[%s977 + $0x21] sm:$0xff] %vm512, %v943
        %981 = vst.msk [vmem:[%s977 + $0x31] sm:$0xff] %vm512, %v944
        %982 = vst.msk [vmem:[%s977 + $0x41] sm:$0xff] %vm512, %v945
        %983 = vst.msk [vmem:[%s977 + $0x51] sm:$0xff] %vm512, %v946
        %984 = vst.msk [vmem:[%s977 + $0x61] sm:$0xff] %vm512, %v947
        %985 = vst.msk [vmem:[%s977 + $0x71] sm:$0xff] %vm512, %v948
        %v986 = vld [vmem:[#allocation2] sm:$0xff]
        %v987 = vld [vmem:[#allocation2 + $0x10] sm:$0xff]
        %v988 = vld [vmem:[#allocation2 + $0x20] sm:$0xff]
        %v989 = vld [vmem:[#allocation2 + $0x30] sm:$0xff]
        %v990 = vld [vmem:[#allocation2 + $0x40] sm:$0xff]
        %v991 = vld [vmem:[#allocation2 + $0x50] sm:$0xff]
        %v992 = vld [vmem:[#allocation2 + $0x60] sm:$0xff]
        %v993 = vld [vmem:[#allocation2 + $0x70] sm:$0xff]
        %v994 = vld [vmem:[#allocation2 + $0x80] sm:$0xff]
        %v995 = vld [vmem:[#allocation2 + $0x90] sm:$0xff]
        %v996 = vld [vmem:[#allocation2 + $0x1] sm:$0xff]
        %v997 = vld [vmem:[#allocation2 + $0x11] sm:$0xff]
        %v998 = vld [vmem:[#allocation2 + $0x21] sm:$0xff]
        %v999 = vld [vmem:[#allocation2 + $0x31] sm:$0xff]
        %v1000 = vld [vmem:[#allocation2 + $0x41] sm:$0xff]
        %v1001 = vld [vmem:[#allocation2 + $0x51] sm:$0xff]
        %v1002 = vld [vmem:[#allocation2 + $0x61] sm:$0xff]
        %v1003 = vld [vmem:[#allocation2 + $0x71] sm:$0xff]
        %v1004 = vld [vmem:[#allocation2 + $0x81] sm:$0xff]
        %v1005 = vld [vmem:[#allocation2 + $0x91] sm:$0xff]
        %v1006 = vld [vmem:[#allocation2 + $0x2] sm:$0xff]
        %v1007 = vld [vmem:[#allocation2 + $0x12] sm:$0xff]
        %v1008 = vld [vmem:[#allocation2 + $0x22] sm:$0xff]
        %v1009 = vld [vmem:[#allocation2 + $0x32] sm:$0xff]
        %v1010 = vld [vmem:[#allocation2 + $0x42] sm:$0xff]
        %v1011 = vld [vmem:[#allocation2 + $0x52] sm:$0xff]
        %v1012 = vld [vmem:[#allocation2 + $0x62] sm:$0xff]
        %v1013 = vld [vmem:[#allocation2 + $0x72] sm:$0xff]
        %v1014 = vld [vmem:[#allocation2 + $0x82] sm:$0xff]
        %v1015 = vld [vmem:[#allocation2 + $0x92] sm:$0xff]
        %1026 = vrot.lane.b32.xlu0 %v996, 32
        %v1027 = vpop.permute.xlu0 %1026
        %1028 = vrot.lane.b32.xlu0 %v997, 32
        %v1029 = vpop.permute.xlu0 %1028
        %1030 = vrot.lane.b32.xlu0 %v998, 32
        %v1031 = vpop.permute.xlu0 %1030
        %1032 = vrot.lane.b32.xlu0 %v999, 32
        %v1033 = vpop.permute.xlu0 %1032
        %1034 = vrot.lane.b32.xlu0 %v1000, 32
        %v1035 = vpop.permute.xlu0 %1034
        %1036 = vrot.lane.b32.xlu0 %v1001, 32
        %v1037 = vpop.permute.xlu0 %1036
        %1038 = vrot.lane.b32.xlu0 %v1002, 32
        %v1039 = vpop.permute.xlu0 %1038
        %1040 = vrot.lane.b32.xlu0 %v1003, 32
        %v1041 = vpop.permute.xlu0 %1040
        %1042 = vrot.lane.b32.xlu0 %v1004, 32
        %v1043 = vpop.permute.xlu0 %1042
        %1044 = vrot.lane.b32.xlu0 %v1005, 32
        %v1045 = vpop.permute.xlu0 %1044
        %1066 = vrot.lane.b32.xlu0 %v1006, 64
        %v1067 = vpop.permute.xlu0 %1066
        %1068 = vrot.lane.b32.xlu0 %v1007, 64
        %v1069 = vpop.permute.xlu0 %1068
        %1070 = vrot.lane.b32.xlu0 %v1008, 64
        %v1071 = vpop.permute.xlu0 %1070
        %1072 = vrot.lane.b32.xlu0 %v1009, 64
        %v1073 = vpop.permute.xlu0 %1072
        %1074 = vrot.lane.b32.xlu0 %v1010, 64
        %v1075 = vpop.permute.xlu0 %1074
        %1076 = vrot.lane.b32.xlu0 %v1011, 64
        %v1077 = vpop.permute.xlu0 %1076
        %1078 = vrot.lane.b32.xlu0 %v1012, 64
        %v1079 = vpop.permute.xlu0 %1078
        %1080 = vrot.lane.b32.xlu0 %v1013, 64
        %v1081 = vpop.permute.xlu0 %1080
        %1082 = vrot.lane.b32.xlu0 %v1014, 64
        %v1083 = vpop.permute.xlu0 %1082
        %1084 = vrot.lane.b32.xlu0 %v1015, 64
        %v1085 = vpop.permute.xlu0 %1084
        %v1096 = vsel %vm512, %v986, %v1027
        %v1097 = vsel %vm512, %v987, %v1029
        %v1098 = vsel %vm512, %v988, %v1031
        %v1099 = vsel %vm512, %v989, %v1033
        %v1100 = vsel %vm512, %v990, %v1035
        %v1101 = vsel %vm512, %v991, %v1037
        %v1102 = vsel %vm512, %v992, %v1039
        %v1103 = vsel %vm512, %v993, %v1041
        %v1104 = vsel %vm512, %v994, %v1043
        %v1105 = vsel %vm512, %v995, %v1045
        %vm1106 = vcmask 523264
        %v1107 = vsel %vm1106, %v1096, %v1067
        %v1108 = vsel %vm1106, %v1097, %v1069
        %v1109 = vsel %vm1106, %v1098, %v1071
        %v1110 = vsel %vm1106, %v1099, %v1073
        %v1111 = vsel %vm1106, %v1100, %v1075
        %v1112 = vsel %vm1106, %v1101, %v1077
        %v1113 = vsel %vm1106, %v1102, %v1079
        %v1114 = vsel %vm1106, %v1103, %v1081
        %v1115 = vsel %vm1106, %v1104, %v1083
        %v1116 = vsel %vm1106, %v1105, %v1085
        %v1117 = vpack.c.bf16 %v1108, %v1107
        %v1118 = vpack.c.bf16 %v1110, %v1109
        %v1119 = vpack.c.bf16 %v1112, %v1111
        %v1120 = vpack.c.bf16 %v1114, %v1113
        %v1121 = vld [vmem:[%s5] sm:$0xf]
        %v1122 = vld [vmem:[%s5 + $0x4] sm:$0xf]
        %v1123 = vld [vmem:[%s5 + $0x8] sm:$0xf]
        %v1124 = vld [vmem:[%s5 + $0xc] sm:$0xf]
        %v1125 = vld [vmem:[%s5 + $0x10] sm:$0xf]
        %v1126 = vld [vmem:[%s5 + $0x14] sm:$0xf]
        %v1127 = vld [vmem:[%s5 + $0x18] sm:$0xf]
        %v1128 = vld [vmem:[%s5 + $0x1c] sm:$0xf]
        %v1129 = vld [vmem:[%s5 + $0x20] sm:$0xf]
        %v1130 = vld [vmem:[%s5 + $0x24] sm:$0xf]
        %v1131 = vld [vmem:[%s5 + $0x28] sm:$0xf]
        %v1132 = vld [vmem:[%s5 + $0x2c] sm:$0xf]
        %v1133 = vpack.c.bf16 %v1109, %v1108
        %v1134 = vpack.c.bf16 %v1111, %v1110
        %v1135 = vpack.c.bf16 %v1113, %v1112
        %v1136 = vpack.c.bf16 %v1115, %v1114
        %s1137 = scalar_lea.vmem %s5, 48
        %v1138 = vld [vmem:[%s1137] sm:$0xf]
        %v1139 = vld [vmem:[%s1137 + $0x4] sm:$0xf]
        %v1140 = vld [vmem:[%s1137 + $0x8] sm:$0xf]
        %v1141 = vld [vmem:[%s1137 + $0xc] sm:$0xf]
        %v1142 = vld [vmem:[%s1137 + $0x10] sm:$0xf]
        %v1143 = vld [vmem:[%s1137 + $0x14] sm:$0xf]
        %v1144 = vld [vmem:[%s1137 + $0x18] sm:$0xf]
        %v1145 = vld [vmem:[%s1137 + $0x1c] sm:$0xf]
        %v1146 = vld [vmem:[%s1137 + $0x20] sm:$0xf]
        %v1147 = vld [vmem:[%s1137 + $0x24] sm:$0xf]
        %v1148 = vld [vmem:[%s1137 + $0x28] sm:$0xf]
        %v1149 = vld [vmem:[%s1137 + $0x2c] sm:$0xf]
        %v1162 = vunpack.c.l.b16 %v1138
        %v1163 = vunpack.c.l.b16 %v1139
        %v1164 = vunpack.c.l.b16 %v1140
        %v1165 = vunpack.c.l.b16 %v1141
        %v1166 = vunpack.c.l.b16 %v1142
        %v1167 = vunpack.c.l.b16 %v1143
        %v1168 = vunpack.c.l.b16 %v1144
        %v1169 = vunpack.c.l.b16 %v1145
        %v1170 = vunpack.c.l.b16 %v1146
        %v1171 = vunpack.c.l.b16 %v1147
        %v1172 = vunpack.c.l.b16 %v1148
        %v1173 = vunpack.c.l.b16 %v1149
        %v1174 = vpack.c.b16 %v1163, %v1162
        %v1175 = vpack.c.b16 %v1165, %v1164
        %v1176 = vpack.c.b16 %v1167, %v1166
        %v1177 = vpack.c.b16 %v1169, %v1168
        %v1178 = vpack.c.b16 %v1171, %v1170
        %v1179 = vpack.c.b16 %v1173, %v1172
        %vm1186 = vcmask 785408
        %v1188 = vsel %vm1186, %v1133, 0
        %v1191 = vsel %vm1186, %v1134, 0
        %v1194 = vsel %vm1186, %v1135, 0
        %v1197 = vsel %vm1186, %v1136, 0
        %1199 = vmatprep.subr.bf16.mxu0 0
        %1200 = vmatpush1.bf16.msra.mxu0 %v1174
        %1201 = vmatprep.subr.bf16.mxu0 0
        %1202 = vmatpush1.bf16.msra.mxu0 %v1175
        %1203 = vmatprep.subr.bf16.mxu0 0
        %1204 = vmatpush1.bf16.msra.mxu0 %v1176
        %1205 = vmatprep.subr.bf16.mxu0 0
        %1206 = vmatpush1.bf16.msra.mxu0 %v1177
        %1207 = vmatprep.subr.bf16.mxu0 0
        %1208 = vmatpush1.bf16.msra.mxu0 %v1178
        %1209 = vmatprep.subr.bf16.mxu0 0
        %1210 = vmatpush1.bf16.msra.mxu0 %v1179
        %1211 = vmatprep.subr.bf16.mxu0 0
        %1212 = vmatpush1.bf16.msra.mxu0 0
        %1213 = vmatprep.subr.bf16.mxu0 0
        %1214 = vmatpush1.bf16.msra.mxu0 0
        %1215 = vmatprep.subr.bf16.mxu0 0
        %1216 = vmatpush1.bf16.msra.mxu0 0
        %1217 = vmatprep.subr.bf16.mxu0 0
        %1218 = vmatpush1.bf16.msra.mxu0 0
        %1219 = vmatprep.subr.bf16.mxu0 0
        %1220 = vmatpush1.bf16.msra.mxu0 0
        %1221 = vmatprep.subr.bf16.mxu0 0
        %1222 = vmatpush1.bf16.msra.mxu0 0
        %1223 = vmatprep.subr.bf16.mxu0 0
        %1224 = vmatpush1.bf16.msra.mxu0 0
        %1225 = vmatprep.subr.bf16.mxu0 0
        %1226 = vmatpush1.bf16.msra.mxu0 0
        %1227 = vmatprep.subr.bf16.mxu0 0
        %1228 = vmatpush1.bf16.msra.mxu0 0
        %1229 = vmatprep.subr.bf16.mxu0 0
        %1230 = vmatpush1.bf16.msra.mxu0 0
        %1231 = vmatprep.mubr.bf16.mxu0 0
        %1232 = vmatmul.mubr.bf16.gmra.mrb[0].mxu0 %v1188
        %v1233 = vpop.f32.mrb[0].mxu0
        %v1234 = vadd.f32 0.0, %v1233
        %v1235 = vpop.f32.mrb[0].mxu0
        %v1236 = vpop.f32.mrb[0].mxu0
        %v1237 = vadd.f32 0.0, %v1236
        %v1238 = vpop.f32.mrb[0].mxu0
        %1239 = vmatprep.mubr.bf16.mxu0 0
        %1240 = vmatmul.mubr.bf16.gmra.mrb[0].mxu0 %v1191
        %v1241 = vpop.f32.mrb[0].mxu0
        %v1242 = vadd.f32 0.0, %v1241
        %v1243 = vpop.f32.mrb[0].mxu0
        %v1244 = vpop.f32.mrb[0].mxu0
        %v1245 = vadd.f32 0.0, %v1244
        %v1246 = vpop.f32.mrb[0].mxu0
        %1247 = vmatprep.mubr.bf16.mxu0 0
        %1248 = vmatmul.mubr.bf16.gmra.mrb[0].mxu0 %v1194
        %v1249 = vpop.f32.mrb[0].mxu0
        %v1250 = vadd.f32 0.0, %v1249
        %v1251 = vpop.f32.mrb[0].mxu0
        %v1252 = vpop.f32.mrb[0].mxu0
        %v1253 = vadd.f32 0.0, %v1252
        %v1254 = vpop.f32.mrb[0].mxu0
        %1255 = vmatprep.mubr.bf16.mxu0 0
        %1256 = vmatmul.mubr.bf16.gmra.mrb[0].mxu0 %v1197
        %v1257 = vpop.f32.mrb[0].mxu0
        %v1258 = vadd.f32 0.0, %v1257
        %v1259 = vpop.f32.mrb[0].mxu0
        %v1260 = vpop.f32.mrb[0].mxu0
        %v1261 = vadd.f32 0.0, %v1260
        %v1262 = vpop.f32.mrb[0].mxu0
        %1263 = vdwg.mxu0
        %v1276 = vunpack.c.l.b16 %v1121
        %v1277 = vunpack.c.l.b16 %v1122
        %v1278 = vunpack.c.l.b16 %v1123
        %v1279 = vunpack.c.l.b16 %v1124
        %v1280 = vunpack.c.l.b16 %v1125
        %v1281 = vunpack.c.l.b16 %v1126
        %v1282 = vunpack.c.l.b16 %v1127
        %v1283 = vunpack.c.l.b16 %v1128
        %v1284 = vunpack.c.l.b16 %v1129
        %v1285 = vunpack.c.l.b16 %v1130
        %v1286 = vunpack.c.l.b16 %v1131
        %v1287 = vunpack.c.l.b16 %v1132
        %v1288 = vpack.c.b16 %v1277, %v1276
        %v1289 = vpack.c.b16 %v1279, %v1278
        %v1290 = vpack.c.b16 %v1281, %v1280
        %v1291 = vpack.c.b16 %v1283, %v1282
        %v1292 = vpack.c.b16 %v1285, %v1284
        %v1293 = vpack.c.b16 %v1287, %v1286
        %v1301 = vsel %vm1186, %v1117, 0
        %v1304 = vsel %vm1186, %v1118, 0
        %v1307 = vsel %vm1186, %v1119, 0
        %v1310 = vsel %vm1186, %v1120, 0
        %1312 = vmatprep.subr.bf16.mxu0 0
        %1313 = vmatpush1.bf16.msra.mxu0 %v1288
        %1314 = vmatprep.subr.bf16.mxu0 0
        %1315 = vmatpush1.bf16.msra.mxu0 %v1289
        %1316 = vmatprep.subr.bf16.mxu0 0
        %1317 = vmatpush1.bf16.msra.mxu0 %v1290
        %1318 = vmatprep.subr.bf16.mxu0 0
        %1319 = vmatpush1.bf16.msra.mxu0 %v1291
        %1320 = vmatprep.subr.bf16.mxu0 0
        %1321 = vmatpush1.bf16.msra.mxu0 %v1292
        %1322 = vmatprep.subr.bf16.mxu0 0
        %1323 = vmatpush1.bf16.msra.mxu0 %v1293
        %1324 = vmatprep.subr.bf16.mxu0 0
        %1325 = vmatpush1.bf16.msra.mxu0 0
        %1326 = vmatprep.subr.bf16.mxu0 0
        %1327 = vmatpush1.bf16.msra.mxu0 0
        %1328 = vmatprep.subr.bf16.mxu0 0
        %1329 = vmatpush1.bf16.msra.mxu0 0
        %1330 = vmatprep.subr.bf16.mxu0 0
        %1331 = vmatpush1.bf16.msra.mxu0 0
        %1332 = vmatprep.subr.bf16.mxu0 0
        %1333 = vmatpush1.bf16.msra.mxu0 0
        %1334 = vmatprep.subr.bf16.mxu0 0
        %1335 = vmatpush1.bf16.msra.mxu0 0
        %1336 = vmatprep.subr.bf16.mxu0 0
        %1337 = vmatpush1.bf16.msra.mxu0 0
        %1338 = vmatprep.subr.bf16.mxu0 0
        %1339 = vmatpush1.bf16.msra.mxu0 0
        %1340 = vmatprep.subr.bf16.mxu0 0
        %1341 = vmatpush1.bf16.msra.mxu0 0
        %1342 = vmatprep.subr.bf16.mxu0 0
        %1343 = vmatpush1.bf16.msra.mxu0 0
        %1344 = vmatprep.mubr.bf16.mxu0 0
        %1345 = vmatmul.mubr.bf16.gmra.mrb[0].mxu0 %v1301
        %v1346 = vpop.f32.mrb[0].mxu0
        %v1347 = vadd.f32 %v1234, %v1346
        %v1348 = vpop.f32.mrb[0].mxu0
        %v1349 = vpop.f32.mrb[0].mxu0
        %v1350 = vadd.f32 %v1237, %v1349
        %v1351 = vpop.f32.mrb[0].mxu0
        %1352 = vmatprep.mubr.bf16.mxu0 0
        %1353 = vmatmul.mubr.bf16.gmra.mrb[0].mxu0 %v1304
        %v1354 = vpop.f32.mrb[0].mxu0
        %v1355 = vadd.f32 %v1242, %v1354
        %v1356 = vpop.f32.mrb[0].mxu0
        %v1357 = vpop.f32.mrb[0].mxu0
        %v1358 = vadd.f32 %v1245, %v1357
        %v1359 = vpop.f32.mrb[0].mxu0
        %1360 = vmatprep.mubr.bf16.mxu0 0
        %1361 = vmatmul.mubr.bf16.gmra.mrb[0].mxu0 %v1307
        %v1362 = vpop.f32.mrb[0].mxu0
        %v1363 = vadd.f32 %v1250, %v1362
        %v1364 = vpop.f32.mrb[0].mxu0
        %v1365 = vpop.f32.mrb[0].mxu0
        %v1366 = vadd.f32 %v1253, %v1365
        %v1367 = vpop.f32.mrb[0].mxu0
        %1368 = vmatprep.mubr.bf16.mxu0 0
        %1369 = vmatmul.mubr.bf16.gmra.mrb[0].mxu0 %v1310
        %v1370 = vpop.f32.mrb[0].mxu0
        %v1371 = vadd.f32 %v1258, %v1370
        %v1372 = vpop.f32.mrb[0].mxu0
        %v1373 = vpop.f32.mrb[0].mxu0
        %v1374 = vadd.f32 %v1261, %v1373
        %v1375 = vpop.f32.mrb[0].mxu0
        %1376 = vdwg.mxu0
        %v1377 = vpack.c.bf16 %v1116, %v1115
        %s1378 = scalar_lea.vmem %s5, 96
        %v1379 = vld [vmem:[%s1378] sm:$0xf]
        %v1380 = vld [vmem:[%s1378 + $0x4] sm:$0xf]
        %v1381 = vld [vmem:[%s1378 + $0x8] sm:$0xf]
        %v1382 = vld [vmem:[%s1378 + $0xc] sm:$0xf]
        %v1383 = vld [vmem:[%s1378 + $0x10] sm:$0xf]
        %v1384 = vld [vmem:[%s1378 + $0x14] sm:$0xf]
        %v1385 = vld [vmem:[%s1378 + $0x18] sm:$0xf]
        %v1386 = vld [vmem:[%s1378 + $0x1c] sm:$0xf]
        %v1387 = vld [vmem:[%s1378 + $0x20] sm:$0xf]
        %v1388 = vld [vmem:[%s1378 + $0x24] sm:$0xf]
        %v1389 = vld [vmem:[%s1378 + $0x28] sm:$0xf]
        %v1390 = vld [vmem:[%s1378 + $0x2c] sm:$0xf]
        %v1403 = vunpack.c.l.b16 %v1379
        %v1404 = vunpack.c.l.b16 %v1380
        %v1405 = vunpack.c.l.b16 %v1381
        %v1406 = vunpack.c.l.b16 %v1382
        %v1407 = vunpack.c.l.b16 %v1383
        %v1408 = vunpack.c.l.b16 %v1384
        %v1409 = vunpack.c.l.b16 %v1385
        %v1410 = vunpack.c.l.b16 %v1386
        %v1411 = vunpack.c.l.b16 %v1387
        %v1412 = vunpack.c.l.b16 %v1388
        %v1413 = vunpack.c.l.b16 %v1389
        %v1414 = vunpack.c.l.b16 %v1390
        %v1415 = vpack.c.b16 %v1404, %v1403
        %v1416 = vpack.c.b16 %v1406, %v1405
        %v1417 = vpack.c.b16 %v1408, %v1407
        %v1418 = vpack.c.b16 %v1410, %v1409
        %v1419 = vpack.c.b16 %v1412, %v1411
        %v1420 = vpack.c.b16 %v1414, %v1413
        %v1428 = vsel %vm1186, %v1377, 0
        %1430 = vmatprep.subr.bf16.mxu0 0
        %1431 = vmatpush1.bf16.msra.mxu0 %v1415
        %1432 = vmatprep.subr.bf16.mxu0 0
        %1433 = vmatpush1.bf16.msra.mxu0 %v1416
        %1434 = vmatprep.subr.bf16.mxu0 0
        %1435 = vmatpush1.bf16.msra.mxu0 %v1417
        %1436 = vmatprep.subr.bf16.mxu0 0
        %1437 = vmatpush1.bf16.msra.mxu0 %v1418
        %1438 = vmatprep.subr.bf16.mxu0 0
        %1439 = vmatpush1.bf16.msra.mxu0 %v1419
        %1440 = vmatprep.subr.bf16.mxu0 0
        %1441 = vmatpush1.bf16.msra.mxu0 %v1420
        %1442 = vmatprep.subr.bf16.mxu0 0
        %1443 = vmatpush1.bf16.msra.mxu0 0
        %1444 = vmatprep.subr.bf16.mxu0 0
        %1445 = vmatpush1.bf16.msra.mxu0 0
        %1446 = vmatprep.subr.bf16.mxu0 0
        %1447 = vmatpush1.bf16.msra.mxu0 0
        %1448 = vmatprep.subr.bf16.mxu0 0
        %1449 = vmatpush1.bf16.msra.mxu0 0
        %1450 = vmatprep.subr.bf16.mxu0 0
        %1451 = vmatpush1.bf16.msra.mxu0 0
        %1452 = vmatprep.subr.bf16.mxu0 0
        %1453 = vmatpush1.bf16.msra.mxu0 0
        %1454 = vmatprep.subr.bf16.mxu0 0
        %1455 = vmatpush1.bf16.msra.mxu0 0
        %1456 = vmatprep.subr.bf16.mxu0 0
        %1457 = vmatpush1.bf16.msra.mxu0 0
        %1458 = vmatprep.subr.bf16.mxu0 0
        %1459 = vmatpush1.bf16.msra.mxu0 0
        %1460 = vmatprep.subr.bf16.mxu0 0
        %1461 = vmatpush1.bf16.msra.mxu0 0
        %1462 = vmatprep.mubr.bf16.mxu0 0
        %1463 = vmatmul.mubr.bf16.gmra.mrb[0].mxu0 %v1304
        %v1464 = vpop.f32.mrb[0].mxu0
        %v1465 = vadd.f32 0.0, %v1464
        %v1466 = vpop.f32.mrb[0].mxu0
        %v1467 = vpop.f32.mrb[0].mxu0
        %v1468 = vadd.f32 0.0, %v1467
        %v1469 = vpop.f32.mrb[0].mxu0
        %1470 = vmatprep.mubr.bf16.mxu0 0
        %1471 = vmatmul.mubr.bf16.gmra.mrb[0].mxu0 %v1307
        %v1472 = vpop.f32.mrb[0].mxu0
        %v1473 = vadd.f32 0.0, %v1472
        %v1474 = vpop.f32.mrb[0].mxu0
        %v1475 = vpop.f32.mrb[0].mxu0
        %v1476 = vadd.f32 0.0, %v1475
        %v1477 = vpop.f32.mrb[0].mxu0
        %1478 = vmatprep.mubr.bf16.mxu0 0
        %1479 = vmatmul.mubr.bf16.gmra.mrb[0].mxu0 %v1310
        %v1480 = vpop.f32.mrb[0].mxu0
        %v1481 = vadd.f32 0.0, %v1480
        %v1482 = vpop.f32.mrb[0].mxu0
        %v1483 = vpop.f32.mrb[0].mxu0
        %v1484 = vadd.f32 0.0, %v1483
        %v1485 = vpop.f32.mrb[0].mxu0
        %1486 = vmatprep.mubr.bf16.mxu0 0
        %1487 = vmatmul.mubr.bf16.gmra.mrb[0].mxu0 %v1428
        %v1488 = vpop.f32.mrb[0].mxu0
        %v1489 = vadd.f32 0.0, %v1488
        %v1490 = vpop.f32.mrb[0].mxu0
        %v1491 = vpop.f32.mrb[0].mxu0
        %v1492 = vadd.f32 0.0, %v1491
        %v1493 = vpop.f32.mrb[0].mxu0
        %1494 = vdwg.mxu0
        %v1495 = vadd.f32 %v1347, %v1465
        %v1496 = vadd.f32 %v1350, %v1468
        %v1497 = vadd.f32 %v1355, %v1473
        %v1498 = vadd.f32 %v1358, %v1476
        %v1499 = vadd.f32 %v1363, %v1481
        %v1500 = vadd.f32 %v1366, %v1484
        %v1501 = vadd.f32 %v1371, %v1489
        %v1502 = vadd.f32 %v1374, %v1492
        %v1504 = vlaneseq
        %v1505 = vshrl.u32 %v1504, 7
        %v1506 = vsub.s32 0, %v1505
        %v1507 = vrot.slane %v949, %v1506
        %v1509 = vadd.f32 %v1495, %v1507
        %v1510 = vadd.f32 %v1496, %v1507
        %v1511 = vadd.f32 %v1497, %v1507
        %v1512 = vadd.f32 %v1498, %v1507
        %v1513 = vadd.f32 %v1499, %v1507
        %v1514 = vadd.f32 %v1500, %v1507
        %v1515 = vadd.f32 %v1501, %v1507
        %v1516 = vadd.f32 %v1502, %v1507
        %v1517 = vld [vmem:[%s7] sm:$0x1]
        %v1518 = vld [vmem:[%s8] sm:$0x1]
        %v1519 = vld [vmem:[%s9] sm:$0xff]
        %v1520 = vld [vmem:[%s9 + $0x8] sm:$0xff]
        %v1521 = vld [vmem:[%s9 + $0x10] sm:$0xff]
        %v1522 = vld [vmem:[%s9 + $0x18] sm:$0xff]
        %v1523 = vld [vmem:[%s9 + $0x20] sm:$0xff]
        %v1524 = vld [vmem:[%s9 + $0x28] sm:$0xff]
        %v1525 = vld [vmem:[%s9 + $0x30] sm:$0xff]
        %v1526 = vld [vmem:[%s9 + $0x38] sm:$0xff]
        %v1527 = vld [vmem:[%s10] sm:$0xff]
        %v1528 = vld [vmem:[%s10 + $0x8] sm:$0xff]
        %v1529 = vld [vmem:[%s10 + $0x10] sm:$0xff]
        %v1530 = vld [vmem:[%s10 + $0x18] sm:$0xff]
        %v1531 = vsel %vm1106, %v1509, 0.0
        %v1532 = vsel %vm1106, %v1510, 0.0
        %v1533 = vadd.f32 %v1531, %v1532
        %v1534 = vsel %vm1106, %v1511, 0.0
        %v1535 = vadd.f32 %v1533, %v1534
        %v1536 = vsel %vm1106, %v1512, 0.0
        %v1537 = vadd.f32 %v1535, %v1536
        %v1538 = vsel %vm1106, %v1513, 0.0
        %v1539 = vadd.f32 %v1537, %v1538
        %v1540 = vsel %vm1106, %v1514, 0.0
        %v1541 = vadd.f32 %v1539, %v1540
        %v1542 = vsel %vm1106, %v1515, 0.0
        %v1543 = vadd.f32 %v1541, %v1542
        %v1544 = vsel %vm1106, %v1516, 0.0
        %v1545 = vadd.f32 %v1543, %v1544
        %v1546 = vsel %vm1106, %v1545, 0.0
        %v1547 = vrot.slane %v1546, 4
        %v1548 = vadd.f32 %v1546, %v1547
        %v1549 = vrot.slane %v1548, 2
        %v1550 = vadd.f32 %v1548, %v1549
        %v1551 = vrot.slane %v1550, 1
        %v1552 = vadd.f32 %v1550, %v1551
        %v1553 = vmul.f32 %v1509, %v1509
        %v1554 = vmul.f32 %v1510, %v1510
        %v1555 = vmul.f32 %v1511, %v1511
        %v1556 = vmul.f32 %v1512, %v1512
        %v1557 = vmul.f32 %v1513, %v1513
        %v1558 = vmul.f32 %v1514, %v1514
        %v1559 = vmul.f32 %v1515, %v1515
        %v1560 = vmul.f32 %v1516, %v1516
        %v1561 = vsel %vm1106, %v1553, 0.0
        %v1562 = vsel %vm1106, %v1554, 0.0
        %v1563 = vadd.f32 %v1561, %v1562
        %v1564 = vsel %vm1106, %v1555, 0.0
        %v1565 = vadd.f32 %v1563, %v1564
        %v1566 = vsel %vm1106, %v1556, 0.0
        %v1567 = vadd.f32 %v1565, %v1566
        %v1568 = vsel %vm1106, %v1557, 0.0
        %v1569 = vadd.f32 %v1567, %v1568
        %v1570 = vsel %vm1106, %v1558, 0.0
        %v1571 = vadd.f32 %v1569, %v1570
        %v1572 = vsel %vm1106, %v1559, 0.0
        %v1573 = vadd.f32 %v1571, %v1572
        %v1574 = vsel %vm1106, %v1560, 0.0
        %v1575 = vadd.f32 %v1573, %v1574
        %v1576 = vsel %vm1106, %v1575, 0.0
        %v1577 = vrot.slane %v1576, 4
        %v1578 = vadd.f32 %v1576, %v1577
        %v1579 = vrot.slane %v1578, 2
        %v1580 = vadd.f32 %v1578, %v1579
        %v1581 = vrot.slane %v1580, 1
        %v1582 = vadd.f32 %v1580, %v1581
        %v1584 = vsel %vm1106, %v1552, 0
        %1586 = vmatprep.subr.mxu0 0.0
        %1587 = vmatpush1.msra.mxu0 %v1519
        %1588 = vmatprep.subr.mxu0 0.0
        %1589 = vmatpush1.msra.mxu0 %v1520
        %1590 = vmatprep.subr.mxu0 0.0
        %1591 = vmatpush1.msra.mxu0 %v1521
        %1592 = vmatprep.subr.mxu0 0.0
        %1593 = vmatpush1.msra.mxu0 %v1522
        %1594 = vmatprep.subr.mxu0 0.0
        %1595 = vmatpush1.msra.mxu0 %v1523
        %1596 = vmatprep.subr.mxu0 0.0
        %1597 = vmatpush1.msra.mxu0 %v1524
        %1598 = vmatprep.subr.mxu0 0.0
        %1599 = vmatpush1.msra.mxu0 %v1525
        %1600 = vmatprep.subr.mxu0 0.0
        %1601 = vmatpush1.msra.mxu0 %v1526
        %1602 = vmatprep.subr.mxu0 0.0
        %1603 = vmatpush1.msra.mxu0 0.0
        %1604 = vmatprep.subr.mxu0 0.0
        %1605 = vmatpush1.msra.mxu0 0.0
        %1606 = vmatprep.subr.mxu0 0.0
        %1607 = vmatpush1.msra.mxu0 0.0
        %1608 = vmatprep.subr.mxu0 0.0
        %1609 = vmatpush1.msra.mxu0 0.0
        %1610 = vmatprep.subr.mxu0 0.0
        %1611 = vmatpush1.msra.mxu0 0.0
        %1612 = vmatprep.subr.mxu0 0.0
        %1613 = vmatpush1.msra.mxu0 0.0
        %1614 = vmatprep.subr.mxu0 0.0
        %1615 = vmatpush1.msra.mxu0 0.0
        %1616 = vmatprep.subr.mxu0 0.0
        %1617 = vmatpush1.msra.mxu0 0.0
        %1618 = vmatprep.subr.mxu0 0.0
        %1619 = vmatpush1.msra.mxu0 0.0
        %1620 = vmatprep.subr.mxu0 0.0
        %1621 = vmatpush1.msra.mxu0 0.0
        %1622 = vmatprep.subr.mxu0 0.0
        %1623 = vmatpush1.msra.mxu0 0.0
        %1624 = vmatprep.subr.mxu0 0.0
        %1625 = vmatpush1.msra.mxu0 0.0
        %1626 = vmatprep.subr.mxu0 0.0
        %1627 = vmatpush1.msra.mxu0 0.0
        %1628 = vmatprep.subr.mxu0 0.0
        %1629 = vmatpush1.msra.mxu0 0.0
        %1630 = vmatprep.subr.mxu0 0.0
        %1631 = vmatpush1.msra.mxu0 0.0
        %1632 = vmatprep.subr.mxu0 0.0
        %1633 = vmatpush1.msra.mxu0 0.0
        %1634 = vmatprep.subr.mxu0 0.0
        %1635 = vmatpush1.msra.mxu0 0.0
        %1636 = vmatprep.subr.mxu0 0.0
        %1637 = vmatpush1.msra.mxu0 0.0
        %1638 = vmatprep.subr.mxu0 0.0
        %1639 = vmatpush1.msra.mxu0 0.0
        %1640 = vmatprep.subr.mxu0 0.0
        %1641 = vmatpush1.msra.mxu0 0.0
        %1642 = vmatprep.subr.mxu0 0.0
        %1643 = vmatpush1.msra.mxu0 0.0
        %1644 = vmatprep.subr.mxu0 0.0
        %1645 = vmatpush1.msra.mxu0 0.0
        %1646 = vmatprep.subr.mxu0 0.0
        %1647 = vmatpush1.msra.mxu0 0.0
        %1648 = vmatprep.subr.mxu0 0.0
        %1649 = vmatpush1.msra.mxu0 0.0
        %1650 = vmatprep.mubr.f32.mxu0 0.0
        %1651 = vmatmul.mubr.f32.gmra.mrb[0].mxu0 %v1584
        %v1652 = vpop.f32.mrb[0].mxu0
        %v1653 = vadd.f32 0.0, %v1652
        %v1654 = vpop.f32.mrb[0].mxu0
        %1655 = vdwg.mxu0
        %v1656 = vmul.f32 %v1653, 0.0078125
        %v1658 = vsel %vm1106, %v1582, 0
        %1660 = vmatprep.subr.mxu0 0.0
        %1661 = vmatpush1.msra.mxu0 %v1519
        %1662 = vmatprep.subr.mxu0 0.0
        %1663 = vmatpush1.msra.mxu0 %v1520
        %1664 = vmatprep.subr.mxu0 0.0
        %1665 = vmatpush1.msra.mxu0 %v1521
        %1666 = vmatprep.subr.mxu0 0.0
        %1667 = vmatpush1.msra.mxu0 %v1522
        %1668 = vmatprep.subr.mxu0 0.0
        %1669 = vmatpush1.msra.mxu0 %v1523
        %1670 = vmatprep.subr.mxu0 0.0
        %1671 = vmatpush1.msra.mxu0 %v1524
        %1672 = vmatprep.subr.mxu0 0.0
        %1673 = vmatpush1.msra.mxu0 %v1525
        %1674 = vmatprep.subr.mxu0 0.0
        %1675 = vmatpush1.msra.mxu0 %v1526
        %1676 = vmatprep.subr.mxu0 0.0
        %1677 = vmatpush1.msra.mxu0 0.0
        %1678 = vmatprep.subr.mxu0 0.0
        %1679 = vmatpush1.msra.mxu0 0.0
        %1680 = vmatprep.subr.mxu0 0.0
        %1681 = vmatpush1.msra.mxu0 0.0
        %1682 = vmatprep.subr.mxu0 0.0
        %1683 = vmatpush1.msra.mxu0 0.0
        %1684 = vmatprep.subr.mxu0 0.0
        %1685 = vmatpush1.msra.mxu0 0.0
        %1686 = vmatprep.subr.mxu0 0.0
        %1687 = vmatpush1.msra.mxu0 0.0
        %1688 = vmatprep.subr.mxu0 0.0
        %1689 = vmatpush1.msra.mxu0 0.0
        %1690 = vmatprep.subr.mxu0 0.0
        %1691 = vmatpush1.msra.mxu0 0.0
        %1692 = vmatprep.subr.mxu0 0.0
        %1693 = vmatpush1.msra.mxu0 0.0
        %1694 = vmatprep.subr.mxu0 0.0
        %1695 = vmatpush1.msra.mxu0 0.0
        %1696 = vmatprep.subr.mxu0 0.0
        %1697 = vmatpush1.msra.mxu0 0.0
        %1698 = vmatprep.subr.mxu0 0.0
        %1699 = vmatpush1.msra.mxu0 0.0
        %1700 = vmatprep.subr.mxu0 0.0
        %1701 = vmatpush1.msra.mxu0 0.0
        %1702 = vmatprep.subr.mxu0 0.0
        %1703 = vmatpush1.msra.mxu0 0.0
        %1704 = vmatprep.subr.mxu0 0.0
        %1705 = vmatpush1.msra.mxu0 0.0
        %1706 = vmatprep.subr.mxu0 0.0
        %1707 = vmatpush1.msra.mxu0 0.0
        %1708 = vmatprep.subr.mxu0 0.0
        %1709 = vmatpush1.msra.mxu0 0.0
        %1710 = vmatprep.subr.mxu0 0.0
        %1711 = vmatpush1.msra.mxu0 0.0
        %1712 = vmatprep.subr.mxu0 0.0
        %1713 = vmatpush1.msra.mxu0 0.0
        %1714 = vmatprep.subr.mxu0 0.0
        %1715 = vmatpush1.msra.mxu0 0.0
        %1716 = vmatprep.subr.mxu0 0.0
        %1717 = vmatpush1.msra.mxu0 0.0
        %1718 = vmatprep.subr.mxu0 0.0
        %1719 = vmatpush1.msra.mxu0 0.0
        %1720 = vmatprep.subr.mxu0 0.0
        %1721 = vmatpush1.msra.mxu0 0.0
        %1722 = vmatprep.subr.mxu0 0.0
        %1723 = vmatpush1.msra.mxu0 0.0
        %1724 = vmatprep.mubr.f32.mxu0 0.0
        %1725 = vmatmul.mubr.f32.gmra.mrb[0].mxu0 %v1658
        %v1726 = vpop.f32.mrb[0].mxu0
        %v1727 = vadd.f32 0.0, %v1726
        %v1728 = vpop.f32.mrb[0].mxu0
        %1729 = vdwg.mxu0
        %v1730 = vmul.f32 %v1727, 0.0078125
        %v1731 = vmul.f32 %v1656, %v1656
        %v1732 = vsub.f32 %v1730, %v1731
        %v1733 = vmax.f32 %v1732, 0.0
        %v1734 = vadd.f32 %v1733, 1e-05
        %v1735 = vrsqrt.pop %v1734
        %v1737 = vsel %vm512, %v1656, 0
        %1739 = vmatprep.subr.mxu0 0.0
        %1740 = vmatpush1.msra.mxu0 %v1527
        %1741 = vmatprep.subr.mxu0 0.0
        %1742 = vmatpush1.msra.mxu0 %v1528
        %1743 = vmatprep.subr.mxu0 0.0
        %1744 = vmatpush1.msra.mxu0 %v1529
        %1745 = vmatprep.subr.mxu0 0.0
        %1746 = vmatpush1.msra.mxu0 %v1530
        %1747 = vmatprep.subr.mxu0 0.0
        %1748 = vmatpush1.msra.mxu0 0.0
        %1749 = vmatprep.subr.mxu0 0.0
        %1750 = vmatpush1.msra.mxu0 0.0
        %1751 = vmatprep.subr.mxu0 0.0
        %1752 = vmatpush1.msra.mxu0 0.0
        %1753 = vmatprep.subr.mxu0 0.0
        %1754 = vmatpush1.msra.mxu0 0.0
        %1755 = vmatprep.subr.mxu0 0.0
        %1756 = vmatpush1.msra.mxu0 0.0
        %1757 = vmatprep.subr.mxu0 0.0
        %1758 = vmatpush1.msra.mxu0 0.0
        %1759 = vmatprep.subr.mxu0 0.0
        %1760 = vmatpush1.msra.mxu0 0.0
        %1761 = vmatprep.subr.mxu0 0.0
        %1762 = vmatpush1.msra.mxu0 0.0
        %1763 = vmatprep.subr.mxu0 0.0
        %1764 = vmatpush1.msra.mxu0 0.0
        %1765 = vmatprep.subr.mxu0 0.0
        %1766 = vmatpush1.msra.mxu0 0.0
        %1767 = vmatprep.subr.mxu0 0.0
        %1768 = vmatpush1.msra.mxu0 0.0
        %1769 = vmatprep.subr.mxu0 0.0
        %1770 = vmatpush1.msra.mxu0 0.0
        %1771 = vmatprep.subr.mxu0 0.0
        %1772 = vmatpush1.msra.mxu0 0.0
        %1773 = vmatprep.subr.mxu0 0.0
        %1774 = vmatpush1.msra.mxu0 0.0
        %1775 = vmatprep.subr.mxu0 0.0
        %1776 = vmatpush1.msra.mxu0 0.0
        %1777 = vmatprep.subr.mxu0 0.0
        %1778 = vmatpush1.msra.mxu0 0.0
        %1779 = vmatprep.subr.mxu0 0.0
        %1780 = vmatpush1.msra.mxu0 0.0
        %1781 = vmatprep.subr.mxu0 0.0
        %1782 = vmatpush1.msra.mxu0 0.0
        %1783 = vmatprep.subr.mxu0 0.0
        %1784 = vmatpush1.msra.mxu0 0.0
        %1785 = vmatprep.subr.mxu0 0.0
        %1786 = vmatpush1.msra.mxu0 0.0
        %1787 = vmatprep.subr.mxu0 0.0
        %1788 = vmatpush1.msra.mxu0 0.0
        %1789 = vmatprep.subr.mxu0 0.0
        %1790 = vmatpush1.msra.mxu0 0.0
        %1791 = vmatprep.subr.mxu0 0.0
        %1792 = vmatpush1.msra.mxu0 0.0
        %1793 = vmatprep.subr.mxu0 0.0
        %1794 = vmatpush1.msra.mxu0 0.0
        %1795 = vmatprep.subr.mxu0 0.0
        %1796 = vmatpush1.msra.mxu0 0.0
        %1797 = vmatprep.subr.mxu0 0.0
        %1798 = vmatpush1.msra.mxu0 0.0
        %1799 = vmatprep.subr.mxu0 0.0
        %1800 = vmatpush1.msra.mxu0 0.0
        %1801 = vmatprep.subr.mxu0 0.0
        %1802 = vmatpush1.msra.mxu0 0.0
        %1803 = vmatprep.mubr.f32.mxu0 0.0
        %1804 = vmatmul.mubr.f32.gmra.mrb[0].mxu0 %v1737
        %v1805 = vpop.f32.mrb[0].mxu0
        %v1806 = vadd.f32 0.0, %v1805
        %v1807 = vpop.f32.mrb[0].mxu0
        %1808 = vdwg.mxu0
        %v1810 = vsel %vm512, %v1735, 0
        %1812 = vmatprep.subr.mxu0 0.0
        %1813 = vmatpush1.msra.mxu0 %v1527
        %1814 = vmatprep.subr.mxu0 0.0
        %1815 = vmatpush1.msra.mxu0 %v1528
        %1816 = vmatprep.subr.mxu0 0.0
        %1817 = vmatpush1.msra.mxu0 %v1529
        %1818 = vmatprep.subr.mxu0 0.0
        %1819 = vmatpush1.msra.mxu0 %v1530
        %1820 = vmatprep.subr.mxu0 0.0
        %1821 = vmatpush1.msra.mxu0 0.0
        %1822 = vmatprep.subr.mxu0 0.0
        %1823 = vmatpush1.msra.mxu0 0.0
        %1824 = vmatprep.subr.mxu0 0.0
        %1825 = vmatpush1.msra.mxu0 0.0
        %1826 = vmatprep.subr.mxu0 0.0
        %1827 = vmatpush1.msra.mxu0 0.0
        %1828 = vmatprep.subr.mxu0 0.0
        %1829 = vmatpush1.msra.mxu0 0.0
        %1830 = vmatprep.subr.mxu0 0.0
        %1831 = vmatpush1.msra.mxu0 0.0
        %1832 = vmatprep.subr.mxu0 0.0
        %1833 = vmatpush1.msra.mxu0 0.0
        %1834 = vmatprep.subr.mxu0 0.0
        %1835 = vmatpush1.msra.mxu0 0.0
        %1836 = vmatprep.subr.mxu0 0.0
        %1837 = vmatpush1.msra.mxu0 0.0
        %1838 = vmatprep.subr.mxu0 0.0
        %1839 = vmatpush1.msra.mxu0 0.0
        %1840 = vmatprep.subr.mxu0 0.0
        %1841 = vmatpush1.msra.mxu0 0.0
        %1842 = vmatprep.subr.mxu0 0.0
        %1843 = vmatpush1.msra.mxu0 0.0
        %1844 = vmatprep.subr.mxu0 0.0
        %1845 = vmatpush1.msra.mxu0 0.0
        %1846 = vmatprep.subr.mxu0 0.0
        %1847 = vmatpush1.msra.mxu0 0.0
        %1848 = vmatprep.subr.mxu0 0.0
        %1849 = vmatpush1.msra.mxu0 0.0
        %1850 = vmatprep.subr.mxu0 0.0
        %1851 = vmatpush1.msra.mxu0 0.0
        %1852 = vmatprep.subr.mxu0 0.0
        %1853 = vmatpush1.msra.mxu0 0.0
        %1854 = vmatprep.subr.mxu0 0.0
        %1855 = vmatpush1.msra.mxu0 0.0
        %1856 = vmatprep.subr.mxu0 0.0
        %1857 = vmatpush1.msra.mxu0 0.0
        %1858 = vmatprep.subr.mxu0 0.0
        %1859 = vmatpush1.msra.mxu0 0.0
        %1860 = vmatprep.subr.mxu0 0.0
        %1861 = vmatpush1.msra.mxu0 0.0
        %1862 = vmatprep.subr.mxu0 0.0
        %1863 = vmatpush1.msra.mxu0 0.0
        %1864 = vmatprep.subr.mxu0 0.0
        %1865 = vmatpush1.msra.mxu0 0.0
        %1866 = vmatprep.subr.mxu0 0.0
        %1867 = vmatpush1.msra.mxu0 0.0
        %1868 = vmatprep.subr.mxu0 0.0
        %1869 = vmatpush1.msra.mxu0 0.0
        %1870 = vmatprep.subr.mxu0 0.0
        %1871 = vmatpush1.msra.mxu0 0.0
        %1872 = vmatprep.subr.mxu0 0.0
        %1873 = vmatpush1.msra.mxu0 0.0
        %1874 = vmatprep.subr.mxu0 0.0
        %1875 = vmatpush1.msra.mxu0 0.0
        %1876 = vmatprep.mubr.f32.mxu0 0.0
        %1877 = vmatmul.mubr.f32.gmra.mrb[0].mxu0 %v1810
        %v1878 = vpop.f32.mrb[0].mxu0
        %v1879 = vadd.f32 0.0, %v1878
        %v1880 = vpop.f32.mrb[0].mxu0
        %1881 = vdwg.mxu0
        %v1882 = vmul.f32 %v1879, %v1517
        %v1883 = vmul.f32 %v1806, %v1882
        %v1884 = vsub.f32 %v1518, %v1883
        %v1885 = vlaneseq
        %v1886 = vshrl.u32 %v1885, 7
        %v1887 = vsub.s32 0, %v1886
        %v1888 = vrot.slane %v1882, %v1887
        %v1889 = vmul.f32 %v1509, %v1888
        %v1890 = vmul.f32 %v1510, %v1888
        %v1891 = vmul.f32 %v1511, %v1888
        %v1892 = vmul.f32 %v1512, %v1888
        %v1893 = vmul.f32 %v1513, %v1888
        %v1894 = vmul.f32 %v1514, %v1888
        %v1895 = vmul.f32 %v1515, %v1888
        %v1896 = vmul.f32 %v1516, %v1888
        %v1898 = vlaneseq
        %v1899 = vshrl.u32 %v1898, 7
        %v1900 = vsub.s32 0, %v1899
        %v1901 = vrot.slane %v1884, %v1900
        %v1903 = vadd.f32 %v1889, %v1901
        %v1904 = vadd.f32 %v1890, %v1901
        %v1905 = vadd.f32 %v1891, %v1901
        %v1906 = vadd.f32 %v1892, %v1901
        %v1907 = vadd.f32 %v1893, %v1901
        %v1908 = vadd.f32 %v1894, %v1901
        %v1909 = vadd.f32 %v1895, %v1901
        %v1910 = vadd.f32 %v1896, %v1901
        %v1911 = vxor.u32 %v1903, 2147483648
        %v1912 = vxor.u32 %v1904, 2147483648
        %v1913 = vxor.u32 %v1905, 2147483648
        %v1914 = vxor.u32 %v1906, 2147483648
        %v1915 = vxor.u32 %v1907, 2147483648
        %v1916 = vxor.u32 %v1908, 2147483648
        %v1917 = vxor.u32 %v1909, 2147483648
        %v1918 = vxor.u32 %v1910, 2147483648
        %v1919 = vmul.f32 %v1911, 1.442695
        %v1920 = vpow.pop %v1919
        %v1921 = vmul.f32 %v1912, 1.442695
        %v1922 = vpow.pop %v1921
        %v1923 = vmul.f32 %v1913, 1.442695
        %v1924 = vpow.pop %v1923
        %v1925 = vmul.f32 %v1914, 1.442695
        %v1926 = vpow.pop %v1925
        %v1927 = vmul.f32 %v1915, 1.442695
        %v1928 = vpow.pop %v1927
        %v1929 = vmul.f32 %v1916, 1.442695
        %v1930 = vpow.pop %v1929
        %v1931 = vmul.f32 %v1917, 1.442695
        %v1932 = vpow.pop %v1931
        %v1933 = vmul.f32 %v1918, 1.442695
        %v1934 = vpow.pop %v1933
        %v1935 = vadd.f32 %v1920, 1.0
        %v1936 = vadd.f32 %v1922, 1.0
        %v1937 = vadd.f32 %v1924, 1.0
        %v1938 = vadd.f32 %v1926, 1.0
        %v1939 = vadd.f32 %v1928, 1.0
        %v1940 = vadd.f32 %v1930, 1.0
        %v1941 = vadd.f32 %v1932, 1.0
        %v1942 = vadd.f32 %v1934, 1.0
        %v1943 = vrcp.pop %v1935
        %v1944 = vmul.f32 1.0, %v1943
        %v1945 = vrcp.pop %v1936
        %v1946 = vmul.f32 1.0, %v1945
        %v1947 = vrcp.pop %v1937
        %v1948 = vmul.f32 1.0, %v1947
        %v1949 = vrcp.pop %v1938
        %v1950 = vmul.f32 1.0, %v1949
        %v1951 = vrcp.pop %v1939
        %v1952 = vmul.f32 1.0, %v1951
        %v1953 = vrcp.pop %v1940
        %v1954 = vmul.f32 1.0, %v1953
        %v1955 = vrcp.pop %v1941
        %v1956 = vmul.f32 1.0, %v1955
        %v1957 = vrcp.pop %v1942
        %v1958 = vmul.f32 1.0, %v1957
        %v1959 = vmul.f32 %v1903, %v1944
        %v1960 = vmul.f32 %v1904, %v1946
        %v1961 = vmul.f32 %v1905, %v1948
        %v1962 = vmul.f32 %v1906, %v1950
        %v1963 = vmul.f32 %v1907, %v1952
        %v1964 = vmul.f32 %v1908, %v1954
        %v1965 = vmul.f32 %v1909, %v1956
        %v1966 = vmul.f32 %v1910, %v1958
        %v1967 = vld [vmem:[%s12] sm:$0x1]
        %1968 = vst.msk [vmem:[#allocation3] sm:$0xff] %vm1106, 0.0
        %vm1969 = vcmask 517120
        %1970 = vst.msk [vmem:[#allocation3 + $0x8] sm:$0x3] %vm1969, 0.0
        %s1971 = scalar_lea.vmem [#allocation3], 144
        %1972 = vst.msk [vmem:[%s1971] sm:$0xff] %vm1106, 0.0
        %1973 = vst.msk [vmem:[%s1971 + $0x8] sm:$0x3] %vm1969, 0.0
        %vm1974 = vcmask 516096
        %1975 = vst.msk [vmem:[#allocation3] sm:$0x1] %vm1974, 0.0
        %1976 = vst.msk [vmem:[#allocation3 + $0x10] sm:$0x1] %vm1974, 0.0
        %1977 = vst.msk [vmem:[#allocation3 + $0x20] sm:$0x1] %vm1974, 0.0
        %1978 = vst.msk [vmem:[#allocation3 + $0x30] sm:$0x1] %vm1974, 0.0
        %1979 = vst.msk [vmem:[#allocation3 + $0x40] sm:$0x1] %vm1974, 0.0
        %1980 = vst.msk [vmem:[#allocation3 + $0x50] sm:$0x1] %vm1974, 0.0
        %1981 = vst.msk [vmem:[#allocation3 + $0x60] sm:$0x1] %vm1974, 0.0
        %1982 = vst.msk [vmem:[#allocation3 + $0x70] sm:$0x1] %vm1974, 0.0
        %1983 = vst.msk [vmem:[#allocation3 + $0x80] sm:$0x1] %vm1974, 0.0
        %1984 = vst.msk [vmem:[#allocation3 + $0x90] sm:$0x1] %vm1974, 0.0
        %1985 = vst.msk [vmem:[#allocation3 + $0x9] sm:$0x1] %vm1974, 0.0
        %1986 = vst.msk [vmem:[#allocation3 + $0x19] sm:$0x1] %vm1974, 0.0
        %1987 = vst.msk [vmem:[#allocation3 + $0x29] sm:$0x1] %vm1974, 0.0
        %1988 = vst.msk [vmem:[#allocation3 + $0x39] sm:$0x1] %vm1974, 0.0
        %1989 = vst.msk [vmem:[#allocation3 + $0x49] sm:$0x1] %vm1974, 0.0
        %1990 = vst.msk [vmem:[#allocation3 + $0x59] sm:$0x1] %vm1974, 0.0
        %1991 = vst.msk [vmem:[#allocation3 + $0x69] sm:$0x1] %vm1974, 0.0
        %1992 = vst.msk [vmem:[#allocation3 + $0x79] sm:$0x1] %vm1974, 0.0
        %1993 = vst.msk [vmem:[#allocation3 + $0x89] sm:$0x1] %vm1974, 0.0
        %1994 = vst.msk [vmem:[#allocation3 + $0x99] sm:$0x1] %vm1974, 0.0
        %s1995 = scalar_lea.vmem [#allocation3], 16
        %1996 = vst.msk [vmem:[%s1995 + $0x1] sm:$0xff] %vm1106, %v1959
        %1997 = vst.msk [vmem:[%s1995 + $0x11] sm:$0xff] %vm1106, %v1960
        %1998 = vst.msk [vmem:[%s1995 + $0x21] sm:$0xff] %vm1106, %v1961
        %1999 = vst.msk [vmem:[%s1995 + $0x31] sm:$0xff] %vm1106, %v1962
        %2000 = vst.msk [vmem:[%s1995 + $0x41] sm:$0xff] %vm1106, %v1963
        %2001 = vst.msk [vmem:[%s1995 + $0x51] sm:$0xff] %vm1106, %v1964
        %2002 = vst.msk [vmem:[%s1995 + $0x61] sm:$0xff] %vm1106, %v1965
        %2003 = vst.msk [vmem:[%s1995 + $0x71] sm:$0xff] %vm1106, %v1966
        %v2004 = vld [vmem:[#allocation3] sm:$0xff]
        %v2005 = vld [vmem:[#allocation3 + $0x10] sm:$0xff]
        %v2006 = vld [vmem:[#allocation3 + $0x20] sm:$0xff]
        %v2007 = vld [vmem:[#allocation3 + $0x30] sm:$0xff]
        %v2008 = vld [vmem:[#allocation3 + $0x40] sm:$0xff]
        %v2009 = vld [vmem:[#allocation3 + $0x50] sm:$0xff]
        %v2010 = vld [vmem:[#allocation3 + $0x60] sm:$0xff]
        %v2011 = vld [vmem:[#allocation3 + $0x70] sm:$0xff]
        %v2012 = vld [vmem:[#allocation3 + $0x80] sm:$0xff]
        %v2013 = vld [vmem:[#allocation3 + $0x90] sm:$0xff]
        %v2014 = vld [vmem:[#allocation3 + $0x1] sm:$0xff]
        %v2015 = vld [vmem:[#allocation3 + $0x11] sm:$0xff]
        %v2016 = vld [vmem:[#allocation3 + $0x21] sm:$0xff]
        %v2017 = vld [vmem:[#allocation3 + $0x31] sm:$0xff]
        %v2018 = vld [vmem:[#allocation3 + $0x41] sm:$0xff]
        %v2019 = vld [vmem:[#allocation3 + $0x51] sm:$0xff]
        %v2020 = vld [vmem:[#allocation3 + $0x61] sm:$0xff]
        %v2021 = vld [vmem:[#allocation3 + $0x71] sm:$0xff]
        %v2022 = vld [vmem:[#allocation3 + $0x81] sm:$0xff]
        %v2023 = vld [vmem:[#allocation3 + $0x91] sm:$0xff]
        %v2024 = vld [vmem:[#allocation3 + $0x2] sm:$0xff]
        %v2025 = vld [vmem:[#allocation3 + $0x12] sm:$0xff]
        %v2026 = vld [vmem:[#allocation3 + $0x22] sm:$0xff]
        %v2027 = vld [vmem:[#allocation3 + $0x32] sm:$0xff]
        %v2028 = vld [vmem:[#allocation3 + $0x42] sm:$0xff]
        %v2029 = vld [vmem:[#allocation3 + $0x52] sm:$0xff]
        %v2030 = vld [vmem:[#allocation3 + $0x62] sm:$0xff]
        %v2031 = vld [vmem:[#allocation3 + $0x72] sm:$0xff]
        %v2032 = vld [vmem:[#allocation3 + $0x82] sm:$0xff]
        %v2033 = vld [vmem:[#allocation3 + $0x92] sm:$0xff]
        %2044 = vrot.lane.b32.xlu0 %v2014, 64
        %v2045 = vpop.permute.xlu0 %2044
        %2046 = vrot.lane.b32.xlu0 %v2015, 64
        %v2047 = vpop.permute.xlu0 %2046
        %2048 = vrot.lane.b32.xlu0 %v2016, 64
        %v2049 = vpop.permute.xlu0 %2048
        %2050 = vrot.lane.b32.xlu0 %v2017, 64
        %v2051 = vpop.permute.xlu0 %2050
        %2052 = vrot.lane.b32.xlu0 %v2018, 64
        %v2053 = vpop.permute.xlu0 %2052
        %2054 = vrot.lane.b32.xlu0 %v2019, 64
        %v2055 = vpop.permute.xlu0 %2054
        %2056 = vrot.lane.b32.xlu0 %v2020, 64
        %v2057 = vpop.permute.xlu0 %2056
        %2058 = vrot.lane.b32.xlu0 %v2021, 64
        %v2059 = vpop.permute.xlu0 %2058
        %2060 = vrot.lane.b32.xlu0 %v2022, 64
        %v2061 = vpop.permute.xlu0 %2060
        %2062 = vrot.lane.b32.xlu0 %v2023, 64
        %v2063 = vpop.permute.xlu0 %2062
        %v2074 = vsel %vm1106, %v2004, %v2045
        %v2075 = vsel %vm1106, %v2005, %v2047
        %v2076 = vsel %vm1106, %v2006, %v2049
        %v2077 = vsel %vm1106, %v2007, %v2051
        %v2078 = vsel %vm1106, %v2008, %v2053
        %v2079 = vsel %vm1106, %v2009, %v2055
        %v2080 = vsel %vm1106, %v2010, %v2057
        %v2081 = vsel %vm1106, %v2011, %v2059
        %v2082 = vsel %vm1106, %v2012, %v2061
        %v2083 = vsel %vm1106, %v2013, %v2063
        %v2084 = vpack.c.bf16 %v2075, %v2074
        %v2085 = vpack.c.bf16 %v2025, %v2024
        %v2086 = vpack.c.bf16 %v2077, %v2076
        %v2087 = vpack.c.bf16 %v2027, %v2026
        %v2088 = vpack.c.bf16 %v2079, %v2078
        %v2089 = vpack.c.bf16 %v2029, %v2028
        %v2090 = vpack.c.bf16 %v2081, %v2080
        %v2091 = vpack.c.bf16 %v2031, %v2030
        %v2092 = vld [vmem:[%s11] sm:$0xf]
        %v2093 = vld [vmem:[%s11 + $0x4] sm:$0xf]
        %v2094 = vld [vmem:[%s11 + $0x8] sm:$0xf]
        %v2095 = vld [vmem:[%s11 + $0xc] sm:$0xf]
        %v2096 = vld [vmem:[%s11 + $0x10] sm:$0xf]
        %v2097 = vld [vmem:[%s11 + $0x14] sm:$0xf]
        %v2098 = vld [vmem:[%s11 + $0x18] sm:$0xf]
        %v2099 = vld [vmem:[%s11 + $0x1c] sm:$0xf]
        %v2100 = vld [vmem:[%s11 + $0x20] sm:$0xf]
        %v2101 = vld [vmem:[%s11 + $0x24] sm:$0xf]
        %v2102 = vld [vmem:[%s11 + $0x28] sm:$0xf]
        %v2103 = vld [vmem:[%s11 + $0x2c] sm:$0xf]
        %v2104 = vld [vmem:[%s11 + $0x30] sm:$0xf]
        %v2105 = vld [vmem:[%s11 + $0x34] sm:$0xf]
        %v2106 = vld [vmem:[%s11 + $0x38] sm:$0xf]
        %v2107 = vld [vmem:[%s11 + $0x3c] sm:$0xf]
        %v2108 = vld [vmem:[%s11 + $0x40] sm:$0xf]
        %v2109 = vld [vmem:[%s11 + $0x44] sm:$0xf]
        %v2110 = vld [vmem:[%s11 + $0x48] sm:$0xf]
        %v2111 = vld [vmem:[%s11 + $0x4c] sm:$0xf]
        %v2112 = vld [vmem:[%s11 + $0x50] sm:$0xf]
        %v2113 = vld [vmem:[%s11 + $0x54] sm:$0xf]
        %v2114 = vld [vmem:[%s11 + $0x58] sm:$0xf]
        %v2115 = vld [vmem:[%s11 + $0x5c] sm:$0xf]
        %v2116 = vpack.c.bf16 %v2076, %v2075
        %v2117 = vpack.c.bf16 %v2026, %v2025
        %v2118 = vpack.c.bf16 %v2078, %v2077
        %v2119 = vpack.c.bf16 %v2028, %v2027
        %v2120 = vpack.c.bf16 %v2080, %v2079
        %v2121 = vpack.c.bf16 %v2030, %v2029
        %v2122 = vpack.c.bf16 %v2082, %v2081
        %v2123 = vpack.c.bf16 %v2032, %v2031
        %s2124 = scalar_lea.vmem %s11, 96
        %v2125 = vld [vmem:[%s2124] sm:$0xf]
        %v2126 = vld [vmem:[%s2124 + $0x4] sm:$0xf]
        %v2127 = vld [vmem:[%s2124 + $0x8] sm:$0xf]
        %v2128 = vld [vmem:[%s2124 + $0xc] sm:$0xf]
        %v2129 = vld [vmem:[%s2124 + $0x10] sm:$0xf]
        %v2130 = vld [vmem:[%s2124 + $0x14] sm:$0xf]
        %v2131 = vld [vmem:[%s2124 + $0x18] sm:$0xf]
        %v2132 = vld [vmem:[%s2124 + $0x1c] sm:$0xf]
        %v2133 = vld [vmem:[%s2124 + $0x20] sm:$0xf]
        %v2134 = vld [vmem:[%s2124 + $0x24] sm:$0xf]
        %v2135 = vld [vmem:[%s2124 + $0x28] sm:$0xf]
        %v2136 = vld [vmem:[%s2124 + $0x2c] sm:$0xf]
        %v2137 = vld [vmem:[%s2124 + $0x30] sm:$0xf]
        %v2138 = vld [vmem:[%s2124 + $0x34] sm:$0xf]
        %v2139 = vld [vmem:[%s2124 + $0x38] sm:$0xf]
        %v2140 = vld [vmem:[%s2124 + $0x3c] sm:$0xf]
        %v2141 = vld [vmem:[%s2124 + $0x40] sm:$0xf]
        %v2142 = vld [vmem:[%s2124 + $0x44] sm:$0xf]
        %v2143 = vld [vmem:[%s2124 + $0x48] sm:$0xf]
        %v2144 = vld [vmem:[%s2124 + $0x4c] sm:$0xf]
        %v2145 = vld [vmem:[%s2124 + $0x50] sm:$0xf]
        %v2146 = vld [vmem:[%s2124 + $0x54] sm:$0xf]
        %v2147 = vld [vmem:[%s2124 + $0x58] sm:$0xf]
        %v2148 = vld [vmem:[%s2124 + $0x5c] sm:$0xf]
        %v2173 = vunpack.c.l.b16 %v2125
        %v2174 = vunpack.c.l.b16 %v2126
        %v2175 = vunpack.c.l.b16 %v2127
        %v2176 = vunpack.c.l.b16 %v2128
        %v2177 = vunpack.c.l.b16 %v2129
        %v2178 = vunpack.c.l.b16 %v2130
        %v2179 = vunpack.c.l.b16 %v2131
        %v2180 = vunpack.c.l.b16 %v2132
        %v2181 = vunpack.c.l.b16 %v2133
        %v2182 = vunpack.c.l.b16 %v2134
        %v2183 = vunpack.c.l.b16 %v2135
        %v2184 = vunpack.c.l.b16 %v2136
        %v2185 = vunpack.c.l.b16 %v2137
        %v2186 = vunpack.c.l.b16 %v2138
        %v2187 = vunpack.c.l.b16 %v2139
        %v2188 = vunpack.c.l.b16 %v2140
        %v2189 = vunpack.c.l.b16 %v2141
        %v2190 = vunpack.c.l.b16 %v2142
        %v2191 = vunpack.c.l.b16 %v2143
        %v2192 = vunpack.c.l.b16 %v2144
        %v2193 = vunpack.c.l.b16 %v2145
        %v2194 = vunpack.c.l.b16 %v2146
        %v2195 = vunpack.c.l.b16 %v2147
        %v2196 = vunpack.c.l.b16 %v2148
        %v2197 = vpack.c.b16 %v2174, %v2173
        %v2198 = vpack.c.b16 %v2176, %v2175
        %v2199 = vpack.c.b16 %v2178, %v2177
        %v2200 = vpack.c.b16 %v2180, %v2179
        %v2201 = vpack.c.b16 %v2182, %v2181
        %v2202 = vpack.c.b16 %v2184, %v2183
        %v2203 = vpack.c.b16 %v2186, %v2185
        %v2204 = vpack.c.b16 %v2188, %v2187
        %v2205 = vpack.c.b16 %v2190, %v2189
        %v2206 = vpack.c.b16 %v2192, %v2191
        %v2207 = vpack.c.b16 %v2194, %v2193
        %v2208 = vpack.c.b16 %v2196, %v2195
        %v2222 = vsel %vm1106, %v2117, 0
        %v2225 = vsel %vm1106, %v2119, 0
        %v2228 = vsel %vm1106, %v2121, 0
        %v2231 = vsel %vm1106, %v2123, 0
        %2233 = vmatprep.subr.bf16.mxu0 0
        %2234 = vmatpush1.bf16.msra.mxu0 %v2197
        %2235 = vmatprep.subr.bf16.mxu0 0
        %2236 = vmatpush1.bf16.msra.mxu0 %v2198
        %2237 = vmatprep.subr.bf16.mxu0 0
        %2238 = vmatpush1.bf16.msra.mxu0 %v2199
        %2239 = vmatprep.subr.bf16.mxu0 0
        %2240 = vmatpush1.bf16.msra.mxu0 %v2200
        %2241 = vmatprep.subr.bf16.mxu0 0
        %2242 = vmatpush1.bf16.msra.mxu0 %v2201
        %2243 = vmatprep.subr.bf16.mxu0 0
        %2244 = vmatpush1.bf16.msra.mxu0 %v2202
        %2245 = vmatprep.subr.bf16.mxu0 0
        %2246 = vmatpush1.bf16.msra.mxu0 %v2203
        %2247 = vmatprep.subr.bf16.mxu0 0
        %2248 = vmatpush1.bf16.msra.mxu0 %v2204
        %2249 = vmatprep.subr.bf16.mxu0 0
        %2250 = vmatpush1.bf16.msra.mxu0 %v2205
        %2251 = vmatprep.subr.bf16.mxu0 0
        %2252 = vmatpush1.bf16.msra.mxu0 %v2206
        %2253 = vmatprep.subr.bf16.mxu0 0
        %2254 = vmatpush1.bf16.msra.mxu0 %v2207
        %2255 = vmatprep.subr.bf16.mxu0 0
        %2256 = vmatpush1.bf16.msra.mxu0 %v2208
        %2257 = vmatprep.subr.bf16.mxu0 0
        %2258 = vmatpush1.bf16.msra.mxu0 0
        %2259 = vmatprep.subr.bf16.mxu0 0
        %2260 = vmatpush1.bf16.msra.mxu0 0
        %2261 = vmatprep.subr.bf16.mxu0 0
        %2262 = vmatpush1.bf16.msra.mxu0 0
        %2263 = vmatprep.subr.bf16.mxu0 0
        %2264 = vmatpush1.bf16.msra.mxu0 0
        %2265 = vmatprep.mubr.bf16.mxu0 %v2222
        %2266 = vmatmul.mubr.bf16.gmra.mrb[0].mxu0 %v2116
        %v2267 = vpop.f32.mrb[0].mxu0
        %v2268 = vadd.f32 0.0, %v2267
        %v2269 = vpop.f32.mrb[0].mxu0
        %v2270 = vpop.f32.mrb[0].mxu0
        %v2271 = vadd.f32 0.0, %v2270
        %v2272 = vpop.f32.mrb[0].mxu0
        %2273 = vmatprep.mubr.bf16.mxu0 %v2225
        %2274 = vmatmul.mubr.bf16.gmra.mrb[0].mxu0 %v2118
        %v2275 = vpop.f32.mrb[0].mxu0
        %v2276 = vadd.f32 0.0, %v2275
        %v2277 = vpop.f32.mrb[0].mxu0
        %v2278 = vpop.f32.mrb[0].mxu0
        %v2279 = vadd.f32 0.0, %v2278
        %v2280 = vpop.f32.mrb[0].mxu0
        %2281 = vmatprep.mubr.bf16.mxu0 %v2228
        %2282 = vmatmul.mubr.bf16.gmra.mrb[0].mxu0 %v2120
        %v2283 = vpop.f32.mrb[0].mxu0
        %v2284 = vadd.f32 0.0, %v2283
        %v2285 = vpop.f32.mrb[0].mxu0
        %v2286 = vpop.f32.mrb[0].mxu0
        %v2287 = vadd.f32 0.0, %v2286
        %v2288 = vpop.f32.mrb[0].mxu0
        %2289 = vmatprep.mubr.bf16.mxu0 %v2231
        %2290 = vmatmul.mubr.bf16.gmra.mrb[0].mxu0 %v2122
        %v2291 = vpop.f32.mrb[0].mxu0
        %v2292 = vadd.f32 0.0, %v2291
        %v2293 = vpop.f32.mrb[0].mxu0
        %v2294 = vpop.f32.mrb[0].mxu0
        %v2295 = vadd.f32 0.0, %v2294
        %v2296 = vpop.f32.mrb[0].mxu0
        %2297 = vdwg.mxu0
        %v2322 = vunpack.c.l.b16 %v2092
        %v2323 = vunpack.c.l.b16 %v2093
        %v2324 = vunpack.c.l.b16 %v2094
        %v2325 = vunpack.c.l.b16 %v2095
        %v2326 = vunpack.c.l.b16 %v2096
        %v2327 = vunpack.c.l.b16 %v2097
        %v2328 = vunpack.c.l.b16 %v2098
        %v2329 = vunpack.c.l.b16 %v2099
        %v2330 = vunpack.c.l.b16 %v2100
        %v2331 = vunpack.c.l.b16 %v2101
        %v2332 = vunpack.c.l.b16 %v2102
        %v2333 = vunpack.c.l.b16 %v2103
        %v2334 = vunpack.c.l.b16 %v2104
        %v2335 = vunpack.c.l.b16 %v2105
        %v2336 = vunpack.c.l.b16 %v2106
        %v2337 = vunpack.c.l.b16 %v2107
        %v2338 = vunpack.c.l.b16 %v2108
        %v2339 = vunpack.c.l.b16 %v2109
        %v2340 = vunpack.c.l.b16 %v2110
        %v2341 = vunpack.c.l.b16 %v2111
        %v2342 = vunpack.c.l.b16 %v2112
        %v2343 = vunpack.c.l.b16 %v2113
        %v2344 = vunpack.c.l.b16 %v2114
        %v2345 = vunpack.c.l.b16 %v2115
        %v2346 = vpack.c.b16 %v2323, %v2322
        %v2347 = vpack.c.b16 %v2325, %v2324
        %v2348 = vpack.c.b16 %v2327, %v2326
        %v2349 = vpack.c.b16 %v2329, %v2328
        %v2350 = vpack.c.b16 %v2331, %v2330
        %v2351 = vpack.c.b16 %v2333, %v2332
        %v2352 = vpack.c.b16 %v2335, %v2334
        %v2353 = vpack.c.b16 %v2337, %v2336
        %v2354 = vpack.c.b16 %v2339, %v2338
        %v2355 = vpack.c.b16 %v2341, %v2340
        %v2356 = vpack.c.b16 %v2343, %v2342
        %v2357 = vpack.c.b16 %v2345, %v2344
        %v2371 = vsel %vm1106, %v2085, 0
        %v2374 = vsel %vm1106, %v2087, 0
        %v2377 = vsel %vm1106, %v2089, 0
        %v2380 = vsel %vm1106, %v2091, 0
        %2382 = vmatprep.subr.bf16.mxu0 0
        %2383 = vmatpush1.bf16.msra.mxu0 %v2346
        %2384 = vmatprep.subr.bf16.mxu0 0
        %2385 = vmatpush1.bf16.msra.mxu0 %v2347
        %2386 = vmatprep.subr.bf16.mxu0 0
        %2387 = vmatpush1.bf16.msra.mxu0 %v2348
        %2388 = vmatprep.subr.bf16.mxu0 0
        %2389 = vmatpush1.bf16.msra.mxu0 %v2349
        %2390 = vmatprep.subr.bf16.mxu0 0
        %2391 = vmatpush1.bf16.msra.mxu0 %v2350
        %2392 = vmatprep.subr.bf16.mxu0 0
        %2393 = vmatpush1.bf16.msra.mxu0 %v2351
        %2394 = vmatprep.subr.bf16.mxu0 0
        %2395 = vmatpush1.bf16.msra.mxu0 %v2352
        %2396 = vmatprep.subr.bf16.mxu0 0
        %2397 = vmatpush1.bf16.msra.mxu0 %v2353
        %2398 = vmatprep.subr.bf16.mxu0 0
        %2399 = vmatpush1.bf16.msra.mxu0 %v2354
        %2400 = vmatprep.subr.bf16.mxu0 0
        %2401 = vmatpush1.bf16.msra.mxu0 %v2355
        %2402 = vmatprep.subr.bf16.mxu0 0
        %2403 = vmatpush1.bf16.msra.mxu0 %v2356
        %2404 = vmatprep.subr.bf16.mxu0 0
        %2405 = vmatpush1.bf16.msra.mxu0 %v2357
        %2406 = vmatprep.subr.bf16.mxu0 0
        %2407 = vmatpush1.bf16.msra.mxu0 0
        %2408 = vmatprep.subr.bf16.mxu0 0
        %2409 = vmatpush1.bf16.msra.mxu0 0
        %2410 = vmatprep.subr.bf16.mxu0 0
        %2411 = vmatpush1.bf16.msra.mxu0 0
        %2412 = vmatprep.subr.bf16.mxu0 0
        %2413 = vmatpush1.bf16.msra.mxu0 0
        %2414 = vmatprep.mubr.bf16.mxu0 %v2371
        %2415 = vmatmul.mubr.bf16.gmra.mrb[0].mxu0 %v2084
        %v2416 = vpop.f32.mrb[0].mxu0
        %v2417 = vadd.f32 %v2268, %v2416
        %v2418 = vpop.f32.mrb[0].mxu0
        %v2419 = vpop.f32.mrb[0].mxu0
        %v2420 = vadd.f32 %v2271, %v2419
        %v2421 = vpop.f32.mrb[0].mxu0
        %2422 = vmatprep.mubr.bf16.mxu0 %v2374
        %2423 = vmatmul.mubr.bf16.gmra.mrb[0].mxu0 %v2086
        %v2424 = vpop.f32.mrb[0].mxu0
        %v2425 = vadd.f32 %v2276, %v2424
        %v2426 = vpop.f32.mrb[0].mxu0
        %v2427 = vpop.f32.mrb[0].mxu0
        %v2428 = vadd.f32 %v2279, %v2427
        %v2429 = vpop.f32.mrb[0].mxu0
        %2430 = vmatprep.mubr.bf16.mxu0 %v2377
        %2431 = vmatmul.mubr.bf16.gmra.mrb[0].mxu0 %v2088
        %v2432 = vpop.f32.mrb[0].mxu0
        %v2433 = vadd.f32 %v2284, %v2432
        %v2434 = vpop.f32.mrb[0].mxu0
        %v2435 = vpop.f32.mrb[0].mxu0
        %v2436 = vadd.f32 %v2287, %v2435
        %v2437 = vpop.f32.mrb[0].mxu0
        %2438 = vmatprep.mubr.bf16.mxu0 %v2380
        %2439 = vmatmul.mubr.bf16.gmra.mrb[0].mxu0 %v2090
        %v2440 = vpop.f32.mrb[0].mxu0
        %v2441 = vadd.f32 %v2292, %v2440
        %v2442 = vpop.f32.mrb[0].mxu0
        %v2443 = vpop.f32.mrb[0].mxu0
        %v2444 = vadd.f32 %v2295, %v2443
        %v2445 = vpop.f32.mrb[0].mxu0
        %2446 = vdwg.mxu0
        %v2447 = vpack.c.bf16 %v2083, %v2082
        %v2448 = vpack.c.bf16 %v2033, %v2032
        %s2449 = scalar_lea.vmem %s11, 192
        %v2450 = vld [vmem:[%s2449] sm:$0xf]
        %v2451 = vld [vmem:[%s2449 + $0x4] sm:$0xf]
        %v2452 = vld [vmem:[%s2449 + $0x8] sm:$0xf]
        %v2453 = vld [vmem:[%s2449 + $0xc] sm:$0xf]
        %v2454 = vld [vmem:[%s2449 + $0x10] sm:$0xf]
        %v2455 = vld [vmem:[%s2449 + $0x14] sm:$0xf]
        %v2456 = vld [vmem:[%s2449 + $0x18] sm:$0xf]
        %v2457 = vld [vmem:[%s2449 + $0x1c] sm:$0xf]
        %v2458 = vld [vmem:[%s2449 + $0x20] sm:$0xf]
        %v2459 = vld [vmem:[%s2449 + $0x24] sm:$0xf]
        %v2460 = vld [vmem:[%s2449 + $0x28] sm:$0xf]
        %v2461 = vld [vmem:[%s2449 + $0x2c] sm:$0xf]
        %v2462 = vld [vmem:[%s2449 + $0x30] sm:$0xf]
        %v2463 = vld [vmem:[%s2449 + $0x34] sm:$0xf]
        %v2464 = vld [vmem:[%s2449 + $0x38] sm:$0xf]
        %v2465 = vld [vmem:[%s2449 + $0x3c] sm:$0xf]
        %v2466 = vld [vmem:[%s2449 + $0x40] sm:$0xf]
        %v2467 = vld [vmem:[%s2449 + $0x44] sm:$0xf]
        %v2468 = vld [vmem:[%s2449 + $0x48] sm:$0xf]
        %v2469 = vld [vmem:[%s2449 + $0x4c] sm:$0xf]
        %v2470 = vld [vmem:[%s2449 + $0x50] sm:$0xf]
        %v2471 = vld [vmem:[%s2449 + $0x54] sm:$0xf]
        %v2472 = vld [vmem:[%s2449 + $0x58] sm:$0xf]
        %v2473 = vld [vmem:[%s2449 + $0x5c] sm:$0xf]
        %v2498 = vunpack.c.l.b16 %v2450
        %v2499 = vunpack.c.l.b16 %v2451
        %v2500 = vunpack.c.l.b16 %v2452
        %v2501 = vunpack.c.l.b16 %v2453
        %v2502 = vunpack.c.l.b16 %v2454
        %v2503 = vunpack.c.l.b16 %v2455
        %v2504 = vunpack.c.l.b16 %v2456
        %v2505 = vunpack.c.l.b16 %v2457
        %v2506 = vunpack.c.l.b16 %v2458
        %v2507 = vunpack.c.l.b16 %v2459
        %v2508 = vunpack.c.l.b16 %v2460
        %v2509 = vunpack.c.l.b16 %v2461
        %v2510 = vunpack.c.l.b16 %v2462
        %v2511 = vunpack.c.l.b16 %v2463
        %v2512 = vunpack.c.l.b16 %v2464
        %v2513 = vunpack.c.l.b16 %v2465
        %v2514 = vunpack.c.l.b16 %v2466
        %v2515 = vunpack.c.l.b16 %v2467
        %v2516 = vunpack.c.l.b16 %v2468
        %v2517 = vunpack.c.l.b16 %v2469
        %v2518 = vunpack.c.l.b16 %v2470
        %v2519 = vunpack.c.l.b16 %v2471
        %v2520 = vunpack.c.l.b16 %v2472
        %v2521 = vunpack.c.l.b16 %v2473
        %v2522 = vpack.c.b16 %v2499, %v2498
        %v2523 = vpack.c.b16 %v2501, %v2500
        %v2524 = vpack.c.b16 %v2503, %v2502
        %v2525 = vpack.c.b16 %v2505, %v2504
        %v2526 = vpack.c.b16 %v2507, %v2506
        %v2527 = vpack.c.b16 %v2509, %v2508
        %v2528 = vpack.c.b16 %v2511, %v2510
        %v2529 = vpack.c.b16 %v2513, %v2512
        %v2530 = vpack.c.b16 %v2515, %v2514
        %v2531 = vpack.c.b16 %v2517, %v2516
        %v2532 = vpack.c.b16 %v2519, %v2518
        %v2533 = vpack.c.b16 %v2521, %v2520
        %v2547 = vsel %vm1106, %v2448, 0
        %2549 = vmatprep.subr.bf16.mxu0 0
        %2550 = vmatpush1.bf16.msra.mxu0 %v2522
        %2551 = vmatprep.subr.bf16.mxu0 0
        %2552 = vmatpush1.bf16.msra.mxu0 %v2523
        %2553 = vmatprep.subr.bf16.mxu0 0
        %2554 = vmatpush1.bf16.msra.mxu0 %v2524
        %2555 = vmatprep.subr.bf16.mxu0 0
        %2556 = vmatpush1.bf16.msra.mxu0 %v2525
        %2557 = vmatprep.subr.bf16.mxu0 0
        %2558 = vmatpush1.bf16.msra.mxu0 %v2526
        %2559 = vmatprep.subr.bf16.mxu0 0
        %2560 = vmatpush1.bf16.msra.mxu0 %v2527
        %2561 = vmatprep.subr.bf16.mxu0 0
        %2562 = vmatpush1.bf16.msra.mxu0 %v2528
        %2563 = vmatprep.subr.bf16.mxu0 0
        %2564 = vmatpush1.bf16.msra.mxu0 %v2529
        %2565 = vmatprep.subr.bf16.mxu0 0
        %2566 = vmatpush1.bf16.msra.mxu0 %v2530
        %2567 = vmatprep.subr.bf16.mxu0 0
        %2568 = vmatpush1.bf16.msra.mxu0 %v2531
        %2569 = vmatprep.subr.bf16.mxu0 0
        %2570 = vmatpush1.bf16.msra.mxu0 %v2532
        %2571 = vmatprep.subr.bf16.mxu0 0
        %2572 = vmatpush1.bf16.msra.mxu0 %v2533
        %2573 = vmatprep.subr.bf16.mxu0 0
        %2574 = vmatpush1.bf16.msra.mxu0 0
        %2575 = vmatprep.subr.bf16.mxu0 0
        %2576 = vmatpush1.bf16.msra.mxu0 0
        %2577 = vmatprep.subr.bf16.mxu0 0
        %2578 = vmatpush1.bf16.msra.mxu0 0
        %2579 = vmatprep.subr.bf16.mxu0 0
        %2580 = vmatpush1.bf16.msra.mxu0 0
        %2581 = vmatprep.mubr.bf16.mxu0 %v2374
        %2582 = vmatmul.mubr.bf16.gmra.mrb[0].mxu0 %v2086
        %v2583 = vpop.f32.mrb[0].mxu0
        %v2584 = vadd.f32 0.0, %v2583
        %v2585 = vpop.f32.mrb[0].mxu0
        %v2586 = vpop.f32.mrb[0].mxu0
        %v2587 = vadd.f32 0.0, %v2586
        %v2588 = vpop.f32.mrb[0].mxu0
        %2589 = vmatprep.mubr.bf16.mxu0 %v2377
        %2590 = vmatmul.mubr.bf16.gmra.mrb[0].mxu0 %v2088
        %v2591 = vpop.f32.mrb[0].mxu0
        %v2592 = vadd.f32 0.0, %v2591
        %v2593 = vpop.f32.mrb[0].mxu0
        %v2594 = vpop.f32.mrb[0].mxu0
        %v2595 = vadd.f32 0.0, %v2594
        %v2596 = vpop.f32.mrb[0].mxu0
        %2597 = vmatprep.mubr.bf16.mxu0 %v2380
        %2598 = vmatmul.mubr.bf16.gmra.mrb[0].mxu0 %v2090
        %v2599 = vpop.f32.mrb[0].mxu0
        %v2600 = vadd.f32 0.0, %v2599
        %v2601 = vpop.f32.mrb[0].mxu0
        %v2602 = vpop.f32.mrb[0].mxu0
        %v2603 = vadd.f32 0.0, %v2602
        %v2604 = vpop.f32.mrb[0].mxu0
        %2605 = vmatprep.mubr.bf16.mxu0 %v2547
        %2606 = vmatmul.mubr.bf16.gmra.mrb[0].mxu0 %v2447
        %v2607 = vpop.f32.mrb[0].mxu0
        %v2608 = vadd.f32 0.0, %v2607
        %v2609 = vpop.f32.mrb[0].mxu0
        %v2610 = vpop.f32.mrb[0].mxu0
        %v2611 = vadd.f32 0.0, %v2610
        %v2612 = vpop.f32.mrb[0].mxu0
        %2613 = vdwg.mxu0
        %v2614 = vadd.f32 %v2417, %v2584
        %v2615 = vadd.f32 %v2420, %v2587
        %v2616 = vadd.f32 %v2425, %v2592
        %v2617 = vadd.f32 %v2428, %v2595
        %v2618 = vadd.f32 %v2433, %v2600
        %v2619 = vadd.f32 %v2436, %v2603
        %v2620 = vadd.f32 %v2441, %v2608
        %v2621 = vadd.f32 %v2444, %v2611
        %v2623 = vlaneseq
        %v2624 = vshrl.u32 %v2623, 7
        %v2625 = vsub.s32 0, %v2624
        %v2626 = vrot.slane %v1967, %v2625
        %v2628 = vadd.f32 %v2614, %v2626
        %v2629 = vadd.f32 %v2615, %v2626
        %v2630 = vadd.f32 %v2616, %v2626
        %v2631 = vadd.f32 %v2617, %v2626
        %v2632 = vadd.f32 %v2618, %v2626
        %v2633 = vadd.f32 %v2619, %v2626
        %v2634 = vadd.f32 %v2620, %v2626
        %v2635 = vadd.f32 %v2621, %v2626
        %v2636 = vpack.c.bf16 %v495, %v494
        %v2637 = vpack.c.bf16 %v497, %v496
        %v2638 = vpack.c.bf16 %v499, %v498
        %v2639 = vpack.c.bf16 %v501, %v500
        %v2640 = vld [vmem:[%s13] sm:$0xf]
        %v2641 = vld [vmem:[%s13 + $0x4] sm:$0xf]
        %v2642 = vld [vmem:[%s13 + $0x8] sm:$0xf]
        %v2643 = vld [vmem:[%s13 + $0xc] sm:$0xf]
        %v2644 = vld [vmem:[%s14] sm:$0x1]
        %v2646 = vlaneseq
        %v2647 = vshrl.u32 %v2646, 7
        %v2648 = vsub.s32 0, %v2647
        %v2649 = vrot.slane %v2644, %v2648
        %v2655 = vunpack.c.l.b16 %v2640
        %v2656 = vunpack.c.l.b16 %v2641
        %v2657 = vunpack.c.l.b16 %v2642
        %v2658 = vunpack.c.l.b16 %v2643
        %v2659 = vpack.c.b16 %v2656, %v2655
        %v2660 = vpack.c.b16 %v2658, %v2657
        %v2664 = vsel %vm512, %v2636, 0
        %v2667 = vsel %vm512, %v2637, 0
        %v2670 = vsel %vm512, %v2638, 0
        %v2673 = vsel %vm512, %v2639, 0
        %2675 = vmatprep.subr.bf16.mxu0 0
        %2676 = vmatpush1.bf16.msra.mxu0 %v2659
        %2677 = vmatprep.subr.bf16.mxu0 0
        %2678 = vmatpush1.bf16.msra.mxu0 %v2660
        %2679 = vmatprep.subr.bf16.mxu0 0
        %2680 = vmatpush1.bf16.msra.mxu0 0
        %2681 = vmatprep.subr.bf16.mxu0 0
        %2682 = vmatpush1.bf16.msra.mxu0 0
        %2683 = vmatprep.subr.bf16.mxu0 0
        %2684 = vmatpush1.bf16.msra.mxu0 0
        %2685 = vmatprep.subr.bf16.mxu0 0
        %2686 = vmatpush1.bf16.msra.mxu0 0
        %2687 = vmatprep.subr.bf16.mxu0 0
        %2688 = vmatpush1.bf16.msra.mxu0 0
        %2689 = vmatprep.subr.bf16.mxu0 0
        %2690 = vmatpush1.bf16.msra.mxu0 0
        %2691 = vmatprep.subr.bf16.mxu0 0
        %2692 = vmatpush1.bf16.msra.mxu0 0
        %2693 = vmatprep.subr.bf16.mxu0 0
        %2694 = vmatpush1.bf16.msra.mxu0 0
        %2695 = vmatprep.subr.bf16.mxu0 0
        %2696 = vmatpush1.bf16.msra.mxu0 0
        %2697 = vmatprep.subr.bf16.mxu0 0
        %2698 = vmatpush1.bf16.msra.mxu0 0
        %2699 = vmatprep.subr.bf16.mxu0 0
        %2700 = vmatpush1.bf16.msra.mxu0 0
        %2701 = vmatprep.subr.bf16.mxu0 0
        %2702 = vmatpush1.bf16.msra.mxu0 0
        %2703 = vmatprep.subr.bf16.mxu0 0
        %2704 = vmatpush1.bf16.msra.mxu0 0
        %2705 = vmatprep.subr.bf16.mxu0 0
        %2706 = vmatpush1.bf16.msra.mxu0 0
        %2707 = vmatprep.mubr.bf16.mxu0 0
        %2708 = vmatmul.mubr.bf16.gmra.mrb[0].mxu0 %v2664
        %v2709 = vpop.f32.mrb[0].mxu0
        %v2710 = vadd.f32 %v2649, %v2709
        %v2711 = vpop.f32.mrb[0].mxu0
        %v2712 = vpop.f32.mrb[0].mxu0
        %v2713 = vadd.f32 %v2649, %v2712
        %v2714 = vpop.f32.mrb[0].mxu0
        %2715 = vmatprep.mubr.bf16.mxu0 0
        %2716 = vmatmul.mubr.bf16.gmra.mrb[0].mxu0 %v2667
        %v2717 = vpop.f32.mrb[0].mxu0
        %v2718 = vadd.f32 %v2649, %v2717
        %v2719 = vpop.f32.mrb[0].mxu0
        %v2720 = vpop.f32.mrb[0].mxu0
        %v2721 = vadd.f32 %v2649, %v2720
        %v2722 = vpop.f32.mrb[0].mxu0
        %2723 = vmatprep.mubr.bf16.mxu0 0
        %2724 = vmatmul.mubr.bf16.gmra.mrb[0].mxu0 %v2670
        %v2725 = vpop.f32.mrb[0].mxu0
        %v2726 = vadd.f32 %v2649, %v2725
        %v2727 = vpop.f32.mrb[0].mxu0
        %v2728 = vpop.f32.mrb[0].mxu0
        %v2729 = vadd.f32 %v2649, %v2728
        %v2730 = vpop.f32.mrb[0].mxu0
        %2731 = vmatprep.mubr.bf16.mxu0 0
        %2732 = vmatmul.mubr.bf16.gmra.mrb[0].mxu0 %v2673
        %v2733 = vpop.f32.mrb[0].mxu0
        %v2734 = vadd.f32 %v2649, %v2733
        %v2735 = vpop.f32.mrb[0].mxu0
        %v2736 = vpop.f32.mrb[0].mxu0
        %v2737 = vadd.f32 %v2649, %v2736
        %v2738 = vpop.f32.mrb[0].mxu0
        %2739 = vdwg.mxu0
        %v2740 = vadd.f32 %v2628, %v2710
        %v2741 = vadd.f32 %v2629, %v2713
        %v2742 = vadd.f32 %v2630, %v2718
        %v2743 = vadd.f32 %v2631, %v2721
        %v2744 = vadd.f32 %v2632, %v2726
        %v2745 = vadd.f32 %v2633, %v2729
        %v2746 = vadd.f32 %v2634, %v2734
        %v2747 = vadd.f32 %v2635, %v2737
        %2748 = vst.msk [vmem:[%s487] sm:$0xff] %vm1106, %v2740
        %2749 = vst.msk [vmem:[%s487 + $0x8] sm:$0xff] %vm1106, %v2741
        %2750 = vst.msk [vmem:[%s487 + $0x10] sm:$0xff] %vm1106, %v2742
        %2751 = vst.msk [vmem:[%s487 + $0x18] sm:$0xff] %vm1106, %v2743
        %2752 = vst.msk [vmem:[%s487 + $0x20] sm:$0xff] %vm1106, %v2744
        %2753 = vst.msk [vmem:[%s487 + $0x28] sm:$0xff] %vm1106, %v2745
        %2754 = vst.msk [vmem:[%s487 + $0x30] sm:$0xff] %vm1106, %v2746
        %2755 = vst.msk [vmem:[%s487 + $0x38] sm:$0xff] %vm1106, %v2747
        %s2756 = sand.u32 %s357, 1
        %s2757 = scalar_lea.sflag [#allocation5], %s2756
        %s2758 = sand.u32 %s357, 1
        %s2759 = smul.addr %s2758, 64
        %s2760 = scalar_lea.vmem [#allocation4], %s2759
        // Predicated region
        $region81: #{tpu_custom_call.1} parent=79 // pred_check
          %p2761 = pneg %p367
        $region82: #{tpu_custom_call.1} parent=79 // pred_check_branch
          %2763 = sbr.rel (%p2761) target = $region84
        $region83: #{tpu_custom_call.1} parent=79 // pred_region
          %s2765 = ssub.s32 1024, 1024
          %2766 = vsyncadd %s2757, %s2765
          %s2767 = smul.addr %s29, 8
          %s2768 = smul.addr %s2767, 128
          %s2769 = scalar_lea.hbm %s15, %s2768
          %s2770 = sshll.u32 %s2760, 4
          %s2771 = int_to_ptr.vmem [resolvable:$true] %s2770
          %2776 = dma.vmem_to_hbm [thread:$0]  %s2771, 1024, %s2769, %s2757, 128, 128, 8
        $region84: #{tpu_custom_call.1} parent=79 // pred_fallthru
          _
      $region80: #{tpu_custom_call.1} parent=5 // pred_fallthru
        _
      %p2777 = scmp.le.s32.totalorder 2, %s24
      // Predicated region
      $region85: #{tpu_custom_call.1} parent=5 // pred_check
        %p2778 = pneg %p2777
      $region86: #{tpu_custom_call.1} parent=5 // pred_check_branch
        %2780 = sbr.rel (%p2778) target = $region88
      $region87: #{tpu_custom_call.1} parent=5 // pred_region
        %s2781 = ssub.s32 %s24, 2
        // Predicated region
        $region89: #{tpu_custom_call.1} parent=87 // pred_check
          %p2782 = pneg %p373
        $region90: #{tpu_custom_call.1} parent=87 // pred_check_branch
          %2784 = sbr.rel (%p2782) target = $region92
        $region91: #{tpu_custom_call.1} parent=87 // pred_region
          %s2785 = sand.u32 %s358, 1
          %s2786 = scalar_lea.sflag [#allocation5], %s2785
          %s2787 = sand.u32 %s358, 1
          %s2788 = smul.addr %s2787, 64
          %s2789 = scalar_lea.vmem [#allocation4], %s2788
          %2790 = dma.done %s2786, 1024
        $region92: #{tpu_custom_call.1} parent=87 // pred_fallthru
          _
      $region88: #{tpu_custom_call.1} parent=5 // pred_fallthru
        _
    $region6: #{tpu_custom_call.1} parent=1 // loop_footer
      %s28 = sadd.s32 1, %s24
    $region7: #{tpu_custom_call.1} parent=1 // loop_footer_branch
      %23 = sbr.rel target = $region3
    $region8: #{tpu_custom_call.1} parent=1 // loop_exit
      _
    %2791 = vsyncpa [#allocation5], 1
    %s2792 = scalar_lea.sflag [#allocation5], 1
    %2793 = vsyncpa %s2792, 1

</llo_original>
